<compile_context>
chip_gen: v5e
topology: v5e:2x2
jax: 0.10.0
libtpu: 0.0.40
codegen_flags: <defaults>
</compile_context>

<pallas_src>
import functools

import jax
import jax.numpy as jnp
from jax.experimental import pallas as pl
from jax.experimental.pallas import tpu as pltpu
import numpy as np


# ----------------------------- configuration -----------------------------
BATCH = 512            # demo batch; single grid step (tile_b = batch)
IN_DIM = 4
OUT_DIM = 6
GRID_SIZE = 5
SPLINE_ORDER = 3
RESIDUAL_STD = 0.1
GRID_RANGE = (-1.0, 1.0)

N_BASIS = GRID_SIZE + SPLINE_ORDER                 # 8 final bases per input dim
N_KNOTS = GRID_SIZE + 2 * SPLINE_ORDER + 1         # 12 extended knots per dim
W0 = N_KNOTS - 1                                   # 11 order-0 bases per dim

# fused activation-matrix column layout:
#   cols [0, IN_DIM)               -> silu(x_i)
#   cols IN_DIM + i*W0 + k (k<W0)  -> B-spline basis k of x_i (k < N_BASIS valid)
KW = IN_DIM * (1 + W0)                             # 48 "real" columns
KW_PAD = max(128, ((KW + 127) // 128) * 128)       # lane-dense contraction width
OUT_PAD = max(128, ((OUT_DIM + 127) // 128) * 128) # lane-dense output width

# roll-wraparound safety: the lane rotate in the Cox-de Boor recursion wraps
# column KW_PAD-1 onto column 0.  This is safe because (a) there is at least
# one zero-coefficient padding column (KW < KW_PAD) and (b) the silu columns
# [0, IN_DIM) have BIG/-BIG order-0 knots and zero level coefficients, so no
# basis value can leak across column blocks.  Keep these invariants if the
# column layout is ever changed.
assert KW < KW_PAD

# constant-table row layout (built host-side; no divides / knot slicing in kernel)
ROW_TLO = 0                                        # order-0 lower knot per column
ROW_THI = 1                                        # order-0 upper knot per column
ROW_LVL = 2                                        # 4 rows per level: CL1, CL0, CR1, CR0
ROW_SMASK = ROW_LVL + 4 * SPLINE_ORDER             # silu-column mask
CT_ROWS = ((ROW_SMASK + 1 + 7) // 8) * 8
BIG = 1e30


# ------------------------------- kernel ----------------------------------
def kan_kernel(x_ref, rep_ref, ctab_ref, w_ref, out_ref):
    """One batch tile of the fused KAN layer.

    x_ref    : (TB, IN_DIM)        inputs (f32)
    rep_ref  : (IN_DIM, KW_PAD)    0/1 matrix replicating x_i into its column block
    ctab_ref : (CT_ROWS, KW_PAD)   per-column constants (knot tests, reciprocal
                                   Cox-de Boor coefficients, silu-column mask)
    w_ref    : (KW_PAD, OUT_PAD)   fused [residual | univariate*coef] weights (bf16)
    out_ref  : (TB, OUT_PAD)       lane-dense padded output (f32)
    """
    x = x_ref[...].astype(jnp.float32)                                   # (TB, IN_DIM)

    # Replicate each x_i across its basis block (and its own silu column).
    # Kept in f32: K=4 so MXU cost is trivial and spline accuracy is preserved.
    xr = jnp.dot(x, rep_ref[...], preferred_element_type=jnp.float32)   # (TB, KW_PAD)

    # Hoist the whole constant table into registers once (2 vregs), then slice
    # the in-register value -- avoids 15 separate sub-(8,128) masked vlds.
    ct = ctab_ref[...]                                                    # (CT_ROWS, KW_PAD)

    # Order-0 bases: half-open interval test (x >= t_k & x < t_{k+1}); matches
    # the reference.  Disabled columns use +/-BIG knots so the test fails.
    tlo = ct[ROW_TLO:ROW_TLO + 1, :]
    thi = ct[ROW_THI:ROW_THI + 1, :]
    b = jnp.logical_and(xr >= tlo, xr < thi).astype(jnp.float32)

    # Cox-de Boor recursion, vectorized over all input dims at once.
    # left/right are affine in x with precomputed reciprocal coefficients;
    # invalid / padding / silu columns have zero coefficients so nothing leaks
    # across blocks through the lane rotate.
    for p in range(SPLINE_ORDER):
        r = ROW_LVL + 4 * p
        cl1 = ct[r + 0:r + 1, :]
        cl0 = ct[r + 1:r + 2, :]
        cr1 = ct[r + 2:r + 3, :]
        cr0 = ct[r + 3:r + 4, :]
        b_up = pltpu.roll(b, shift=KW_PAD - 1, axis=1)                   # b[k+1] at col k
        b = (xr * cl1 + cl0) * b + (xr * cr1 + cr0) * b_up

    # Residual branch: silu(x_i) lives in the first IN_DIM columns only.
    smask = ct[ROW_SMASK:ROW_SMASK + 1, :]
    act = b + (xr * jax.nn.sigmoid(xr)) * smask                          # (TB, KW_PAD) f32

    # Single fused MXU contraction: bf16 operands, f32 accumulation.
    out_ref[...] = jnp.dot(act.astype(jnp.bfloat16), w_ref[...],
                           preferred_element_type=jnp.float32).astype(out_ref.dtype)


# ------------------------------ wrapper -----------------------------------
@functools.partial(jax.jit, static_argnames=("tile_b", "core_parallel"))
def kan_layer_pallas(x, rep_mat, ctab, w_fused, *, tile_b=None, core_parallel=False):
    """Returns the padded (batch, OUT_PAD) output; columns [:OUT_DIM] are valid.

    The pad columns are exactly zero (zero weight columns), so downstream ops
    can ignore or fuse over them without a separate slice/copy.
    """
    b = x.shape[0]
    if tile_b is None:
        tile_b = b                       # fewest grid steps: 1 for the demo
    assert b % tile_b == 0
    n_steps = b // tile_b

    if core_parallel and n_steps >= 2:
        # v7x: shard the batch axis across the two TensorCores.
        dims = (pltpu.CORE_PARALLEL,)
    else:
        dims = (pltpu.ARBITRARY,)

    return pl.pallas_call(
        kan_kernel,
        out_shape=jax.ShapeDtypeStruct((b, OUT_PAD), jnp.float32),
        grid_spec=pltpu.PrefetchScalarGridSpec(
            num_scalar_prefetch=0,
            grid=(n_steps,),
            in_specs=[
                pl.BlockSpec((tile_b, IN_DIM), lambda i: (i, 0)),
                pl.BlockSpec((IN_DIM, KW_PAD), lambda i: (0, 0)),
                pl.BlockSpec((CT_ROWS, KW_PAD), lambda i: (0, 0)),
                pl.BlockSpec((KW_PAD, OUT_PAD), lambda i: (0, 0)),
            ],
            out_specs=pl.BlockSpec((tile_b, OUT_PAD), lambda i: (i, 0)),
        ),
        compiler_params=pltpu.CompilerParams(
            dimension_semantics=dims,
            # Explicit scoped-VMEM limit (v5e defaults to 16 MiB); harmless on
            # v6e/v7x and avoids an artificial tile-size cap at large tile_b.
            vmem_limit_bytes=32 * 1024 * 1024),
    )(x, rep_mat, ctab, w_fused)


# ------------------- host-side constant / weight folding -------------------
def build_tables(knots_np, coef_np, univ_np, res_np, act_mask_np, sym_mask_np):
    """Fold constant masks, knots and reciprocals into dense kernel tables."""
    keep = (sym_mask_np == 0).astype(np.float32) * act_mask_np
    eff_res = res_np * keep                                     # (out, in)
    eff_spl = (univ_np * keep)[:, :, None] * coef_np            # (out, in, N_BASIS)

    def col(i, k):
        return IN_DIM + i * W0 + k

    rep = np.zeros((IN_DIM, KW_PAD), np.float32)
    ctab = np.zeros((CT_ROWS, KW_PAD), np.float32)
    wf = np.zeros((KW_PAD, OUT_PAD), np.float32)

    ctab[ROW_TLO, :] = BIG          # default: order-0 test fails -> basis stays 0
    ctab[ROW_THI, :] = -BIG

    for i in range(IN_DIM):
        rep[i, i] = 1.0
        rep[i, col(i, 0):col(i, 0) + W0] = 1.0
        ctab[ROW_SMASK, i] = 1.0
        wf[i, :OUT_DIM] = eff_res[:, i]
        wf[col(i, 0):col(i, 0) + N_BASIS, :OUT_DIM] = eff_spl[:, i, :].T
        for k in range(W0):
            ctab[ROW_TLO, col(i, k)] = knots_np[i, k]
            ctab[ROW_THI, col(i, k)] = knots_np[i, k + 1]
        for p in range(1, SPLINE_ORDER + 1):
            r = ROW_LVL + 4 * (p - 1)
            for k in range(W0 - p):                     # only valid bases at level p
                dl = knots_np[i, k + p] - knots_np[i, k]
                dr = knots_np[i, k + p + 1] - knots_np[i, k + 1]
                il = 0.0 if dl == 0 else 1.0 / dl       # 0-denominator -> 0 convention
                ir = 0.0 if dr == 0 else 1.0 / dr
                ctab[r + 0, col(i, k)] = il
                ctab[r + 1, col(i, k)] = -knots_np[i, k] * il
                ctab[r + 2, col(i, k)] = -ir
                ctab[r + 3, col(i, k)] = knots_np[i, k + p + 1] * ir
    # Fused weights stored in bf16 for the MXU (halves HBM/VMEM for the tile);
    # accumulation in the kernel is f32.
    return (jnp.asarray(rep), jnp.asarray(ctab),
            jnp.asarray(wf).astype(jnp.bfloat16))


# ------------------------- pure-JAX reference ------------------------------
def _bspline_bases_ref(x, knots, k):
    xe = x[:, :, None]                              # (B, in, 1)
    g = knots[None, :, :]                           # (1, in, n_knots)
    b = jnp.logical_and(xe >= g[..., :-1], xe < g[..., 1:]).astype(jnp.float32)
    for p in range(1, k + 1):
        b = ((xe - g[..., : -(p + 1)]) / (g[..., p:-1] - g[..., : -(p + 1)]) * b[..., :-1]
             + (g[..., p + 1:] - xe) / (g[..., p + 1:] - g[..., 1:-p]) * b[..., 1:])
    return b                                        # (B, in, N_BASIS)


def kan_layer_ref(x, knots, coef, univ_w, res_w, act_mask, sym_mask):
    silu = x * jax.nn.sigmoid(x)
    bases = _bspline_bases_ref(x, knots, SPLINE_ORDER)
    spline = jnp.einsum('jik,bik->bji', coef, bases)          # (B, out, in)
    phi = res_w[None] * silu[:, None, :] + univ_w[None] * spline
    sym_phi = jnp.zeros_like(phi)  # TODO(synk): KANSymbolic fns not modeled; symbolic_mask is 0 by default
    phi = phi * (sym_mask == 0) + sym_phi * sym_mask
    phi = phi * act_mask[None]
    # TODO(synk): self.cache(x, phi) side-effect (activation caching) not reproduced
    return jnp.sum(phi, axis=-1)


# --------------------------------- main ------------------------------------
if __name__ == "__main__":
    key = jax.random.PRNGKey(0)
    k_x, k_coef, k_res = jax.random.split(key, 3)

    # deterministic parameter init (mirrors module __init__ shapes)
    h = (GRID_RANGE[1] - GRID_RANGE[0]) / GRID_SIZE
    base_knots = (np.arange(-SPLINE_ORDER, GRID_SIZE + SPLINE_ORDER + 1,
                            dtype=np.float32) * h + GRID_RANGE[0])
    knots_np = np.tile(base_knots[None, :], (IN_DIM, 1))            # (in, N_KNOTS)

    coef = 0.1 * jax.random.normal(k_coef, (OUT_DIM, IN_DIM, N_BASIS), jnp.float32)
    univariate_w = jnp.ones((OUT_DIM, IN_DIM), jnp.float32)
    residual_w = RESIDUAL_STD * jax.random.normal(k_res, (OUT_DIM, IN_DIM), jnp.float32)
    activation_mask = jnp.ones((OUT_DIM, IN_DIM), jnp.float32)
    symbolic_mask = jnp.zeros((OUT_DIM, IN_DIM), jnp.float32)

    rep_mat, ctab, w_fused = build_tables(
        knots_np, np.asarray(coef), np.asarray(univariate_w),
        np.asarray(residual_w), np.asarray(activation_mask),
        np.asarray(symbolic_mask))

    # example input (interior of the grid range)
    x = jax.random.uniform(k_x, (BATCH, IN_DIM), jnp.float32,
                           minval=-0.95, maxval=0.95)

    # single grid step (tile_b = batch); set core_parallel=True with tile_b=BATCH//2
    # on v7x to shard the batch axis across both TensorCores.
    out_pad = kan_layer_pallas(x, rep_mat, ctab, w_fused)
    out_pad = jax.block_until_ready(out_pad)
    out = np.asarray(out_pad)[:, :OUT_DIM]          # validation-only slice (outside the kernel path)

    ref = kan_layer_ref(x, jnp.asarray(knots_np), coef, univariate_w, residual_w,
                        activation_mask, symbolic_mask)
    # Tolerance loosened deliberately for the bf16 MXU operands (f32 accumulation).
    np.testing.assert_allclose(out, np.asarray(ref), rtol=5e-2, atol=2e-2)
    print("KERNEL_OK")
</pallas_src>

<mosaic_0001>
module attributes {stable_mosaic.version = 11 : i64} {
  func.func @kan_kernel(%arg0: i32, %arg1: memref<512x4xf32, #tpu.memory_space<vmem>>, %arg2: memref<4x128xf32, #tpu.memory_space<vmem>>, %arg3: memref<16x128xf32, #tpu.memory_space<vmem>>, %arg4: memref<128x128xbf16, #tpu.memory_space<vmem>>, %arg5: memref<512x128xf32, #tpu.memory_space<vmem>>) attributes {dimension_semantics = [#tpu.dimension_semantics<arbitrary>], iteration_bounds = array<i64: 1>, scalar_prefetch = 0 : i64, scratch_operands = 0 : i64, tpu.core_type = #tpu.core_type<tc>, window_params = [{transform_indices = @transform_0, window_bounds = array<i64: 512, 4>}, {pipeline_mode = #tpu.pipeline_mode<synchronous>, transform_indices = @transform_1, window_bounds = array<i64: 4, 128>}, {pipeline_mode = #tpu.pipeline_mode<synchronous>, transform_indices = @transform_2, window_bounds = array<i64: 16, 128>}, {pipeline_mode = #tpu.pipeline_mode<synchronous>, transform_indices = @transform_3, window_bounds = array<i64: 128, 128>}, {transform_indices = @transform_4, window_bounds = array<i64: 512, 128>}]} {
    %c0 = arith.constant 0 : index
    %c0_0 = arith.constant 0 : index
    %0 = vector.load %arg1[%c0, %c0_0] : memref<512x4xf32, #tpu.memory_space<vmem>>, vector<512x4xf32>
    %c0_1 = arith.constant 0 : index
    %c0_2 = arith.constant 0 : index
    %1 = vector.load %arg2[%c0_1, %c0_2] : memref<4x128xf32, #tpu.memory_space<vmem>>, vector<4x128xf32>
    %cst = arith.constant dense<0.000000e+00> : vector<512x128xf32>
    %2 = tpu.matmul %0, %1, %cst {dimension_numbers = #tpu.dot_dimension_numbers<[1], [0], [0], [1], [0, 0, 1, 1], [], []>} : vector<512x4xf32>, vector<4x128xf32>, vector<512x128xf32> -> vector<512x128xf32>
    %c0_3 = arith.constant 0 : index
    %c0_4 = arith.constant 0 : index
    %3 = vector.load %arg3[%c0_3, %c0_4] : memref<16x128xf32, #tpu.memory_space<vmem>>, vector<16x128xf32>
    %4 = vector.extract_strided_slice %3 {offsets = [0, 0], sizes = [1, 128], strides = [1, 1]} : vector<16x128xf32> to vector<1x128xf32>
    %5 = vector.extract_strided_slice %3 {offsets = [1, 0], sizes = [1, 128], strides = [1, 1]} : vector<16x128xf32> to vector<1x128xf32>
    %6 = vector.broadcast %4 : vector<1x128xf32> to vector<512x128xf32>
    %7 = arith.cmpf oge, %2, %6 : vector<512x128xf32>
    %8 = vector.broadcast %5 : vector<1x128xf32> to vector<512x128xf32>
    %9 = arith.cmpf olt, %2, %8 : vector<512x128xf32>
    %10 = arith.andi %7, %9 : vector<512x128xi1>
    %11 = arith.extui %10 : vector<512x128xi1> to vector<512x128xi32>
    %12 = arith.sitofp %11 : vector<512x128xi32> to vector<512x128xf32>
    %13 = vector.extract_strided_slice %3 {offsets = [2, 0], sizes = [1, 128], strides = [1, 1]} : vector<16x128xf32> to vector<1x128xf32>
    %14 = vector.extract_strided_slice %3 {offsets = [3, 0], sizes = [1, 128], strides = [1, 1]} : vector<16x128xf32> to vector<1x128xf32>
    %15 = vector.extract_strided_slice %3 {offsets = [4, 0], sizes = [1, 128], strides = [1, 1]} : vector<16x128xf32> to vector<1x128xf32>
    %16 = vector.extract_strided_slice %3 {offsets = [5, 0], sizes = [1, 128], strides = [1, 1]} : vector<16x128xf32> to vector<1x128xf32>
    %c127_i32 = arith.constant 127 : i32
    %17 = tpu.dynamic_rotate %12 by %c127_i32 dim 1 : vector<512x128xf32>, i32 -> vector<512x128xf32>
    %18 = vector.broadcast %13 : vector<1x128xf32> to vector<512x128xf32>
    %19 = arith.mulf %2, %18 : vector<512x128xf32>
    %20 = vector.broadcast %14 : vector<1x128xf32> to vector<512x128xf32>
    %21 = arith.addf %19, %20 : vector<512x128xf32>
    %22 = arith.mulf %21, %12 : vector<512x128xf32>
    %23 = vector.broadcast %15 : vector<1x128xf32> to vector<512x128xf32>
    %24 = arith.mulf %2, %23 : vector<512x128xf32>
    %25 = vector.broadcast %16 : vector<1x128xf32> to vector<512x128xf32>
    %26 = arith.addf %24, %25 : vector<512x128xf32>
    %27 = arith.mulf %26, %17 : vector<512x128xf32>
    %28 = arith.addf %22, %27 : vector<512x128xf32>
    %29 = vector.extract_strided_slice %3 {offsets = [6, 0], sizes = [1, 128], strides = [1, 1]} : vector<16x128xf32> to vector<1x128xf32>
    %30 = vector.extract_strided_slice %3 {offsets = [7, 0], sizes = [1, 128], strides = [1, 1]} : vector<16x128xf32> to vector<1x128xf32>
    %31 = vector.extract_strided_slice %3 {offsets = [8, 0], sizes = [1, 128], strides = [1, 1]} : vector<16x128xf32> to vector<1x128xf32>
    %32 = vector.extract_strided_slice %3 {offsets = [9, 0], sizes = [1, 128], strides = [1, 1]} : vector<16x128xf32> to vector<1x128xf32>
    %c127_i32_5 = arith.constant 127 : i32
    %33 = tpu.dynamic_rotate %28 by %c127_i32_5 dim 1 : vector<512x128xf32>, i32 -> vector<512x128xf32>
    %34 = vector.broadcast %29 : vector<1x128xf32> to vector<512x128xf32>
    %35 = arith.mulf %2, %34 : vector<512x128xf32>
    %36 = vector.broadcast %30 : vector<1x128xf32> to vector<512x128xf32>
    %37 = arith.addf %35, %36 : vector<512x128xf32>
    %38 = arith.mulf %37, %28 : vector<512x128xf32>
    %39 = vector.broadcast %31 : vector<1x128xf32> to vector<512x128xf32>
    %40 = arith.mulf %2, %39 : vector<512x128xf32>
    %41 = vector.broadcast %32 : vector<1x128xf32> to vector<512x128xf32>
    %42 = arith.addf %40, %41 : vector<512x128xf32>
    %43 = arith.mulf %42, %33 : vector<512x128xf32>
    %44 = arith.addf %38, %43 : vector<512x128xf32>
    %45 = vector.extract_strided_slice %3 {offsets = [10, 0], sizes = [1, 128], strides = [1, 1]} : vector<16x128xf32> to vector<1x128xf32>
    %46 = vector.extract_strided_slice %3 {offsets = [11, 0], sizes = [1, 128], strides = [1, 1]} : vector<16x128xf32> to vector<1x128xf32>
    %47 = vector.extract_strided_slice %3 {offsets = [12, 0], sizes = [1, 128], strides = [1, 1]} : vector<16x128xf32> to vector<1x128xf32>
    %48 = vector.extract_strided_slice %3 {offsets = [13, 0], sizes = [1, 128], strides = [1, 1]} : vector<16x128xf32> to vector<1x128xf32>
    %c127_i32_6 = arith.constant 127 : i32
    %49 = tpu.dynamic_rotate %44 by %c127_i32_6 dim 1 : vector<512x128xf32>, i32 -> vector<512x128xf32>
    %50 = vector.broadcast %45 : vector<1x128xf32> to vector<512x128xf32>
    %51 = arith.mulf %2, %50 : vector<512x128xf32>
    %52 = vector.broadcast %46 : vector<1x128xf32> to vector<512x128xf32>
    %53 = arith.addf %51, %52 : vector<512x128xf32>
    %54 = arith.mulf %53, %44 : vector<512x128xf32>
    %55 = vector.broadcast %47 : vector<1x128xf32> to vector<512x128xf32>
    %56 = arith.mulf %2, %55 : vector<512x128xf32>
    %57 = vector.broadcast %48 : vector<1x128xf32> to vector<512x128xf32>
    %58 = arith.addf %56, %57 : vector<512x128xf32>
    %59 = arith.mulf %58, %49 : vector<512x128xf32>
    %60 = arith.addf %54, %59 : vector<512x128xf32>
    %61 = vector.extract_strided_slice %3 {offsets = [14, 0], sizes = [1, 128], strides = [1, 1]} : vector<16x128xf32> to vector<1x128xf32>
    %62 = arith.negf %2 : vector<512x128xf32>
    %63 = math.exp %62 : vector<512x128xf32>
    %cst_7 = arith.constant 1.000000e+00 : f32
    %64 = vector.broadcast %cst_7 : f32 to vector<512x128xf32>
    %65 = arith.addf %64, %63 : vector<512x128xf32>
    %66 = arith.divf %64, %65 : vector<512x128xf32>
    %67 = arith.mulf %2, %66 : vector<512x128xf32>
    %68 = vector.broadcast %61 : vector<1x128xf32> to vector<512x128xf32>
    %69 = arith.mulf %67, %68 : vector<512x128xf32>
    %70 = arith.addf %60, %69 : vector<512x128xf32>
    %71 = arith.truncf %70 : vector<512x128xf32> to vector<512x128xbf16>
    %c0_8 = arith.constant 0 : index
    %c0_9 = arith.constant 0 : index
    %72 = vector.load %arg4[%c0_8, %c0_9] : memref<128x128xbf16, #tpu.memory_space<vmem>>, vector<128x128xbf16>
    %cst_10 = arith.constant dense<0.000000e+00> : vector<512x128xf32>
    %73 = tpu.matmul %71, %72, %cst_10 {dimension_numbers = #tpu.dot_dimension_numbers<[1], [0], [0], [1], [0, 0, 1, 1], [], []>} : vector<512x128xbf16>, vector<128x128xbf16>, vector<512x128xf32> -> vector<512x128xf32>
    %c0_11 = arith.constant 0 : index
    %c0_12 = arith.constant 0 : index
    %74 = vector.load %arg5[%c0_11, %c0_12] : memref<512x128xf32, #tpu.memory_space<vmem>>, vector<512x128xf32>
    tpu.vector_store %arg5[%c0_11, %c0_12], %73 {strides = array<i32>} : memref<512x128xf32, #tpu.memory_space<vmem>>, vector<512x128xf32>,
    return
  }
  func.func @transform_0(%arg0: i32) -> (i32, i32) {
    %c0_i32 = arith.constant 0 : i32
    %c0_i32_0 = arith.constant 0 : i32
    return %arg0, %c0_i32 : i32, i32
  }
  func.func @transform_1(%arg0: i32) -> (i32, i32) {
    %c0_i32 = arith.constant 0 : i32
    %c0_i32_0 = arith.constant 0 : i32
    %c0_i32_1 = arith.constant 0 : i32
    return %c0_i32, %c0_i32_0 : i32, i32
  }
  func.func @transform_2(%arg0: i32) -> (i32, i32) {
    %c0_i32 = arith.constant 0 : i32
    %c0_i32_0 = arith.constant 0 : i32
    %c0_i32_1 = arith.constant 0 : i32
    return %c0_i32, %c0_i32_0 : i32, i32
  }
  func.func @transform_3(%arg0: i32) -> (i32, i32) {
    %c0_i32 = arith.constant 0 : i32
    %c0_i32_0 = arith.constant 0 : i32
    %c0_i32_1 = arith.constant 0 : i32
    return %c0_i32, %c0_i32_0 : i32, i32
  }
  func.func @transform_4(%arg0: i32) -> (i32, i32) {
    %c0_i32 = arith.constant 0 : i32
    %c0_i32_0 = arith.constant 0 : i32
    return %arg0, %c0_i32 : i32, i32
  }
}

</mosaic_0001>

<llo_original>
// kernel: kan_layer_pallas.1
$region0: #{kan_layer_pallas.1}
  #allocation0 [shape = 'u32[]', space=smem, size = 0x4, offset = 0x4, fixed_abs, tag = 'smem constant byte address 0x4 - core index']
  #allocation1 [shape = 'u32[72,128]{1,0:T(1,128)}', space=vmem, size = 0x9000, scoped, tag = 'internal scratch']
  %s0 = inlined_call_operand.vmem [shape: f32[512,4], index: 0, kind: input, shape index: {}]
  %s1 = inlined_call_operand.vmem [shape: f32[4,128], index: 1, kind: input, shape index: {}]
  %s2 = inlined_call_operand.vmem [shape: f32[16,128], index: 2, kind: input, shape index: {}]
  %s3 = inlined_call_operand.vmem [shape: bf16[128,128], index: 3, kind: input, shape index: {}]
  %s4 = inlined_call_operand.hbm [shape: f32[512,128], index: 4, kind: output, shape index: {}]
  %s5 = sld [smem:[#allocation0]]
  $region26: #{kan_layer_pallas.1} parent=0
    _
  %s7 = ssub.s32 1, %s5
  %s8 = scalar_select 0, %s7, %s5
  $region1: #{kan_layer_pallas.1} parent=0
    #allocation2 [shape = 'u8[262144]{0}', space=vmem, size = 0x40000, scoped, tag = 'output window, operand 0, single buffered']
    #allocation3 [shape = 's32[1]{0}', space=sflag, size = 0x4, scoped, tag = 'scoped memory for kan_layer_pallas.1']
    %9 = vsyncpa [#allocation3], 0
    // Predicated region
    $region2: #{kan_layer_pallas.1} parent=1 // pred_check
      _
    $region3: #{kan_layer_pallas.1} parent=1 // pred_check_branch
      %11 = sbr.rel (0) target = $region5
    $region4: #{kan_layer_pallas.1} parent=1 // pred_region
      _
    $region5: #{kan_layer_pallas.1} parent=1 // pred_fallthru
      _
    // Predicated region
    $region6: #{kan_layer_pallas.1} parent=1 // pred_check
      _
    $region7: #{kan_layer_pallas.1} parent=1 // pred_check_branch
      %13 = sbr.rel (0) target = $region9
    $region8: #{kan_layer_pallas.1} parent=1 // pred_region
      _
    $region9: #{kan_layer_pallas.1} parent=1 // pred_fallthru
      _
    // Predicated region
    $region10: #{kan_layer_pallas.1} parent=1 // pred_check
      _
    $region11: #{kan_layer_pallas.1} parent=1 // pred_check_branch
      %15 = sbr.rel (0) target = $region13
    $region12: #{kan_layer_pallas.1} parent=1 // pred_region
      _
    $region13: #{kan_layer_pallas.1} parent=1 // pred_fallthru
      _
    // Predicated region
    $region14: #{kan_layer_pallas.1} parent=1 // pred_check
      _
    $region15: #{kan_layer_pallas.1} parent=1 // pred_check_branch
      %17 = sbr.rel (0) target = $region17
    $region16: #{kan_layer_pallas.1} parent=1 // pred_region
      _
    $region17: #{kan_layer_pallas.1} parent=1 // pred_fallthru
      _
    %v18 = vld [vmem:[%s0] sm:$0xff]
    %v19 = vld [vmem:[%s0 + $0x8] sm:$0xff]
    %v20 = vld [vmem:[%s0 + $0x10] sm:$0xff]
    %v21 = vld [vmem:[%s0 + $0x18] sm:$0xff]
    %v22 = vld [vmem:[%s0 + $0x20] sm:$0xff]
    %v23 = vld [vmem:[%s0 + $0x28] sm:$0xff]
    %v24 = vld [vmem:[%s0 + $0x30] sm:$0xff]
    %v25 = vld [vmem:[%s0 + $0x38] sm:$0xff]
    %v26 = vld [vmem:[%s0 + $0x40] sm:$0xff]
    %v27 = vld [vmem:[%s0 + $0x48] sm:$0xff]
    %v28 = vld [vmem:[%s0 + $0x50] sm:$0xff]
    %v29 = vld [vmem:[%s0 + $0x58] sm:$0xff]
    %v30 = vld [vmem:[%s0 + $0x60] sm:$0xff]
    %v31 = vld [vmem:[%s0 + $0x68] sm:$0xff]
    %v32 = vld [vmem:[%s0 + $0x70] sm:$0xff]
    %v33 = vld [vmem:[%s0 + $0x78] sm:$0xff]
    %v34 = vld [vmem:[%s0 + $0x80] sm:$0xff]
    %v35 = vld [vmem:[%s0 + $0x88] sm:$0xff]
    %v36 = vld [vmem:[%s0 + $0x90] sm:$0xff]
    %v37 = vld [vmem:[%s0 + $0x98] sm:$0xff]
    %v38 = vld [vmem:[%s0 + $0xa0] sm:$0xff]
    %v39 = vld [vmem:[%s0 + $0xa8] sm:$0xff]
    %v40 = vld [vmem:[%s0 + $0xb0] sm:$0xff]
    %v41 = vld [vmem:[%s0 + $0xb8] sm:$0xff]
    %v42 = vld [vmem:[%s0 + $0xc0] sm:$0xff]
    %v43 = vld [vmem:[%s0 + $0xc8] sm:$0xff]
    %v44 = vld [vmem:[%s0 + $0xd0] sm:$0xff]
    %v45 = vld [vmem:[%s0 + $0xd8] sm:$0xff]
    %v46 = vld [vmem:[%s0 + $0xe0] sm:$0xff]
    %v47 = vld [vmem:[%s0 + $0xe8] sm:$0xff]
    %v48 = vld [vmem:[%s0 + $0xf0] sm:$0xff]
    %v49 = vld [vmem:[%s0 + $0xf8] sm:$0xff]
    %v50 = vld [vmem:[%s0 + $0x100] sm:$0xff]
    %v51 = vld [vmem:[%s0 + $0x108] sm:$0xff]
    %v52 = vld [vmem:[%s0 + $0x110] sm:$0xff]
    %v53 = vld [vmem:[%s0 + $0x118] sm:$0xff]
    %v54 = vld [vmem:[%s0 + $0x120] sm:$0xff]
    %v55 = vld [vmem:[%s0 + $0x128] sm:$0xff]
    %v56 = vld [vmem:[%s0 + $0x130] sm:$0xff]
    %v57 = vld [vmem:[%s0 + $0x138] sm:$0xff]
    %v58 = vld [vmem:[%s0 + $0x140] sm:$0xff]
    %v59 = vld [vmem:[%s0 + $0x148] sm:$0xff]
    %v60 = vld [vmem:[%s0 + $0x150] sm:$0xff]
    %v61 = vld [vmem:[%s0 + $0x158] sm:$0xff]
    %v62 = vld [vmem:[%s0 + $0x160] sm:$0xff]
    %v63 = vld [vmem:[%s0 + $0x168] sm:$0xff]
    %v64 = vld [vmem:[%s0 + $0x170] sm:$0xff]
    %v65 = vld [vmem:[%s0 + $0x178] sm:$0xff]
    %v66 = vld [vmem:[%s0 + $0x180] sm:$0xff]
    %v67 = vld [vmem:[%s0 + $0x188] sm:$0xff]
    %v68 = vld [vmem:[%s0 + $0x190] sm:$0xff]
    %v69 = vld [vmem:[%s0 + $0x198] sm:$0xff]
    %v70 = vld [vmem:[%s0 + $0x1a0] sm:$0xff]
    %v71 = vld [vmem:[%s0 + $0x1a8] sm:$0xff]
    %v72 = vld [vmem:[%s0 + $0x1b0] sm:$0xff]
    %v73 = vld [vmem:[%s0 + $0x1b8] sm:$0xff]
    %v74 = vld [vmem:[%s0 + $0x1c0] sm:$0xff]
    %v75 = vld [vmem:[%s0 + $0x1c8] sm:$0xff]
    %v76 = vld [vmem:[%s0 + $0x1d0] sm:$0xff]
    %v77 = vld [vmem:[%s0 + $0x1d8] sm:$0xff]
    %v78 = vld [vmem:[%s0 + $0x1e0] sm:$0xff]
    %v79 = vld [vmem:[%s0 + $0x1e8] sm:$0xff]
    %v80 = vld [vmem:[%s0 + $0x1f0] sm:$0xff]
    %v81 = vld [vmem:[%s0 + $0x1f8] sm:$0xff]
    %v82 = vld [vmem:[%s1] sm:$0xf]
    %vm83 = vcmask 31744
    %v85 = vsel %vm83, %v18, 0
    %v88 = vsel %vm83, %v19, 0
    %v91 = vsel %vm83, %v20, 0
    %v94 = vsel %vm83, %v21, 0
    %v97 = vsel %vm83, %v22, 0
    %v100 = vsel %vm83, %v23, 0
    %v103 = vsel %vm83, %v24, 0
    %v106 = vsel %vm83, %v25, 0
    %v109 = vsel %vm83, %v26, 0
    %v112 = vsel %vm83, %v27, 0
    %v115 = vsel %vm83, %v28, 0
    %v118 = vsel %vm83, %v29, 0
    %v121 = vsel %vm83, %v30, 0
    %v124 = vsel %vm83, %v31, 0
    %v127 = vsel %vm83, %v32, 0
    %v130 = vsel %vm83, %v33, 0
    %v133 = vsel %vm83, %v34, 0
    %v136 = vsel %vm83, %v35, 0
    %v139 = vsel %vm83, %v36, 0
    %v142 = vsel %vm83, %v37, 0
    %v145 = vsel %vm83, %v38, 0
    %v148 = vsel %vm83, %v39, 0
    %v151 = vsel %vm83, %v40, 0
    %v154 = vsel %vm83, %v41, 0
    %v157 = vsel %vm83, %v42, 0
    %v160 = vsel %vm83, %v43, 0
    %v163 = vsel %vm83, %v44, 0
    %v166 = vsel %vm83, %v45, 0
    %v169 = vsel %vm83, %v46, 0
    %v172 = vsel %vm83, %v47, 0
    %v175 = vsel %vm83, %v48, 0
    %v178 = vsel %vm83, %v49, 0
    %v181 = vsel %vm83, %v50, 0
    %v184 = vsel %vm83, %v51, 0
    %v187 = vsel %vm83, %v52, 0
    %v190 = vsel %vm83, %v53, 0
    %v193 = vsel %vm83, %v54, 0
    %v196 = vsel %vm83, %v55, 0
    %v199 = vsel %vm83, %v56, 0
    %v202 = vsel %vm83, %v57, 0
    %v205 = vsel %vm83, %v58, 0
    %v208 = vsel %vm83, %v59, 0
    %v211 = vsel %vm83, %v60, 0
    %v214 = vsel %vm83, %v61, 0
    %v217 = vsel %vm83, %v62, 0
    %v220 = vsel %vm83, %v63, 0
    %v223 = vsel %vm83, %v64, 0
    %v226 = vsel %vm83, %v65, 0
    %v229 = vsel %vm83, %v66, 0
    %v232 = vsel %vm83, %v67, 0
    %v235 = vsel %vm83, %v68, 0
    %v238 = vsel %vm83, %v69, 0
    %v241 = vsel %vm83, %v70, 0
    %v244 = vsel %vm83, %v71, 0
    %v247 = vsel %vm83, %v72, 0
    %v250 = vsel %vm83, %v73, 0
    %v253 = vsel %vm83, %v74, 0
    %v256 = vsel %vm83, %v75, 0
    %v259 = vsel %vm83, %v76, 0
    %v262 = vsel %vm83, %v77, 0
    %v265 = vsel %vm83, %v78, 0
    %v268 = vsel %vm83, %v79, 0
    %v271 = vsel %vm83, %v80, 0
    %v274 = vsel %vm83, %v81, 0
    %vm276 = vcmask 1043456
    %v278 = vsel %vm276, %v82, 0
    %280 = vmatpush.msra.mxu0 0.0
    %281 = vmatpush.msra.mxu0 0.0
    %282 = vmatpush.msra.mxu0 0.0
    %283 = vmatpush.msra.mxu0 0.0
    %284 = vmatpush.msra.mxu0 0.0
    %285 = vmatpush.msra.mxu0 0.0
    %286 = vmatpush.msra.mxu0 0.0
    %287 = vmatpush.msra.mxu0 0.0
    %288 = vmatpush.msra.mxu0 0.0
    %289 = vmatpush.msra.mxu0 0.0
    %290 = vmatpush.msra.mxu0 0.0
    %291 = vmatpush.msra.mxu0 0.0
    %292 = vmatpush.msra.mxu0 0.0
    %293 = vmatpush.msra.mxu0 0.0
    %294 = vmatpush.msra.mxu0 0.0
    %295 = vmatpush.msra.mxu0 %v278
    %296 = vmatmul.f32.gmra.mxu0 %v85
    %v297 = vpop.f32.mrf.mxu0
    %v298 = vadd.f32 0.0, %v297
    %299 = vmatmul.f32.gmra.mxu0 %v88
    %v300 = vpop.f32.mrf.mxu0
    %v301 = vadd.f32 0.0, %v300
    %302 = vmatmul.f32.gmra.mxu0 %v91
    %v303 = vpop.f32.mrf.mxu0
    %v304 = vadd.f32 0.0, %v303
    %305 = vmatmul.f32.gmra.mxu0 %v94
    %v306 = vpop.f32.mrf.mxu0
    %v307 = vadd.f32 0.0, %v306
    %308 = vmatmul.f32.gmra.mxu0 %v97
    %v309 = vpop.f32.mrf.mxu0
    %v310 = vadd.f32 0.0, %v309
    %311 = vmatmul.f32.gmra.mxu0 %v100
    %v312 = vpop.f32.mrf.mxu0
    %v313 = vadd.f32 0.0, %v312
    %314 = vmatmul.f32.gmra.mxu0 %v103
    %v315 = vpop.f32.mrf.mxu0
    %v316 = vadd.f32 0.0, %v315
    %317 = vmatmul.f32.gmra.mxu0 %v106
    %v318 = vpop.f32.mrf.mxu0
    %v319 = vadd.f32 0.0, %v318
    %320 = vmatmul.f32.gmra.mxu0 %v109
    %v321 = vpop.f32.mrf.mxu0
    %v322 = vadd.f32 0.0, %v321
    %323 = vmatmul.f32.gmra.mxu0 %v112
    %v324 = vpop.f32.mrf.mxu0
    %v325 = vadd.f32 0.0, %v324
    %326 = vmatmul.f32.gmra.mxu0 %v115
    %v327 = vpop.f32.mrf.mxu0
    %v328 = vadd.f32 0.0, %v327
    %329 = vmatmul.f32.gmra.mxu0 %v118
    %v330 = vpop.f32.mrf.mxu0
    %v331 = vadd.f32 0.0, %v330
    %332 = vmatmul.f32.gmra.mxu0 %v121
    %v333 = vpop.f32.mrf.mxu0
    %v334 = vadd.f32 0.0, %v333
    %335 = vmatmul.f32.gmra.mxu0 %v124
    %v336 = vpop.f32.mrf.mxu0
    %v337 = vadd.f32 0.0, %v336
    %338 = vmatmul.f32.gmra.mxu0 %v127
    %v339 = vpop.f32.mrf.mxu0
    %v340 = vadd.f32 0.0, %v339
    %341 = vmatmul.f32.gmra.mxu0 %v130
    %v342 = vpop.f32.mrf.mxu0
    %v343 = vadd.f32 0.0, %v342
    %344 = vmatmul.f32.gmra.mxu0 %v133
    %v345 = vpop.f32.mrf.mxu0
    %v346 = vadd.f32 0.0, %v345
    %347 = vmatmul.f32.gmra.mxu0 %v136
    %v348 = vpop.f32.mrf.mxu0
    %v349 = vadd.f32 0.0, %v348
    %350 = vmatmul.f32.gmra.mxu0 %v139
    %v351 = vpop.f32.mrf.mxu0
    %v352 = vadd.f32 0.0, %v351
    %353 = vmatmul.f32.gmra.mxu0 %v142
    %v354 = vpop.f32.mrf.mxu0
    %v355 = vadd.f32 0.0, %v354
    %356 = vmatmul.f32.gmra.mxu0 %v145
    %v357 = vpop.f32.mrf.mxu0
    %v358 = vadd.f32 0.0, %v357
    %359 = vmatmul.f32.gmra.mxu0 %v148
    %v360 = vpop.f32.mrf.mxu0
    %v361 = vadd.f32 0.0, %v360
    %362 = vmatmul.f32.gmra.mxu0 %v151
    %v363 = vpop.f32.mrf.mxu0
    %v364 = vadd.f32 0.0, %v363
    %365 = vmatmul.f32.gmra.mxu0 %v154
    %v366 = vpop.f32.mrf.mxu0
    %v367 = vadd.f32 0.0, %v366
    %368 = vmatmul.f32.gmra.mxu0 %v157
    %v369 = vpop.f32.mrf.mxu0
    %v370 = vadd.f32 0.0, %v369
    %371 = vmatmul.f32.gmra.mxu0 %v160
    %v372 = vpop.f32.mrf.mxu0
    %v373 = vadd.f32 0.0, %v372
    %374 = vmatmul.f32.gmra.mxu0 %v163
    %v375 = vpop.f32.mrf.mxu0
    %v376 = vadd.f32 0.0, %v375
    %377 = vmatmul.f32.gmra.mxu0 %v166
    %v378 = vpop.f32.mrf.mxu0
    %v379 = vadd.f32 0.0, %v378
    %380 = vmatmul.f32.gmra.mxu0 %v169
    %v381 = vpop.f32.mrf.mxu0
    %v382 = vadd.f32 0.0, %v381
    %383 = vmatmul.f32.gmra.mxu0 %v172
    %v384 = vpop.f32.mrf.mxu0
    %v385 = vadd.f32 0.0, %v384
    %386 = vmatmul.f32.gmra.mxu0 %v175
    %v387 = vpop.f32.mrf.mxu0
    %v388 = vadd.f32 0.0, %v387
    %389 = vmatmul.f32.gmra.mxu0 %v178
    %v390 = vpop.f32.mrf.mxu0
    %v391 = vadd.f32 0.0, %v390
    %392 = vmatmul.f32.gmra.mxu0 %v181
    %v393 = vpop.f32.mrf.mxu0
    %v394 = vadd.f32 0.0, %v393
    %395 = vmatmul.f32.gmra.mxu0 %v184
    %v396 = vpop.f32.mrf.mxu0
    %v397 = vadd.f32 0.0, %v396
    %398 = vmatmul.f32.gmra.mxu0 %v187
    %v399 = vpop.f32.mrf.mxu0
    %v400 = vadd.f32 0.0, %v399
    %401 = vmatmul.f32.gmra.mxu0 %v190
    %v402 = vpop.f32.mrf.mxu0
    %v403 = vadd.f32 0.0, %v402
    %404 = vmatmul.f32.gmra.mxu0 %v193
    %v405 = vpop.f32.mrf.mxu0
    %v406 = vadd.f32 0.0, %v405
    %407 = vmatmul.f32.gmra.mxu0 %v196
    %v408 = vpop.f32.mrf.mxu0
    %v409 = vadd.f32 0.0, %v408
    %410 = vmatmul.f32.gmra.mxu0 %v199
    %v411 = vpop.f32.mrf.mxu0
    %v412 = vadd.f32 0.0, %v411
    %413 = vmatmul.f32.gmra.mxu0 %v202
    %v414 = vpop.f32.mrf.mxu0
    %v415 = vadd.f32 0.0, %v414
    %416 = vmatmul.f32.gmra.mxu0 %v205
    %v417 = vpop.f32.mrf.mxu0
    %v418 = vadd.f32 0.0, %v417
    %419 = vmatmul.f32.gmra.mxu0 %v208
    %v420 = vpop.f32.mrf.mxu0
    %v421 = vadd.f32 0.0, %v420
    %422 = vmatmul.f32.gmra.mxu0 %v211
    %v423 = vpop.f32.mrf.mxu0
    %v424 = vadd.f32 0.0, %v423
    %425 = vmatmul.f32.gmra.mxu0 %v214
    %v426 = vpop.f32.mrf.mxu0
    %v427 = vadd.f32 0.0, %v426
    %428 = vmatmul.f32.gmra.mxu0 %v217
    %v429 = vpop.f32.mrf.mxu0
    %v430 = vadd.f32 0.0, %v429
    %431 = vmatmul.f32.gmra.mxu0 %v220
    %v432 = vpop.f32.mrf.mxu0
    %v433 = vadd.f32 0.0, %v432
    %434 = vmatmul.f32.gmra.mxu0 %v223
    %v435 = vpop.f32.mrf.mxu0
    %v436 = vadd.f32 0.0, %v435
    %437 = vmatmul.f32.gmra.mxu0 %v226
    %v438 = vpop.f32.mrf.mxu0
    %v439 = vadd.f32 0.0, %v438
    %440 = vmatmul.f32.gmra.mxu0 %v229
    %v441 = vpop.f32.mrf.mxu0
    %v442 = vadd.f32 0.0, %v441
    %443 = vmatmul.f32.gmra.mxu0 %v232
    %v444 = vpop.f32.mrf.mxu0
    %v445 = vadd.f32 0.0, %v444
    %446 = vmatmul.f32.gmra.mxu0 %v235
    %v447 = vpop.f32.mrf.mxu0
    %v448 = vadd.f32 0.0, %v447
    %449 = vmatmul.f32.gmra.mxu0 %v238
    %v450 = vpop.f32.mrf.mxu0
    %v451 = vadd.f32 0.0, %v450
    %452 = vmatmul.f32.gmra.mxu0 %v241
    %v453 = vpop.f32.mrf.mxu0
    %v454 = vadd.f32 0.0, %v453
    %455 = vmatmul.f32.gmra.mxu0 %v244
    %v456 = vpop.f32.mrf.mxu0
    %v457 = vadd.f32 0.0, %v456
    %458 = vmatmul.f32.gmra.mxu0 %v247
    %v459 = vpop.f32.mrf.mxu0
    %v460 = vadd.f32 0.0, %v459
    %461 = vmatmul.f32.gmra.mxu0 %v250
    %v462 = vpop.f32.mrf.mxu0
    %v463 = vadd.f32 0.0, %v462
    %464 = vmatmul.f32.gmra.mxu0 %v253
    %v465 = vpop.f32.mrf.mxu0
    %v466 = vadd.f32 0.0, %v465
    %467 = vmatmul.f32.gmra.mxu0 %v256
    %v468 = vpop.f32.mrf.mxu0
    %v469 = vadd.f32 0.0, %v468
    %470 = vmatmul.f32.gmra.mxu0 %v259
    %v471 = vpop.f32.mrf.mxu0
    %v472 = vadd.f32 0.0, %v471
    %473 = vmatmul.f32.gmra.mxu0 %v262
    %v474 = vpop.f32.mrf.mxu0
    %v475 = vadd.f32 0.0, %v474
    %476 = vmatmul.f32.gmra.mxu0 %v265
    %v477 = vpop.f32.mrf.mxu0
    %v478 = vadd.f32 0.0, %v477
    %479 = vmatmul.f32.gmra.mxu0 %v268
    %v480 = vpop.f32.mrf.mxu0
    %v481 = vadd.f32 0.0, %v480
    %482 = vmatmul.f32.gmra.mxu0 %v271
    %v483 = vpop.f32.mrf.mxu0
    %v484 = vadd.f32 0.0, %v483
    %485 = vmatmul.f32.gmra.mxu0 %v274
    %v486 = vpop.f32.mrf.mxu0
    %v487 = vadd.f32 0.0, %v486
    %488 = vdwg.mxu0
    %v489 = vld [vmem:[%s2] sm:$0xff]
    %v490 = vld [vmem:[%s2 + $0x8] sm:$0xff]
    %v491 = vperm.slane %v489, 0
    %vm492 = vcmp.ge.f32.partialorder %v298, %v491
    %vm493 = vcmp.ge.f32.partialorder %v301, %v491
    %vm494 = vcmp.ge.f32.partialorder %v304, %v491
    %vm495 = vcmp.ge.f32.partialorder %v307, %v491
    %vm496 = vcmp.ge.f32.partialorder %v310, %v491
    %vm497 = vcmp.ge.f32.partialorder %v313, %v491
    %vm498 = vcmp.ge.f32.partialorder %v316, %v491
    %vm499 = vcmp.ge.f32.partialorder %v319, %v491
    %vm500 = vcmp.ge.f32.partialorder %v322, %v491
    %vm501 = vcmp.ge.f32.partialorder %v325, %v491
    %vm502 = vcmp.ge.f32.partialorder %v328, %v491
    %vm503 = vcmp.ge.f32.partialorder %v331, %v491
    %vm504 = vcmp.ge.f32.partialorder %v334, %v491
    %vm505 = vcmp.ge.f32.partialorder %v337, %v491
    %vm506 = vcmp.ge.f32.partialorder %v340, %v491
    %vm507 = vcmp.ge.f32.partialorder %v343, %v491
    %vm508 = vcmp.ge.f32.partialorder %v346, %v491
    %vm509 = vcmp.ge.f32.partialorder %v349, %v491
    %vm510 = vcmp.ge.f32.partialorder %v352, %v491
    %vm511 = vcmp.ge.f32.partialorder %v355, %v491
    %vm512 = vcmp.ge.f32.partialorder %v358, %v491
    %vm513 = vcmp.ge.f32.partialorder %v361, %v491
    %vm514 = vcmp.ge.f32.partialorder %v364, %v491
    %vm515 = vcmp.ge.f32.partialorder %v367, %v491
    %vm516 = vcmp.ge.f32.partialorder %v370, %v491
    %vm517 = vcmp.ge.f32.partialorder %v373, %v491
    %vm518 = vcmp.ge.f32.partialorder %v376, %v491
    %vm519 = vcmp.ge.f32.partialorder %v379, %v491
    %vm520 = vcmp.ge.f32.partialorder %v382, %v491
    %vm521 = vcmp.ge.f32.partialorder %v385, %v491
    %vm522 = vcmp.ge.f32.partialorder %v388, %v491
    %vm523 = vcmp.ge.f32.partialorder %v391, %v491
    %vm524 = vcmp.ge.f32.partialorder %v394, %v491
    %vm525 = vcmp.ge.f32.partialorder %v397, %v491
    %vm526 = vcmp.ge.f32.partialorder %v400, %v491
    %vm527 = vcmp.ge.f32.partialorder %v403, %v491
    %vm528 = vcmp.ge.f32.partialorder %v406, %v491
    %vm529 = vcmp.ge.f32.partialorder %v409, %v491
    %vm530 = vcmp.ge.f32.partialorder %v412, %v491
    %vm531 = vcmp.ge.f32.partialorder %v415, %v491
    %vm532 = vcmp.ge.f32.partialorder %v418, %v491
    %vm533 = vcmp.ge.f32.partialorder %v421, %v491
    %vm534 = vcmp.ge.f32.partialorder %v424, %v491
    %vm535 = vcmp.ge.f32.partialorder %v427, %v491
    %vm536 = vcmp.ge.f32.partialorder %v430, %v491
    %vm537 = vcmp.ge.f32.partialorder %v433, %v491
    %vm538 = vcmp.ge.f32.partialorder %v436, %v491
    %vm539 = vcmp.ge.f32.partialorder %v439, %v491
    %vm540 = vcmp.ge.f32.partialorder %v442, %v491
    %vm541 = vcmp.ge.f32.partialorder %v445, %v491
    %vm542 = vcmp.ge.f32.partialorder %v448, %v491
    %vm543 = vcmp.ge.f32.partialorder %v451, %v491
    %vm544 = vcmp.ge.f32.partialorder %v454, %v491
    %vm545 = vcmp.ge.f32.partialorder %v457, %v491
    %vm546 = vcmp.ge.f32.partialorder %v460, %v491
    %vm547 = vcmp.ge.f32.partialorder %v463, %v491
    %vm548 = vcmp.ge.f32.partialorder %v466, %v491
    %vm549 = vcmp.ge.f32.partialorder %v469, %v491
    %vm550 = vcmp.ge.f32.partialorder %v472, %v491
    %vm551 = vcmp.ge.f32.partialorder %v475, %v491
    %vm552 = vcmp.ge.f32.partialorder %v478, %v491
    %vm553 = vcmp.ge.f32.partialorder %v481, %v491
    %vm554 = vcmp.ge.f32.partialorder %v484, %v491
    %vm555 = vcmp.ge.f32.partialorder %v487, %v491
    %v556 = vperm.slane %v489, 1
    %vm557 = vcmp.lt.f32.partialorder %v298, %v556
    %vm558 = vcmp.lt.f32.partialorder %v301, %v556
    %vm559 = vcmp.lt.f32.partialorder %v304, %v556
    %vm560 = vcmp.lt.f32.partialorder %v307, %v556
    %vm561 = vcmp.lt.f32.partialorder %v310, %v556
    %vm562 = vcmp.lt.f32.partialorder %v313, %v556
    %vm563 = vcmp.lt.f32.partialorder %v316, %v556
    %vm564 = vcmp.lt.f32.partialorder %v319, %v556
    %vm565 = vcmp.lt.f32.partialorder %v322, %v556
    %vm566 = vcmp.lt.f32.partialorder %v325, %v556
    %vm567 = vcmp.lt.f32.partialorder %v328, %v556
    %vm568 = vcmp.lt.f32.partialorder %v331, %v556
    %vm569 = vcmp.lt.f32.partialorder %v334, %v556
    %vm570 = vcmp.lt.f32.partialorder %v337, %v556
    %vm571 = vcmp.lt.f32.partialorder %v340, %v556
    %vm572 = vcmp.lt.f32.partialorder %v343, %v556
    %vm573 = vcmp.lt.f32.partialorder %v346, %v556
    %vm574 = vcmp.lt.f32.partialorder %v349, %v556
    %vm575 = vcmp.lt.f32.partialorder %v352, %v556
    %vm576 = vcmp.lt.f32.partialorder %v355, %v556
    %vm577 = vcmp.lt.f32.partialorder %v358, %v556
    %vm578 = vcmp.lt.f32.partialorder %v361, %v556
    %vm579 = vcmp.lt.f32.partialorder %v364, %v556
    %vm580 = vcmp.lt.f32.partialorder %v367, %v556
    %vm581 = vcmp.lt.f32.partialorder %v370, %v556
    %vm582 = vcmp.lt.f32.partialorder %v373, %v556
    %vm583 = vcmp.lt.f32.partialorder %v376, %v556
    %vm584 = vcmp.lt.f32.partialorder %v379, %v556
    %vm585 = vcmp.lt.f32.partialorder %v382, %v556
    %vm586 = vcmp.lt.f32.partialorder %v385, %v556
    %vm587 = vcmp.lt.f32.partialorder %v388, %v556
    %vm588 = vcmp.lt.f32.partialorder %v391, %v556
    %vm589 = vcmp.lt.f32.partialorder %v394, %v556
    %vm590 = vcmp.lt.f32.partialorder %v397, %v556
    %vm591 = vcmp.lt.f32.partialorder %v400, %v556
    %vm592 = vcmp.lt.f32.partialorder %v403, %v556
    %vm593 = vcmp.lt.f32.partialorder %v406, %v556
    %vm594 = vcmp.lt.f32.partialorder %v409, %v556
    %vm595 = vcmp.lt.f32.partialorder %v412, %v556
    %vm596 = vcmp.lt.f32.partialorder %v415, %v556
    %vm597 = vcmp.lt.f32.partialorder %v418, %v556
    %vm598 = vcmp.lt.f32.partialorder %v421, %v556
    %vm599 = vcmp.lt.f32.partialorder %v424, %v556
    %vm600 = vcmp.lt.f32.partialorder %v427, %v556
    %vm601 = vcmp.lt.f32.partialorder %v430, %v556
    %vm602 = vcmp.lt.f32.partialorder %v433, %v556
    %vm603 = vcmp.lt.f32.partialorder %v436, %v556
    %vm604 = vcmp.lt.f32.partialorder %v439, %v556
    %vm605 = vcmp.lt.f32.partialorder %v442, %v556
    %vm606 = vcmp.lt.f32.partialorder %v445, %v556
    %vm607 = vcmp.lt.f32.partialorder %v448, %v556
    %vm608 = vcmp.lt.f32.partialorder %v451, %v556
    %vm609 = vcmp.lt.f32.partialorder %v454, %v556
    %vm610 = vcmp.lt.f32.partialorder %v457, %v556
    %vm611 = vcmp.lt.f32.partialorder %v460, %v556
    %vm612 = vcmp.lt.f32.partialorder %v463, %v556
    %vm613 = vcmp.lt.f32.partialorder %v466, %v556
    %vm614 = vcmp.lt.f32.partialorder %v469, %v556
    %vm615 = vcmp.lt.f32.partialorder %v472, %v556
    %vm616 = vcmp.lt.f32.partialorder %v475, %v556
    %vm617 = vcmp.lt.f32.partialorder %v478, %v556
    %vm618 = vcmp.lt.f32.partialorder %v481, %v556
    %vm619 = vcmp.lt.f32.partialorder %v484, %v556
    %vm620 = vcmp.lt.f32.partialorder %v487, %v556
    %vm621 = vmand %vm492, %vm557
    %vm622 = vmand %vm493, %vm558
    %vm623 = vmand %vm494, %vm559
    %vm624 = vmand %vm495, %vm560
    %vm625 = vmand %vm496, %vm561
    %vm626 = vmand %vm497, %vm562
    %vm627 = vmand %vm498, %vm563
    %vm628 = vmand %vm499, %vm564
    %vm629 = vmand %vm500, %vm565
    %vm630 = vmand %vm501, %vm566
    %vm631 = vmand %vm502, %vm567
    %vm632 = vmand %vm503, %vm568
    %vm633 = vmand %vm504, %vm569
    %vm634 = vmand %vm505, %vm570
    %vm635 = vmand %vm506, %vm571
    %vm636 = vmand %vm507, %vm572
    %vm637 = vmand %vm508, %vm573
    %vm638 = vmand %vm509, %vm574
    %vm639 = vmand %vm510, %vm575
    %vm640 = vmand %vm511, %vm576
    %vm641 = vmand %vm512, %vm577
    %vm642 = vmand %vm513, %vm578
    %vm643 = vmand %vm514, %vm579
    %vm644 = vmand %vm515, %vm580
    %vm645 = vmand %vm516, %vm581
    %vm646 = vmand %vm517, %vm582
    %vm647 = vmand %vm518, %vm583
    %vm648 = vmand %vm519, %vm584
    %vm649 = vmand %vm520, %vm585
    %vm650 = vmand %vm521, %vm586
    %vm651 = vmand %vm522, %vm587
    %vm652 = vmand %vm523, %vm588
    %vm653 = vmand %vm524, %vm589
    %vm654 = vmand %vm525, %vm590
    %vm655 = vmand %vm526, %vm591
    %vm656 = vmand %vm527, %vm592
    %vm657 = vmand %vm528, %vm593
    %vm658 = vmand %vm529, %vm594
    %vm659 = vmand %vm530, %vm595
    %vm660 = vmand %vm531, %vm596
    %vm661 = vmand %vm532, %vm597
    %vm662 = vmand %vm533, %vm598
    %vm663 = vmand %vm534, %vm599
    %vm664 = vmand %vm535, %vm600
    %vm665 = vmand %vm536, %vm601
    %vm666 = vmand %vm537, %vm602
    %vm667 = vmand %vm538, %vm603
    %vm668 = vmand %vm539, %vm604
    %vm669 = vmand %vm540, %vm605
    %vm670 = vmand %vm541, %vm606
    %vm671 = vmand %vm542, %vm607
    %vm672 = vmand %vm543, %vm608
    %vm673 = vmand %vm544, %vm609
    %vm674 = vmand %vm545, %vm610
    %vm675 = vmand %vm546, %vm611
    %vm676 = vmand %vm547, %vm612
    %vm677 = vmand %vm548, %vm613
    %vm678 = vmand %vm549, %vm614
    %vm679 = vmand %vm550, %vm615
    %vm680 = vmand %vm551, %vm616
    %vm681 = vmand %vm552, %vm617
    %vm682 = vmand %vm553, %vm618
    %vm683 = vmand %vm554, %vm619
    %vm684 = vmand %vm555, %vm620
    %v685 = vsel %vm621, 1, 0
    %v686 = vsel %vm622, 1, 0
    %v687 = vsel %vm623, 1, 0
    %v688 = vsel %vm624, 1, 0
    %v689 = vsel %vm625, 1, 0
    %v690 = vsel %vm626, 1, 0
    %v691 = vsel %vm627, 1, 0
    %v692 = vsel %vm628, 1, 0
    %v693 = vsel %vm629, 1, 0
    %v694 = vsel %vm630, 1, 0
    %v695 = vsel %vm631, 1, 0
    %v696 = vsel %vm632, 1, 0
    %v697 = vsel %vm633, 1, 0
    %v698 = vsel %vm634, 1, 0
    %v699 = vsel %vm635, 1, 0
    %v700 = vsel %vm636, 1, 0
    %v701 = vsel %vm637, 1, 0
    %v702 = vsel %vm638, 1, 0
    %v703 = vsel %vm639, 1, 0
    %v704 = vsel %vm640, 1, 0
    %v705 = vsel %vm641, 1, 0
    %v706 = vsel %vm642, 1, 0
    %v707 = vsel %vm643, 1, 0
    %v708 = vsel %vm644, 1, 0
    %v709 = vsel %vm645, 1, 0
    %v710 = vsel %vm646, 1, 0
    %v711 = vsel %vm647, 1, 0
    %v712 = vsel %vm648, 1, 0
    %v713 = vsel %vm649, 1, 0
    %v714 = vsel %vm650, 1, 0
    %v715 = vsel %vm651, 1, 0
    %v716 = vsel %vm652, 1, 0
    %v717 = vsel %vm653, 1, 0
    %v718 = vsel %vm654, 1, 0
    %v719 = vsel %vm655, 1, 0
    %v720 = vsel %vm656, 1, 0
    %v721 = vsel %vm657, 1, 0
    %v722 = vsel %vm658, 1, 0
    %v723 = vsel %vm659, 1, 0
    %v724 = vsel %vm660, 1, 0
    %v725 = vsel %vm661, 1, 0
    %v726 = vsel %vm662, 1, 0
    %v727 = vsel %vm663, 1, 0
    %v728 = vsel %vm664, 1, 0
    %v729 = vsel %vm665, 1, 0
    %v730 = vsel %vm666, 1, 0
    %v731 = vsel %vm667, 1, 0
    %v732 = vsel %vm668, 1, 0
    %v733 = vsel %vm669, 1, 0
    %v734 = vsel %vm670, 1, 0
    %v735 = vsel %vm671, 1, 0
    %v736 = vsel %vm672, 1, 0
    %v737 = vsel %vm673, 1, 0
    %v738 = vsel %vm674, 1, 0
    %v739 = vsel %vm675, 1, 0
    %v740 = vsel %vm676, 1, 0
    %v741 = vsel %vm677, 1, 0
    %v742 = vsel %vm678, 1, 0
    %v743 = vsel %vm679, 1, 0
    %v744 = vsel %vm680, 1, 0
    %v745 = vsel %vm681, 1, 0
    %v746 = vsel %vm682, 1, 0
    %v747 = vsel %vm683, 1, 0
    %v748 = vsel %vm684, 1, 0
    %v749 = vcvt.s32.f32 %v685
    %v750 = vcvt.s32.f32 %v686
    %v751 = vcvt.s32.f32 %v687
    %v752 = vcvt.s32.f32 %v688
    %v753 = vcvt.s32.f32 %v689
    %v754 = vcvt.s32.f32 %v690
    %v755 = vcvt.s32.f32 %v691
    %v756 = vcvt.s32.f32 %v692
    %v757 = vcvt.s32.f32 %v693
    %v758 = vcvt.s32.f32 %v694
    %v759 = vcvt.s32.f32 %v695
    %v760 = vcvt.s32.f32 %v696
    %v761 = vcvt.s32.f32 %v697
    %v762 = vcvt.s32.f32 %v698
    %v763 = vcvt.s32.f32 %v699
    %v764 = vcvt.s32.f32 %v700
    %v765 = vcvt.s32.f32 %v701
    %v766 = vcvt.s32.f32 %v702
    %v767 = vcvt.s32.f32 %v703
    %v768 = vcvt.s32.f32 %v704
    %v769 = vcvt.s32.f32 %v705
    %v770 = vcvt.s32.f32 %v706
    %v771 = vcvt.s32.f32 %v707
    %v772 = vcvt.s32.f32 %v708
    %v773 = vcvt.s32.f32 %v709
    %v774 = vcvt.s32.f32 %v710
    %v775 = vcvt.s32.f32 %v711
    %v776 = vcvt.s32.f32 %v712
    %v777 = vcvt.s32.f32 %v713
    %v778 = vcvt.s32.f32 %v714
    %v779 = vcvt.s32.f32 %v715
    %v780 = vcvt.s32.f32 %v716
    %v781 = vcvt.s32.f32 %v717
    %v782 = vcvt.s32.f32 %v718
    %v783 = vcvt.s32.f32 %v719
    %v784 = vcvt.s32.f32 %v720
    %v785 = vcvt.s32.f32 %v721
    %v786 = vcvt.s32.f32 %v722
    %v787 = vcvt.s32.f32 %v723
    %v788 = vcvt.s32.f32 %v724
    %v789 = vcvt.s32.f32 %v725
    %v790 = vcvt.s32.f32 %v726
    %v791 = vcvt.s32.f32 %v727
    %v792 = vcvt.s32.f32 %v728
    %v793 = vcvt.s32.f32 %v729
    %v794 = vcvt.s32.f32 %v730
    %v795 = vcvt.s32.f32 %v731
    %v796 = vcvt.s32.f32 %v732
    %v797 = vcvt.s32.f32 %v733
    %v798 = vcvt.s32.f32 %v734
    %v799 = vcvt.s32.f32 %v735
    %v800 = vcvt.s32.f32 %v736
    %v801 = vcvt.s32.f32 %v737
    %v802 = vcvt.s32.f32 %v738
    %v803 = vcvt.s32.f32 %v739
    %v804 = vcvt.s32.f32 %v740
    %v805 = vcvt.s32.f32 %v741
    %v806 = vcvt.s32.f32 %v742
    %v807 = vcvt.s32.f32 %v743
    %v808 = vcvt.s32.f32 %v744
    %v809 = vcvt.s32.f32 %v745
    %v810 = vcvt.s32.f32 %v746
    %v811 = vcvt.s32.f32 %v747
    %v812 = vcvt.s32.f32 %v748
    %813 = vrot.lane.b32.xlu0 %v749, 127
    %v814 = vpop.permute.xlu0 %813
    %815 = vrot.lane.b32.xlu0 %v750, 127
    %v816 = vpop.permute.xlu0 %815
    %817 = vrot.lane.b32.xlu0 %v751, 127
    %v818 = vpop.permute.xlu0 %817
    %819 = vrot.lane.b32.xlu0 %v752, 127
    %v820 = vpop.permute.xlu0 %819
    %821 = vrot.lane.b32.xlu0 %v753, 127
    %v822 = vpop.permute.xlu0 %821
    %823 = vrot.lane.b32.xlu0 %v754, 127
    %v824 = vpop.permute.xlu0 %823
    %825 = vrot.lane.b32.xlu0 %v755, 127
    %v826 = vpop.permute.xlu0 %825
    %827 = vrot.lane.b32.xlu0 %v756, 127
    %v828 = vpop.permute.xlu0 %827
    %829 = vrot.lane.b32.xlu0 %v757, 127
    %v830 = vpop.permute.xlu0 %829
    %831 = vrot.lane.b32.xlu0 %v758, 127
    %v832 = vpop.permute.xlu0 %831
    %833 = vrot.lane.b32.xlu0 %v759, 127
    %v834 = vpop.permute.xlu0 %833
    %835 = vrot.lane.b32.xlu0 %v760, 127
    %v836 = vpop.permute.xlu0 %835
    %837 = vrot.lane.b32.xlu0 %v761, 127
    %v838 = vpop.permute.xlu0 %837
    %839 = vrot.lane.b32.xlu0 %v762, 127
    %v840 = vpop.permute.xlu0 %839
    %841 = vrot.lane.b32.xlu0 %v763, 127
    %v842 = vpop.permute.xlu0 %841
    %843 = vrot.lane.b32.xlu0 %v764, 127
    %v844 = vpop.permute.xlu0 %843
    %845 = vrot.lane.b32.xlu0 %v765, 127
    %v846 = vpop.permute.xlu0 %845
    %847 = vrot.lane.b32.xlu0 %v766, 127
    %v848 = vpop.permute.xlu0 %847
    %849 = vrot.lane.b32.xlu0 %v767, 127
    %v850 = vpop.permute.xlu0 %849
    %851 = vrot.lane.b32.xlu0 %v768, 127
    %v852 = vpop.permute.xlu0 %851
    %853 = vrot.lane.b32.xlu0 %v769, 127
    %v854 = vpop.permute.xlu0 %853
    %855 = vrot.lane.b32.xlu0 %v770, 127
    %v856 = vpop.permute.xlu0 %855
    %857 = vrot.lane.b32.xlu0 %v771, 127
    %v858 = vpop.permute.xlu0 %857
    %859 = vrot.lane.b32.xlu0 %v772, 127
    %v860 = vpop.permute.xlu0 %859
    %861 = vrot.lane.b32.xlu0 %v773, 127
    %v862 = vpop.permute.xlu0 %861
    %863 = vrot.lane.b32.xlu0 %v774, 127
    %v864 = vpop.permute.xlu0 %863
    %865 = vrot.lane.b32.xlu0 %v775, 127
    %v866 = vpop.permute.xlu0 %865
    %867 = vrot.lane.b32.xlu0 %v776, 127
    %v868 = vpop.permute.xlu0 %867
    %869 = vrot.lane.b32.xlu0 %v777, 127
    %v870 = vpop.permute.xlu0 %869
    %871 = vrot.lane.b32.xlu0 %v778, 127
    %v872 = vpop.permute.xlu0 %871
    %873 = vrot.lane.b32.xlu0 %v779, 127
    %v874 = vpop.permute.xlu0 %873
    %875 = vrot.lane.b32.xlu0 %v780, 127
    %v876 = vpop.permute.xlu0 %875
    %877 = vrot.lane.b32.xlu0 %v781, 127
    %v878 = vpop.permute.xlu0 %877
    %879 = vrot.lane.b32.xlu0 %v782, 127
    %v880 = vpop.permute.xlu0 %879
    %881 = vrot.lane.b32.xlu0 %v783, 127
    %v882 = vpop.permute.xlu0 %881
    %883 = vrot.lane.b32.xlu0 %v784, 127
    %v884 = vpop.permute.xlu0 %883
    %885 = vrot.lane.b32.xlu0 %v785, 127
    %v886 = vpop.permute.xlu0 %885
    %887 = vrot.lane.b32.xlu0 %v786, 127
    %v888 = vpop.permute.xlu0 %887
    %889 = vrot.lane.b32.xlu0 %v787, 127
    %v890 = vpop.permute.xlu0 %889
    %891 = vrot.lane.b32.xlu0 %v788, 127
    %v892 = vpop.permute.xlu0 %891
    %893 = vrot.lane.b32.xlu0 %v789, 127
    %v894 = vpop.permute.xlu0 %893
    %895 = vrot.lane.b32.xlu0 %v790, 127
    %v896 = vpop.permute.xlu0 %895
    %897 = vrot.lane.b32.xlu0 %v791, 127
    %v898 = vpop.permute.xlu0 %897
    %899 = vrot.lane.b32.xlu0 %v792, 127
    %v900 = vpop.permute.xlu0 %899
    %901 = vrot.lane.b32.xlu0 %v793, 127
    %v902 = vpop.permute.xlu0 %901
    %903 = vrot.lane.b32.xlu0 %v794, 127
    %v904 = vpop.permute.xlu0 %903
    %905 = vrot.lane.b32.xlu0 %v795, 127
    %v906 = vpop.permute.xlu0 %905
    %907 = vrot.lane.b32.xlu0 %v796, 127
    %v908 = vpop.permute.xlu0 %907
    %909 = vrot.lane.b32.xlu0 %v797, 127
    %v910 = vpop.permute.xlu0 %909
    %911 = vrot.lane.b32.xlu0 %v798, 127
    %v912 = vpop.permute.xlu0 %911
    %913 = vrot.lane.b32.xlu0 %v799, 127
    %v914 = vpop.permute.xlu0 %913
    %915 = vrot.lane.b32.xlu0 %v800, 127
    %v916 = vpop.permute.xlu0 %915
    %917 = vrot.lane.b32.xlu0 %v801, 127
    %v918 = vpop.permute.xlu0 %917
    %919 = vrot.lane.b32.xlu0 %v802, 127
    %v920 = vpop.permute.xlu0 %919
    %921 = vrot.lane.b32.xlu0 %v803, 127
    %v922 = vpop.permute.xlu0 %921
    %923 = vrot.lane.b32.xlu0 %v804, 127
    %v924 = vpop.permute.xlu0 %923
    %925 = vrot.lane.b32.xlu0 %v805, 127
    %v926 = vpop.permute.xlu0 %925
    %927 = vrot.lane.b32.xlu0 %v806, 127
    %v928 = vpop.permute.xlu0 %927
    %929 = vrot.lane.b32.xlu0 %v807, 127
    %v930 = vpop.permute.xlu0 %929
    %931 = vrot.lane.b32.xlu0 %v808, 127
    %v932 = vpop.permute.xlu0 %931
    %933 = vrot.lane.b32.xlu0 %v809, 127
    %v934 = vpop.permute.xlu0 %933
    %935 = vrot.lane.b32.xlu0 %v810, 127
    %v936 = vpop.permute.xlu0 %935
    %937 = vrot.lane.b32.xlu0 %v811, 127
    %v938 = vpop.permute.xlu0 %937
    %939 = vrot.lane.b32.xlu0 %v812, 127
    %v940 = vpop.permute.xlu0 %939
    %v941 = vperm.slane %v489, 2
    %v942 = vmul.f32 %v298, %v941
    %v943 = vmul.f32 %v301, %v941
    %v944 = vmul.f32 %v304, %v941
    %v945 = vmul.f32 %v307, %v941
    %v946 = vmul.f32 %v310, %v941
    %v947 = vmul.f32 %v313, %v941
    %v948 = vmul.f32 %v316, %v941
    %v949 = vmul.f32 %v319, %v941
    %v950 = vmul.f32 %v322, %v941
    %v951 = vmul.f32 %v325, %v941
    %v952 = vmul.f32 %v328, %v941
    %v953 = vmul.f32 %v331, %v941
    %v954 = vmul.f32 %v334, %v941
    %v955 = vmul.f32 %v337, %v941
    %v956 = vmul.f32 %v340, %v941
    %v957 = vmul.f32 %v343, %v941
    %v958 = vmul.f32 %v346, %v941
    %v959 = vmul.f32 %v349, %v941
    %v960 = vmul.f32 %v352, %v941
    %v961 = vmul.f32 %v355, %v941
    %v962 = vmul.f32 %v358, %v941
    %v963 = vmul.f32 %v361, %v941
    %v964 = vmul.f32 %v364, %v941
    %v965 = vmul.f32 %v367, %v941
    %v966 = vmul.f32 %v370, %v941
    %v967 = vmul.f32 %v373, %v941
    %v968 = vmul.f32 %v376, %v941
    %v969 = vmul.f32 %v379, %v941
    %v970 = vmul.f32 %v382, %v941
    %v971 = vmul.f32 %v385, %v941
    %v972 = vmul.f32 %v388, %v941
    %v973 = vmul.f32 %v391, %v941
    %v974 = vmul.f32 %v394, %v941
    %v975 = vmul.f32 %v397, %v941
    %v976 = vmul.f32 %v400, %v941
    %v977 = vmul.f32 %v403, %v941
    %v978 = vmul.f32 %v406, %v941
    %v979 = vmul.f32 %v409, %v941
    %v980 = vmul.f32 %v412, %v941
    %v981 = vmul.f32 %v415, %v941
    %v982 = vmul.f32 %v418, %v941
    %v983 = vmul.f32 %v421, %v941
    %v984 = vmul.f32 %v424, %v941
    %v985 = vmul.f32 %v427, %v941
    %v986 = vmul.f32 %v430, %v941
    %v987 = vmul.f32 %v433, %v941
    %v988 = vmul.f32 %v436, %v941
    %v989 = vmul.f32 %v439, %v941
    %v990 = vmul.f32 %v442, %v941
    %v991 = vmul.f32 %v445, %v941
    %v992 = vmul.f32 %v448, %v941
    %v993 = vmul.f32 %v451, %v941
    %v994 = vmul.f32 %v454, %v941
    %v995 = vmul.f32 %v457, %v941
    %v996 = vmul.f32 %v460, %v941
    %v997 = vmul.f32 %v463, %v941
    %v998 = vmul.f32 %v466, %v941
    %v999 = vmul.f32 %v469, %v941
    %v1000 = vmul.f32 %v472, %v941
    %v1001 = vmul.f32 %v475, %v941
    %v1002 = vmul.f32 %v478, %v941
    %v1003 = vmul.f32 %v481, %v941
    %v1004 = vmul.f32 %v484, %v941
    %v1005 = vmul.f32 %v487, %v941
    %v1006 = vperm.slane %v489, 3
    %v1007 = vadd.f32 %v942, %v1006
    %v1008 = vadd.f32 %v943, %v1006
    %v1009 = vadd.f32 %v944, %v1006
    %v1010 = vadd.f32 %v945, %v1006
    %v1011 = vadd.f32 %v946, %v1006
    %v1012 = vadd.f32 %v947, %v1006
    %v1013 = vadd.f32 %v948, %v1006
    %v1014 = vadd.f32 %v949, %v1006
    %v1015 = vadd.f32 %v950, %v1006
    %v1016 = vadd.f32 %v951, %v1006
    %v1017 = vadd.f32 %v952, %v1006
    %v1018 = vadd.f32 %v953, %v1006
    %v1019 = vadd.f32 %v954, %v1006
    %v1020 = vadd.f32 %v955, %v1006
    %v1021 = vadd.f32 %v956, %v1006
    %v1022 = vadd.f32 %v957, %v1006
    %v1023 = vadd.f32 %v958, %v1006
    %v1024 = vadd.f32 %v959, %v1006
    %v1025 = vadd.f32 %v960, %v1006
    %v1026 = vadd.f32 %v961, %v1006
    %v1027 = vadd.f32 %v962, %v1006
    %v1028 = vadd.f32 %v963, %v1006
    %v1029 = vadd.f32 %v964, %v1006
    %v1030 = vadd.f32 %v965, %v1006
    %v1031 = vadd.f32 %v966, %v1006
    %v1032 = vadd.f32 %v967, %v1006
    %v1033 = vadd.f32 %v968, %v1006
    %v1034 = vadd.f32 %v969, %v1006
    %v1035 = vadd.f32 %v970, %v1006
    %v1036 = vadd.f32 %v971, %v1006
    %v1037 = vadd.f32 %v972, %v1006
    %v1038 = vadd.f32 %v973, %v1006
    %v1039 = vadd.f32 %v974, %v1006
    %v1040 = vadd.f32 %v975, %v1006
    %v1041 = vadd.f32 %v976, %v1006
    %v1042 = vadd.f32 %v977, %v1006
    %v1043 = vadd.f32 %v978, %v1006
    %v1044 = vadd.f32 %v979, %v1006
    %v1045 = vadd.f32 %v980, %v1006
    %v1046 = vadd.f32 %v981, %v1006
    %v1047 = vadd.f32 %v982, %v1006
    %v1048 = vadd.f32 %v983, %v1006
    %v1049 = vadd.f32 %v984, %v1006
    %v1050 = vadd.f32 %v985, %v1006
    %v1051 = vadd.f32 %v986, %v1006
    %v1052 = vadd.f32 %v987, %v1006
    %v1053 = vadd.f32 %v988, %v1006
    %v1054 = vadd.f32 %v989, %v1006
    %v1055 = vadd.f32 %v990, %v1006
    %v1056 = vadd.f32 %v991, %v1006
    %v1057 = vadd.f32 %v992, %v1006
    %v1058 = vadd.f32 %v993, %v1006
    %v1059 = vadd.f32 %v994, %v1006
    %v1060 = vadd.f32 %v995, %v1006
    %v1061 = vadd.f32 %v996, %v1006
    %v1062 = vadd.f32 %v997, %v1006
    %v1063 = vadd.f32 %v998, %v1006
    %v1064 = vadd.f32 %v999, %v1006
    %v1065 = vadd.f32 %v1000, %v1006
    %v1066 = vadd.f32 %v1001, %v1006
    %v1067 = vadd.f32 %v1002, %v1006
    %v1068 = vadd.f32 %v1003, %v1006
    %v1069 = vadd.f32 %v1004, %v1006
    %v1070 = vadd.f32 %v1005, %v1006
    %v1071 = vmul.f32 %v1007, %v749
    %v1072 = vmul.f32 %v1008, %v750
    %v1073 = vmul.f32 %v1009, %v751
    %v1074 = vmul.f32 %v1010, %v752
    %v1075 = vmul.f32 %v1011, %v753
    %v1076 = vmul.f32 %v1012, %v754
    %v1077 = vmul.f32 %v1013, %v755
    %v1078 = vmul.f32 %v1014, %v756
    %v1079 = vmul.f32 %v1015, %v757
    %v1080 = vmul.f32 %v1016, %v758
    %v1081 = vmul.f32 %v1017, %v759
    %v1082 = vmul.f32 %v1018, %v760
    %v1083 = vmul.f32 %v1019, %v761
    %v1084 = vmul.f32 %v1020, %v762
    %v1085 = vmul.f32 %v1021, %v763
    %v1086 = vmul.f32 %v1022, %v764
    %v1087 = vmul.f32 %v1023, %v765
    %v1088 = vmul.f32 %v1024, %v766
    %v1089 = vmul.f32 %v1025, %v767
    %v1090 = vmul.f32 %v1026, %v768
    %v1091 = vmul.f32 %v1027, %v769
    %v1092 = vmul.f32 %v1028, %v770
    %v1093 = vmul.f32 %v1029, %v771
    %v1094 = vmul.f32 %v1030, %v772
    %v1095 = vmul.f32 %v1031, %v773
    %v1096 = vmul.f32 %v1032, %v774
    %v1097 = vmul.f32 %v1033, %v775
    %v1098 = vmul.f32 %v1034, %v776
    %v1099 = vmul.f32 %v1035, %v777
    %v1100 = vmul.f32 %v1036, %v778
    %v1101 = vmul.f32 %v1037, %v779
    %v1102 = vmul.f32 %v1038, %v780
    %v1103 = vmul.f32 %v1039, %v781
    %v1104 = vmul.f32 %v1040, %v782
    %v1105 = vmul.f32 %v1041, %v783
    %v1106 = vmul.f32 %v1042, %v784
    %v1107 = vmul.f32 %v1043, %v785
    %v1108 = vmul.f32 %v1044, %v786
    %v1109 = vmul.f32 %v1045, %v787
    %v1110 = vmul.f32 %v1046, %v788
    %v1111 = vmul.f32 %v1047, %v789
    %v1112 = vmul.f32 %v1048, %v790
    %v1113 = vmul.f32 %v1049, %v791
    %v1114 = vmul.f32 %v1050, %v792
    %v1115 = vmul.f32 %v1051, %v793
    %v1116 = vmul.f32 %v1052, %v794
    %v1117 = vmul.f32 %v1053, %v795
    %v1118 = vmul.f32 %v1054, %v796
    %v1119 = vmul.f32 %v1055, %v797
    %v1120 = vmul.f32 %v1056, %v798
    %v1121 = vmul.f32 %v1057, %v799
    %v1122 = vmul.f32 %v1058, %v800
    %v1123 = vmul.f32 %v1059, %v801
    %v1124 = vmul.f32 %v1060, %v802
    %v1125 = vmul.f32 %v1061, %v803
    %v1126 = vmul.f32 %v1062, %v804
    %v1127 = vmul.f32 %v1063, %v805
    %v1128 = vmul.f32 %v1064, %v806
    %v1129 = vmul.f32 %v1065, %v807
    %v1130 = vmul.f32 %v1066, %v808
    %v1131 = vmul.f32 %v1067, %v809
    %v1132 = vmul.f32 %v1068, %v810
    %v1133 = vmul.f32 %v1069, %v811
    %v1134 = vmul.f32 %v1070, %v812
    %v1135 = vperm.slane %v489, 4
    %v1136 = vmul.f32 %v298, %v1135
    %v1137 = vmul.f32 %v301, %v1135
    %v1138 = vmul.f32 %v304, %v1135
    %v1139 = vmul.f32 %v307, %v1135
    %v1140 = vmul.f32 %v310, %v1135
    %v1141 = vmul.f32 %v313, %v1135
    %v1142 = vmul.f32 %v316, %v1135
    %v1143 = vmul.f32 %v319, %v1135
    %v1144 = vmul.f32 %v322, %v1135
    %v1145 = vmul.f32 %v325, %v1135
    %v1146 = vmul.f32 %v328, %v1135
    %v1147 = vmul.f32 %v331, %v1135
    %v1148 = vmul.f32 %v334, %v1135
    %v1149 = vmul.f32 %v337, %v1135
    %v1150 = vmul.f32 %v340, %v1135
    %v1151 = vmul.f32 %v343, %v1135
    %v1152 = vmul.f32 %v346, %v1135
    %v1153 = vmul.f32 %v349, %v1135
    %v1154 = vmul.f32 %v352, %v1135
    %v1155 = vmul.f32 %v355, %v1135
    %v1156 = vmul.f32 %v358, %v1135
    %v1157 = vmul.f32 %v361, %v1135
    %v1158 = vmul.f32 %v364, %v1135
    %v1159 = vmul.f32 %v367, %v1135
    %v1160 = vmul.f32 %v370, %v1135
    %v1161 = vmul.f32 %v373, %v1135
    %v1162 = vmul.f32 %v376, %v1135
    %v1163 = vmul.f32 %v379, %v1135
    %v1164 = vmul.f32 %v382, %v1135
    %v1165 = vmul.f32 %v385, %v1135
    %v1166 = vmul.f32 %v388, %v1135
    %v1167 = vmul.f32 %v391, %v1135
    %v1168 = vmul.f32 %v394, %v1135
    %v1169 = vmul.f32 %v397, %v1135
    %v1170 = vmul.f32 %v400, %v1135
    %v1171 = vmul.f32 %v403, %v1135
    %v1172 = vmul.f32 %v406, %v1135
    %v1173 = vmul.f32 %v409, %v1135
    %v1174 = vmul.f32 %v412, %v1135
    %v1175 = vmul.f32 %v415, %v1135
    %v1176 = vmul.f32 %v418, %v1135
    %v1177 = vmul.f32 %v421, %v1135
    %v1178 = vmul.f32 %v424, %v1135
    %v1179 = vmul.f32 %v427, %v1135
    %v1180 = vmul.f32 %v430, %v1135
    %v1181 = vmul.f32 %v433, %v1135
    %v1182 = vmul.f32 %v436, %v1135
    %v1183 = vmul.f32 %v439, %v1135
    %v1184 = vmul.f32 %v442, %v1135
    %v1185 = vmul.f32 %v445, %v1135
    %v1186 = vmul.f32 %v448, %v1135
    %v1187 = vmul.f32 %v451, %v1135
    %v1188 = vmul.f32 %v454, %v1135
    %v1189 = vmul.f32 %v457, %v1135
    %v1190 = vmul.f32 %v460, %v1135
    %v1191 = vmul.f32 %v463, %v1135
    %v1192 = vmul.f32 %v466, %v1135
    %v1193 = vmul.f32 %v469, %v1135
    %v1194 = vmul.f32 %v472, %v1135
    %v1195 = vmul.f32 %v475, %v1135
    %v1196 = vmul.f32 %v478, %v1135
    %v1197 = vmul.f32 %v481, %v1135
    %v1198 = vmul.f32 %v484, %v1135
    %v1199 = vmul.f32 %v487, %v1135
    %v1200 = vperm.slane %v489, 5
    %v1201 = vadd.f32 %v1136, %v1200
    %v1202 = vadd.f32 %v1137, %v1200
    %v1203 = vadd.f32 %v1138, %v1200
    %v1204 = vadd.f32 %v1139, %v1200
    %v1205 = vadd.f32 %v1140, %v1200
    %v1206 = vadd.f32 %v1141, %v1200
    %v1207 = vadd.f32 %v1142, %v1200
    %v1208 = vadd.f32 %v1143, %v1200
    %v1209 = vadd.f32 %v1144, %v1200
    %v1210 = vadd.f32 %v1145, %v1200
    %v1211 = vadd.f32 %v1146, %v1200
    %v1212 = vadd.f32 %v1147, %v1200
    %v1213 = vadd.f32 %v1148, %v1200
    %v1214 = vadd.f32 %v1149, %v1200
    %v1215 = vadd.f32 %v1150, %v1200
    %v1216 = vadd.f32 %v1151, %v1200
    %v1217 = vadd.f32 %v1152, %v1200
    %v1218 = vadd.f32 %v1153, %v1200
    %v1219 = vadd.f32 %v1154, %v1200
    %v1220 = vadd.f32 %v1155, %v1200
    %v1221 = vadd.f32 %v1156, %v1200
    %v1222 = vadd.f32 %v1157, %v1200
    %v1223 = vadd.f32 %v1158, %v1200
    %v1224 = vadd.f32 %v1159, %v1200
    %v1225 = vadd.f32 %v1160, %v1200
    %v1226 = vadd.f32 %v1161, %v1200
    %v1227 = vadd.f32 %v1162, %v1200
    %v1228 = vadd.f32 %v1163, %v1200
    %v1229 = vadd.f32 %v1164, %v1200
    %v1230 = vadd.f32 %v1165, %v1200
    %v1231 = vadd.f32 %v1166, %v1200
    %v1232 = vadd.f32 %v1167, %v1200
    %v1233 = vadd.f32 %v1168, %v1200
    %v1234 = vadd.f32 %v1169, %v1200
    %v1235 = vadd.f32 %v1170, %v1200
    %v1236 = vadd.f32 %v1171, %v1200
    %v1237 = vadd.f32 %v1172, %v1200
    %v1238 = vadd.f32 %v1173, %v1200
    %v1239 = vadd.f32 %v1174, %v1200
    %v1240 = vadd.f32 %v1175, %v1200
    %v1241 = vadd.f32 %v1176, %v1200
    %v1242 = vadd.f32 %v1177, %v1200
    %v1243 = vadd.f32 %v1178, %v1200
    %v1244 = vadd.f32 %v1179, %v1200
    %v1245 = vadd.f32 %v1180, %v1200
    %v1246 = vadd.f32 %v1181, %v1200
    %v1247 = vadd.f32 %v1182, %v1200
    %v1248 = vadd.f32 %v1183, %v1200
    %v1249 = vadd.f32 %v1184, %v1200
    %v1250 = vadd.f32 %v1185, %v1200
    %v1251 = vadd.f32 %v1186, %v1200
    %v1252 = vadd.f32 %v1187, %v1200
    %v1253 = vadd.f32 %v1188, %v1200
    %v1254 = vadd.f32 %v1189, %v1200
    %v1255 = vadd.f32 %v1190, %v1200
    %v1256 = vadd.f32 %v1191, %v1200
    %v1257 = vadd.f32 %v1192, %v1200
    %v1258 = vadd.f32 %v1193, %v1200
    %v1259 = vadd.f32 %v1194, %v1200
    %v1260 = vadd.f32 %v1195, %v1200
    %v1261 = vadd.f32 %v1196, %v1200
    %v1262 = vadd.f32 %v1197, %v1200
    %v1263 = vadd.f32 %v1198, %v1200
    %v1264 = vadd.f32 %v1199, %v1200
    %v1265 = vmul.f32 %v1201, %v814
    %v1266 = vmul.f32 %v1202, %v816
    %v1267 = vmul.f32 %v1203, %v818
    %v1268 = vmul.f32 %v1204, %v820
    %v1269 = vmul.f32 %v1205, %v822
    %v1270 = vmul.f32 %v1206, %v824
    %v1271 = vmul.f32 %v1207, %v826
    %v1272 = vmul.f32 %v1208, %v828
    %v1273 = vmul.f32 %v1209, %v830
    %v1274 = vmul.f32 %v1210, %v832
    %v1275 = vmul.f32 %v1211, %v834
    %v1276 = vmul.f32 %v1212, %v836
    %v1277 = vmul.f32 %v1213, %v838
    %v1278 = vmul.f32 %v1214, %v840
    %v1279 = vmul.f32 %v1215, %v842
    %v1280 = vmul.f32 %v1216, %v844
    %v1281 = vmul.f32 %v1217, %v846
    %v1282 = vmul.f32 %v1218, %v848
    %v1283 = vmul.f32 %v1219, %v850
    %v1284 = vmul.f32 %v1220, %v852
    %v1285 = vmul.f32 %v1221, %v854
    %v1286 = vmul.f32 %v1222, %v856
    %v1287 = vmul.f32 %v1223, %v858
    %v1288 = vmul.f32 %v1224, %v860
    %v1289 = vmul.f32 %v1225, %v862
    %v1290 = vmul.f32 %v1226, %v864
    %v1291 = vmul.f32 %v1227, %v866
    %v1292 = vmul.f32 %v1228, %v868
    %v1293 = vmul.f32 %v1229, %v870
    %v1294 = vmul.f32 %v1230, %v872
    %v1295 = vmul.f32 %v1231, %v874
    %v1296 = vmul.f32 %v1232, %v876
    %v1297 = vmul.f32 %v1233, %v878
    %v1298 = vmul.f32 %v1234, %v880
    %v1299 = vmul.f32 %v1235, %v882
    %v1300 = vmul.f32 %v1236, %v884
    %v1301 = vmul.f32 %v1237, %v886
    %v1302 = vmul.f32 %v1238, %v888
    %v1303 = vmul.f32 %v1239, %v890
    %v1304 = vmul.f32 %v1240, %v892
    %v1305 = vmul.f32 %v1241, %v894
    %v1306 = vmul.f32 %v1242, %v896
    %v1307 = vmul.f32 %v1243, %v898
    %v1308 = vmul.f32 %v1244, %v900
    %v1309 = vmul.f32 %v1245, %v902
    %v1310 = vmul.f32 %v1246, %v904
    %v1311 = vmul.f32 %v1247, %v906
    %v1312 = vmul.f32 %v1248, %v908
    %v1313 = vmul.f32 %v1249, %v910
    %v1314 = vmul.f32 %v1250, %v912
    %v1315 = vmul.f32 %v1251, %v914
    %v1316 = vmul.f32 %v1252, %v916
    %v1317 = vmul.f32 %v1253, %v918
    %v1318 = vmul.f32 %v1254, %v920
    %v1319 = vmul.f32 %v1255, %v922
    %v1320 = vmul.f32 %v1256, %v924
    %v1321 = vmul.f32 %v1257, %v926
    %v1322 = vmul.f32 %v1258, %v928
    %v1323 = vmul.f32 %v1259, %v930
    %v1324 = vmul.f32 %v1260, %v932
    %v1325 = vmul.f32 %v1261, %v934
    %v1326 = vmul.f32 %v1262, %v936
    %v1327 = vmul.f32 %v1263, %v938
    %v1328 = vmul.f32 %v1264, %v940
    %v1329 = vadd.f32 %v1071, %v1265
    %v1330 = vadd.f32 %v1072, %v1266
    %v1331 = vadd.f32 %v1073, %v1267
    %v1332 = vadd.f32 %v1074, %v1268
    %v1333 = vadd.f32 %v1075, %v1269
    %v1334 = vadd.f32 %v1076, %v1270
    %v1335 = vadd.f32 %v1077, %v1271
    %v1336 = vadd.f32 %v1078, %v1272
    %v1337 = vadd.f32 %v1079, %v1273
    %v1338 = vadd.f32 %v1080, %v1274
    %v1339 = vadd.f32 %v1081, %v1275
    %v1340 = vadd.f32 %v1082, %v1276
    %v1341 = vadd.f32 %v1083, %v1277
    %v1342 = vadd.f32 %v1084, %v1278
    %v1343 = vadd.f32 %v1085, %v1279
    %v1344 = vadd.f32 %v1086, %v1280
    %v1345 = vadd.f32 %v1087, %v1281
    %v1346 = vadd.f32 %v1088, %v1282
    %v1347 = vadd.f32 %v1089, %v1283
    %v1348 = vadd.f32 %v1090, %v1284
    %v1349 = vadd.f32 %v1091, %v1285
    %v1350 = vadd.f32 %v1092, %v1286
    %v1351 = vadd.f32 %v1093, %v1287
    %v1352 = vadd.f32 %v1094, %v1288
    %v1353 = vadd.f32 %v1095, %v1289
    %v1354 = vadd.f32 %v1096, %v1290
    %v1355 = vadd.f32 %v1097, %v1291
    %v1356 = vadd.f32 %v1098, %v1292
    %v1357 = vadd.f32 %v1099, %v1293
    %v1358 = vadd.f32 %v1100, %v1294
    %v1359 = vadd.f32 %v1101, %v1295
    %v1360 = vadd.f32 %v1102, %v1296
    %v1361 = vadd.f32 %v1103, %v1297
    %v1362 = vadd.f32 %v1104, %v1298
    %v1363 = vadd.f32 %v1105, %v1299
    %v1364 = vadd.f32 %v1106, %v1300
    %v1365 = vadd.f32 %v1107, %v1301
    %v1366 = vadd.f32 %v1108, %v1302
    %v1367 = vadd.f32 %v1109, %v1303
    %v1368 = vadd.f32 %v1110, %v1304
    %v1369 = vadd.f32 %v1111, %v1305
    %v1370 = vadd.f32 %v1112, %v1306
    %v1371 = vadd.f32 %v1113, %v1307
    %v1372 = vadd.f32 %v1114, %v1308
    %v1373 = vadd.f32 %v1115, %v1309
    %v1374 = vadd.f32 %v1116, %v1310
    %v1375 = vadd.f32 %v1117, %v1311
    %v1376 = vadd.f32 %v1118, %v1312
    %v1377 = vadd.f32 %v1119, %v1313
    %v1378 = vadd.f32 %v1120, %v1314
    %v1379 = vadd.f32 %v1121, %v1315
    %v1380 = vadd.f32 %v1122, %v1316
    %v1381 = vadd.f32 %v1123, %v1317
    %v1382 = vadd.f32 %v1124, %v1318
    %v1383 = vadd.f32 %v1125, %v1319
    %v1384 = vadd.f32 %v1126, %v1320
    %v1385 = vadd.f32 %v1127, %v1321
    %v1386 = vadd.f32 %v1128, %v1322
    %v1387 = vadd.f32 %v1129, %v1323
    %v1388 = vadd.f32 %v1130, %v1324
    %v1389 = vadd.f32 %v1131, %v1325
    %v1390 = vadd.f32 %v1132, %v1326
    %v1391 = vadd.f32 %v1133, %v1327
    %v1392 = vadd.f32 %v1134, %v1328
    %1393 = vrot.lane.b32.xlu0 %v1329, 127
    %v1394 = vpop.permute.xlu0 %1393
    %1395 = vrot.lane.b32.xlu0 %v1330, 127
    %v1396 = vpop.permute.xlu0 %1395
    %1397 = vrot.lane.b32.xlu0 %v1331, 127
    %v1398 = vpop.permute.xlu0 %1397
    %1399 = vrot.lane.b32.xlu0 %v1332, 127
    %v1400 = vpop.permute.xlu0 %1399
    %1401 = vrot.lane.b32.xlu0 %v1333, 127
    %v1402 = vpop.permute.xlu0 %1401
    %1403 = vrot.lane.b32.xlu0 %v1334, 127
    %v1404 = vpop.permute.xlu0 %1403
    %1405 = vrot.lane.b32.xlu0 %v1335, 127
    %v1406 = vpop.permute.xlu0 %1405
    %1407 = vrot.lane.b32.xlu0 %v1336, 127
    %v1408 = vpop.permute.xlu0 %1407
    %1409 = vrot.lane.b32.xlu0 %v1337, 127
    %v1410 = vpop.permute.xlu0 %1409
    %1411 = vrot.lane.b32.xlu0 %v1338, 127
    %v1412 = vpop.permute.xlu0 %1411
    %1413 = vrot.lane.b32.xlu0 %v1339, 127
    %v1414 = vpop.permute.xlu0 %1413
    %1415 = vrot.lane.b32.xlu0 %v1340, 127
    %v1416 = vpop.permute.xlu0 %1415
    %1417 = vrot.lane.b32.xlu0 %v1341, 127
    %v1418 = vpop.permute.xlu0 %1417
    %1419 = vrot.lane.b32.xlu0 %v1342, 127
    %v1420 = vpop.permute.xlu0 %1419
    %1421 = vrot.lane.b32.xlu0 %v1343, 127
    %v1422 = vpop.permute.xlu0 %1421
    %1423 = vrot.lane.b32.xlu0 %v1344, 127
    %v1424 = vpop.permute.xlu0 %1423
    %1425 = vrot.lane.b32.xlu0 %v1345, 127
    %v1426 = vpop.permute.xlu0 %1425
    %1427 = vrot.lane.b32.xlu0 %v1346, 127
    %v1428 = vpop.permute.xlu0 %1427
    %1429 = vrot.lane.b32.xlu0 %v1347, 127
    %v1430 = vpop.permute.xlu0 %1429
    %1431 = vrot.lane.b32.xlu0 %v1348, 127
    %v1432 = vpop.permute.xlu0 %1431
    %1433 = vrot.lane.b32.xlu0 %v1349, 127
    %v1434 = vpop.permute.xlu0 %1433
    %1435 = vrot.lane.b32.xlu0 %v1350, 127
    %v1436 = vpop.permute.xlu0 %1435
    %1437 = vrot.lane.b32.xlu0 %v1351, 127
    %v1438 = vpop.permute.xlu0 %1437
    %1439 = vrot.lane.b32.xlu0 %v1352, 127
    %v1440 = vpop.permute.xlu0 %1439
    %1441 = vrot.lane.b32.xlu0 %v1353, 127
    %v1442 = vpop.permute.xlu0 %1441
    %1443 = vrot.lane.b32.xlu0 %v1354, 127
    %v1444 = vpop.permute.xlu0 %1443
    %1445 = vrot.lane.b32.xlu0 %v1355, 127
    %v1446 = vpop.permute.xlu0 %1445
    %1447 = vrot.lane.b32.xlu0 %v1356, 127
    %v1448 = vpop.permute.xlu0 %1447
    %1449 = vrot.lane.b32.xlu0 %v1357, 127
    %v1450 = vpop.permute.xlu0 %1449
    %1451 = vrot.lane.b32.xlu0 %v1358, 127
    %v1452 = vpop.permute.xlu0 %1451
    %1453 = vrot.lane.b32.xlu0 %v1359, 127
    %v1454 = vpop.permute.xlu0 %1453
    %1455 = vrot.lane.b32.xlu0 %v1360, 127
    %v1456 = vpop.permute.xlu0 %1455
    %1457 = vrot.lane.b32.xlu0 %v1361, 127
    %v1458 = vpop.permute.xlu0 %1457
    %1459 = vrot.lane.b32.xlu0 %v1362, 127
    %v1460 = vpop.permute.xlu0 %1459
    %1461 = vrot.lane.b32.xlu0 %v1363, 127
    %v1462 = vpop.permute.xlu0 %1461
    %1463 = vrot.lane.b32.xlu0 %v1364, 127
    %v1464 = vpop.permute.xlu0 %1463
    %1465 = vrot.lane.b32.xlu0 %v1365, 127
    %v1466 = vpop.permute.xlu0 %1465
    %1467 = vrot.lane.b32.xlu0 %v1366, 127
    %v1468 = vpop.permute.xlu0 %1467
    %1469 = vrot.lane.b32.xlu0 %v1367, 127
    %v1470 = vpop.permute.xlu0 %1469
    %1471 = vrot.lane.b32.xlu0 %v1368, 127
    %v1472 = vpop.permute.xlu0 %1471
    %1473 = vrot.lane.b32.xlu0 %v1369, 127
    %v1474 = vpop.permute.xlu0 %1473
    %1475 = vrot.lane.b32.xlu0 %v1370, 127
    %v1476 = vpop.permute.xlu0 %1475
    %1477 = vrot.lane.b32.xlu0 %v1371, 127
    %v1478 = vpop.permute.xlu0 %1477
    %1479 = vrot.lane.b32.xlu0 %v1372, 127
    %v1480 = vpop.permute.xlu0 %1479
    %1481 = vrot.lane.b32.xlu0 %v1373, 127
    %v1482 = vpop.permute.xlu0 %1481
    %1483 = vrot.lane.b32.xlu0 %v1374, 127
    %v1484 = vpop.permute.xlu0 %1483
    %1485 = vrot.lane.b32.xlu0 %v1375, 127
    %v1486 = vpop.permute.xlu0 %1485
    %1487 = vrot.lane.b32.xlu0 %v1376, 127
    %v1488 = vpop.permute.xlu0 %1487
    %1489 = vrot.lane.b32.xlu0 %v1377, 127
    %v1490 = vpop.permute.xlu0 %1489
    %1491 = vrot.lane.b32.xlu0 %v1378, 127
    %v1492 = vpop.permute.xlu0 %1491
    %1493 = vrot.lane.b32.xlu0 %v1379, 127
    %v1494 = vpop.permute.xlu0 %1493
    %1495 = vrot.lane.b32.xlu0 %v1380, 127
    %v1496 = vpop.permute.xlu0 %1495
    %1497 = vrot.lane.b32.xlu0 %v1381, 127
    %v1498 = vpop.permute.xlu0 %1497
    %1499 = vrot.lane.b32.xlu0 %v1382, 127
    %v1500 = vpop.permute.xlu0 %1499
    %1501 = vrot.lane.b32.xlu0 %v1383, 127
    %v1502 = vpop.permute.xlu0 %1501
    %1503 = vrot.lane.b32.xlu0 %v1384, 127
    %v1504 = vpop.permute.xlu0 %1503
    %1505 = vrot.lane.b32.xlu0 %v1385, 127
    %v1506 = vpop.permute.xlu0 %1505
    %1507 = vrot.lane.b32.xlu0 %v1386, 127
    %v1508 = vpop.permute.xlu0 %1507
    %1509 = vrot.lane.b32.xlu0 %v1387, 127
    %v1510 = vpop.permute.xlu0 %1509
    %1511 = vrot.lane.b32.xlu0 %v1388, 127
    %v1512 = vpop.permute.xlu0 %1511
    %1513 = vrot.lane.b32.xlu0 %v1389, 127
    %v1514 = vpop.permute.xlu0 %1513
    %1515 = vrot.lane.b32.xlu0 %v1390, 127
    %v1516 = vpop.permute.xlu0 %1515
    %1517 = vrot.lane.b32.xlu0 %v1391, 127
    %v1518 = vpop.permute.xlu0 %1517
    %1519 = vrot.lane.b32.xlu0 %v1392, 127
    %v1520 = vpop.permute.xlu0 %1519
    %v1521 = vperm.slane %v489, 6
    %v1522 = vmul.f32 %v298, %v1521
    %v1523 = vmul.f32 %v301, %v1521
    %v1524 = vmul.f32 %v304, %v1521
    %v1525 = vmul.f32 %v307, %v1521
    %v1526 = vmul.f32 %v310, %v1521
    %v1527 = vmul.f32 %v313, %v1521
    %v1528 = vmul.f32 %v316, %v1521
    %v1529 = vmul.f32 %v319, %v1521
    %v1530 = vmul.f32 %v322, %v1521
    %v1531 = vmul.f32 %v325, %v1521
    %v1532 = vmul.f32 %v328, %v1521
    %v1533 = vmul.f32 %v331, %v1521
    %v1534 = vmul.f32 %v334, %v1521
    %v1535 = vmul.f32 %v337, %v1521
    %v1536 = vmul.f32 %v340, %v1521
    %v1537 = vmul.f32 %v343, %v1521
    %v1538 = vmul.f32 %v346, %v1521
    %v1539 = vmul.f32 %v349, %v1521
    %v1540 = vmul.f32 %v352, %v1521
    %v1541 = vmul.f32 %v355, %v1521
    %v1542 = vmul.f32 %v358, %v1521
    %v1543 = vmul.f32 %v361, %v1521
    %v1544 = vmul.f32 %v364, %v1521
    %v1545 = vmul.f32 %v367, %v1521
    %v1546 = vmul.f32 %v370, %v1521
    %v1547 = vmul.f32 %v373, %v1521
    %v1548 = vmul.f32 %v376, %v1521
    %v1549 = vmul.f32 %v379, %v1521
    %v1550 = vmul.f32 %v382, %v1521
    %v1551 = vmul.f32 %v385, %v1521
    %v1552 = vmul.f32 %v388, %v1521
    %v1553 = vmul.f32 %v391, %v1521
    %v1554 = vmul.f32 %v394, %v1521
    %v1555 = vmul.f32 %v397, %v1521
    %v1556 = vmul.f32 %v400, %v1521
    %v1557 = vmul.f32 %v403, %v1521
    %v1558 = vmul.f32 %v406, %v1521
    %v1559 = vmul.f32 %v409, %v1521
    %v1560 = vmul.f32 %v412, %v1521
    %v1561 = vmul.f32 %v415, %v1521
    %v1562 = vmul.f32 %v418, %v1521
    %v1563 = vmul.f32 %v421, %v1521
    %v1564 = vmul.f32 %v424, %v1521
    %v1565 = vmul.f32 %v427, %v1521
    %v1566 = vmul.f32 %v430, %v1521
    %v1567 = vmul.f32 %v433, %v1521
    %v1568 = vmul.f32 %v436, %v1521
    %v1569 = vmul.f32 %v439, %v1521
    %v1570 = vmul.f32 %v442, %v1521
    %v1571 = vmul.f32 %v445, %v1521
    %v1572 = vmul.f32 %v448, %v1521
    %v1573 = vmul.f32 %v451, %v1521
    %v1574 = vmul.f32 %v454, %v1521
    %v1575 = vmul.f32 %v457, %v1521
    %v1576 = vmul.f32 %v460, %v1521
    %v1577 = vmul.f32 %v463, %v1521
    %v1578 = vmul.f32 %v466, %v1521
    %v1579 = vmul.f32 %v469, %v1521
    %v1580 = vmul.f32 %v472, %v1521
    %v1581 = vmul.f32 %v475, %v1521
    %v1582 = vmul.f32 %v478, %v1521
    %v1583 = vmul.f32 %v481, %v1521
    %v1584 = vmul.f32 %v484, %v1521
    %v1585 = vmul.f32 %v487, %v1521
    %v1586 = vperm.slane %v489, 7
    %v1587 = vadd.f32 %v1522, %v1586
    %v1588 = vadd.f32 %v1523, %v1586
    %v1589 = vadd.f32 %v1524, %v1586
    %v1590 = vadd.f32 %v1525, %v1586
    %v1591 = vadd.f32 %v1526, %v1586
    %v1592 = vadd.f32 %v1527, %v1586
    %v1593 = vadd.f32 %v1528, %v1586
    %v1594 = vadd.f32 %v1529, %v1586
    %v1595 = vadd.f32 %v1530, %v1586
    %v1596 = vadd.f32 %v1531, %v1586
    %v1597 = vadd.f32 %v1532, %v1586
    %v1598 = vadd.f32 %v1533, %v1586
    %v1599 = vadd.f32 %v1534, %v1586
    %v1600 = vadd.f32 %v1535, %v1586
    %v1601 = vadd.f32 %v1536, %v1586
    %v1602 = vadd.f32 %v1537, %v1586
    %v1603 = vadd.f32 %v1538, %v1586
    %v1604 = vadd.f32 %v1539, %v1586
    %v1605 = vadd.f32 %v1540, %v1586
    %v1606 = vadd.f32 %v1541, %v1586
    %v1607 = vadd.f32 %v1542, %v1586
    %v1608 = vadd.f32 %v1543, %v1586
    %v1609 = vadd.f32 %v1544, %v1586
    %v1610 = vadd.f32 %v1545, %v1586
    %v1611 = vadd.f32 %v1546, %v1586
    %v1612 = vadd.f32 %v1547, %v1586
    %v1613 = vadd.f32 %v1548, %v1586
    %v1614 = vadd.f32 %v1549, %v1586
    %v1615 = vadd.f32 %v1550, %v1586
    %v1616 = vadd.f32 %v1551, %v1586
    %v1617 = vadd.f32 %v1552, %v1586
    %v1618 = vadd.f32 %v1553, %v1586
    %v1619 = vadd.f32 %v1554, %v1586
    %v1620 = vadd.f32 %v1555, %v1586
    %v1621 = vadd.f32 %v1556, %v1586
    %v1622 = vadd.f32 %v1557, %v1586
    %v1623 = vadd.f32 %v1558, %v1586
    %v1624 = vadd.f32 %v1559, %v1586
    %v1625 = vadd.f32 %v1560, %v1586
    %v1626 = vadd.f32 %v1561, %v1586
    %v1627 = vadd.f32 %v1562, %v1586
    %v1628 = vadd.f32 %v1563, %v1586
    %v1629 = vadd.f32 %v1564, %v1586
    %v1630 = vadd.f32 %v1565, %v1586
    %v1631 = vadd.f32 %v1566, %v1586
    %v1632 = vadd.f32 %v1567, %v1586
    %v1633 = vadd.f32 %v1568, %v1586
    %v1634 = vadd.f32 %v1569, %v1586
    %v1635 = vadd.f32 %v1570, %v1586
    %v1636 = vadd.f32 %v1571, %v1586
    %v1637 = vadd.f32 %v1572, %v1586
    %v1638 = vadd.f32 %v1573, %v1586
    %v1639 = vadd.f32 %v1574, %v1586
    %v1640 = vadd.f32 %v1575, %v1586
    %v1641 = vadd.f32 %v1576, %v1586
    %v1642 = vadd.f32 %v1577, %v1586
    %v1643 = vadd.f32 %v1578, %v1586
    %v1644 = vadd.f32 %v1579, %v1586
    %v1645 = vadd.f32 %v1580, %v1586
    %v1646 = vadd.f32 %v1581, %v1586
    %v1647 = vadd.f32 %v1582, %v1586
    %v1648 = vadd.f32 %v1583, %v1586
    %v1649 = vadd.f32 %v1584, %v1586
    %v1650 = vadd.f32 %v1585, %v1586
    %v1651 = vmul.f32 %v1587, %v1329
    %v1652 = vmul.f32 %v1588, %v1330
    %v1653 = vmul.f32 %v1589, %v1331
    %v1654 = vmul.f32 %v1590, %v1332
    %v1655 = vmul.f32 %v1591, %v1333
    %v1656 = vmul.f32 %v1592, %v1334
    %v1657 = vmul.f32 %v1593, %v1335
    %v1658 = vmul.f32 %v1594, %v1336
    %v1659 = vmul.f32 %v1595, %v1337
    %v1660 = vmul.f32 %v1596, %v1338
    %v1661 = vmul.f32 %v1597, %v1339
    %v1662 = vmul.f32 %v1598, %v1340
    %v1663 = vmul.f32 %v1599, %v1341
    %v1664 = vmul.f32 %v1600, %v1342
    %v1665 = vmul.f32 %v1601, %v1343
    %v1666 = vmul.f32 %v1602, %v1344
    %v1667 = vmul.f32 %v1603, %v1345
    %v1668 = vmul.f32 %v1604, %v1346
    %v1669 = vmul.f32 %v1605, %v1347
    %v1670 = vmul.f32 %v1606, %v1348
    %v1671 = vmul.f32 %v1607, %v1349
    %v1672 = vmul.f32 %v1608, %v1350
    %v1673 = vmul.f32 %v1609, %v1351
    %v1674 = vmul.f32 %v1610, %v1352
    %v1675 = vmul.f32 %v1611, %v1353
    %v1676 = vmul.f32 %v1612, %v1354
    %v1677 = vmul.f32 %v1613, %v1355
    %v1678 = vmul.f32 %v1614, %v1356
    %v1679 = vmul.f32 %v1615, %v1357
    %v1680 = vmul.f32 %v1616, %v1358
    %v1681 = vmul.f32 %v1617, %v1359
    %v1682 = vmul.f32 %v1618, %v1360
    %v1683 = vmul.f32 %v1619, %v1361
    %v1684 = vmul.f32 %v1620, %v1362
    %v1685 = vmul.f32 %v1621, %v1363
    %v1686 = vmul.f32 %v1622, %v1364
    %v1687 = vmul.f32 %v1623, %v1365
    %v1688 = vmul.f32 %v1624, %v1366
    %v1689 = vmul.f32 %v1625, %v1367
    %v1690 = vmul.f32 %v1626, %v1368
    %v1691 = vmul.f32 %v1627, %v1369
    %v1692 = vmul.f32 %v1628, %v1370
    %v1693 = vmul.f32 %v1629, %v1371
    %v1694 = vmul.f32 %v1630, %v1372
    %v1695 = vmul.f32 %v1631, %v1373
    %v1696 = vmul.f32 %v1632, %v1374
    %v1697 = vmul.f32 %v1633, %v1375
    %v1698 = vmul.f32 %v1634, %v1376
    %v1699 = vmul.f32 %v1635, %v1377
    %v1700 = vmul.f32 %v1636, %v1378
    %v1701 = vmul.f32 %v1637, %v1379
    %v1702 = vmul.f32 %v1638, %v1380
    %v1703 = vmul.f32 %v1639, %v1381
    %v1704 = vmul.f32 %v1640, %v1382
    %v1705 = vmul.f32 %v1641, %v1383
    %v1706 = vmul.f32 %v1642, %v1384
    %v1707 = vmul.f32 %v1643, %v1385
    %v1708 = vmul.f32 %v1644, %v1386
    %v1709 = vmul.f32 %v1645, %v1387
    %v1710 = vmul.f32 %v1646, %v1388
    %v1711 = vmul.f32 %v1647, %v1389
    %v1712 = vmul.f32 %v1648, %v1390
    %v1713 = vmul.f32 %v1649, %v1391
    %v1714 = vmul.f32 %v1650, %v1392
    %v1715 = vperm.slane %v490, 0
    %v1716 = vmul.f32 %v298, %v1715
    %v1717 = vmul.f32 %v301, %v1715
    %v1718 = vmul.f32 %v304, %v1715
    %v1719 = vmul.f32 %v307, %v1715
    %v1720 = vmul.f32 %v310, %v1715
    %v1721 = vmul.f32 %v313, %v1715
    %v1722 = vmul.f32 %v316, %v1715
    %v1723 = vmul.f32 %v319, %v1715
    %v1724 = vmul.f32 %v322, %v1715
    %v1725 = vmul.f32 %v325, %v1715
    %v1726 = vmul.f32 %v328, %v1715
    %v1727 = vmul.f32 %v331, %v1715
    %v1728 = vmul.f32 %v334, %v1715
    %v1729 = vmul.f32 %v337, %v1715
    %v1730 = vmul.f32 %v340, %v1715
    %v1731 = vmul.f32 %v343, %v1715
    %v1732 = vmul.f32 %v346, %v1715
    %v1733 = vmul.f32 %v349, %v1715
    %v1734 = vmul.f32 %v352, %v1715
    %v1735 = vmul.f32 %v355, %v1715
    %v1736 = vmul.f32 %v358, %v1715
    %v1737 = vmul.f32 %v361, %v1715
    %v1738 = vmul.f32 %v364, %v1715
    %v1739 = vmul.f32 %v367, %v1715
    %v1740 = vmul.f32 %v370, %v1715
    %v1741 = vmul.f32 %v373, %v1715
    %v1742 = vmul.f32 %v376, %v1715
    %v1743 = vmul.f32 %v379, %v1715
    %v1744 = vmul.f32 %v382, %v1715
    %v1745 = vmul.f32 %v385, %v1715
    %v1746 = vmul.f32 %v388, %v1715
    %v1747 = vmul.f32 %v391, %v1715
    %v1748 = vmul.f32 %v394, %v1715
    %v1749 = vmul.f32 %v397, %v1715
    %v1750 = vmul.f32 %v400, %v1715
    %v1751 = vmul.f32 %v403, %v1715
    %v1752 = vmul.f32 %v406, %v1715
    %v1753 = vmul.f32 %v409, %v1715
    %v1754 = vmul.f32 %v412, %v1715
    %v1755 = vmul.f32 %v415, %v1715
    %v1756 = vmul.f32 %v418, %v1715
    %v1757 = vmul.f32 %v421, %v1715
    %v1758 = vmul.f32 %v424, %v1715
    %v1759 = vmul.f32 %v427, %v1715
    %v1760 = vmul.f32 %v430, %v1715
    %v1761 = vmul.f32 %v433, %v1715
    %v1762 = vmul.f32 %v436, %v1715
    %v1763 = vmul.f32 %v439, %v1715
    %v1764 = vmul.f32 %v442, %v1715
    %v1765 = vmul.f32 %v445, %v1715
    %v1766 = vmul.f32 %v448, %v1715
    %v1767 = vmul.f32 %v451, %v1715
    %v1768 = vmul.f32 %v454, %v1715
    %v1769 = vmul.f32 %v457, %v1715
    %v1770 = vmul.f32 %v460, %v1715
    %v1771 = vmul.f32 %v463, %v1715
    %v1772 = vmul.f32 %v466, %v1715
    %v1773 = vmul.f32 %v469, %v1715
    %v1774 = vmul.f32 %v472, %v1715
    %v1775 = vmul.f32 %v475, %v1715
    %v1776 = vmul.f32 %v478, %v1715
    %v1777 = vmul.f32 %v481, %v1715
    %v1778 = vmul.f32 %v484, %v1715
    %v1779 = vmul.f32 %v487, %v1715
    %v1780 = vperm.slane %v490, 1
    %v1781 = vadd.f32 %v1716, %v1780
    %v1782 = vadd.f32 %v1717, %v1780
    %v1783 = vadd.f32 %v1718, %v1780
    %v1784 = vadd.f32 %v1719, %v1780
    %v1785 = vadd.f32 %v1720, %v1780
    %v1786 = vadd.f32 %v1721, %v1780
    %v1787 = vadd.f32 %v1722, %v1780
    %v1788 = vadd.f32 %v1723, %v1780
    %v1789 = vadd.f32 %v1724, %v1780
    %v1790 = vadd.f32 %v1725, %v1780
    %v1791 = vadd.f32 %v1726, %v1780
    %v1792 = vadd.f32 %v1727, %v1780
    %v1793 = vadd.f32 %v1728, %v1780
    %v1794 = vadd.f32 %v1729, %v1780
    %v1795 = vadd.f32 %v1730, %v1780
    %v1796 = vadd.f32 %v1731, %v1780
    %v1797 = vadd.f32 %v1732, %v1780
    %v1798 = vadd.f32 %v1733, %v1780
    %v1799 = vadd.f32 %v1734, %v1780
    %v1800 = vadd.f32 %v1735, %v1780
    %v1801 = vadd.f32 %v1736, %v1780
    %v1802 = vadd.f32 %v1737, %v1780
    %v1803 = vadd.f32 %v1738, %v1780
    %v1804 = vadd.f32 %v1739, %v1780
    %v1805 = vadd.f32 %v1740, %v1780
    %v1806 = vadd.f32 %v1741, %v1780
    %v1807 = vadd.f32 %v1742, %v1780
    %v1808 = vadd.f32 %v1743, %v1780
    %v1809 = vadd.f32 %v1744, %v1780
    %v1810 = vadd.f32 %v1745, %v1780
    %v1811 = vadd.f32 %v1746, %v1780
    %v1812 = vadd.f32 %v1747, %v1780
    %v1813 = vadd.f32 %v1748, %v1780
    %v1814 = vadd.f32 %v1749, %v1780
    %v1815 = vadd.f32 %v1750, %v1780
    %v1816 = vadd.f32 %v1751, %v1780
    %v1817 = vadd.f32 %v1752, %v1780
    %v1818 = vadd.f32 %v1753, %v1780
    %v1819 = vadd.f32 %v1754, %v1780
    %v1820 = vadd.f32 %v1755, %v1780
    %v1821 = vadd.f32 %v1756, %v1780
    %v1822 = vadd.f32 %v1757, %v1780
    %v1823 = vadd.f32 %v1758, %v1780
    %v1824 = vadd.f32 %v1759, %v1780
    %v1825 = vadd.f32 %v1760, %v1780
    %v1826 = vadd.f32 %v1761, %v1780
    %v1827 = vadd.f32 %v1762, %v1780
    %v1828 = vadd.f32 %v1763, %v1780
    %v1829 = vadd.f32 %v1764, %v1780
    %v1830 = vadd.f32 %v1765, %v1780
    %v1831 = vadd.f32 %v1766, %v1780
    %v1832 = vadd.f32 %v1767, %v1780
    %v1833 = vadd.f32 %v1768, %v1780
    %v1834 = vadd.f32 %v1769, %v1780
    %v1835 = vadd.f32 %v1770, %v1780
    %v1836 = vadd.f32 %v1771, %v1780
    %v1837 = vadd.f32 %v1772, %v1780
    %v1838 = vadd.f32 %v1773, %v1780
    %v1839 = vadd.f32 %v1774, %v1780
    %v1840 = vadd.f32 %v1775, %v1780
    %v1841 = vadd.f32 %v1776, %v1780
    %v1842 = vadd.f32 %v1777, %v1780
    %v1843 = vadd.f32 %v1778, %v1780
    %v1844 = vadd.f32 %v1779, %v1780
    %v1845 = vmul.f32 %v1781, %v1394
    %v1846 = vmul.f32 %v1782, %v1396
    %v1847 = vmul.f32 %v1783, %v1398
    %v1848 = vmul.f32 %v1784, %v1400
    %v1849 = vmul.f32 %v1785, %v1402
    %v1850 = vmul.f32 %v1786, %v1404
    %v1851 = vmul.f32 %v1787, %v1406
    %v1852 = vmul.f32 %v1788, %v1408
    %v1853 = vmul.f32 %v1789, %v1410
    %v1854 = vmul.f32 %v1790, %v1412
    %v1855 = vmul.f32 %v1791, %v1414
    %v1856 = vmul.f32 %v1792, %v1416
    %v1857 = vmul.f32 %v1793, %v1418
    %v1858 = vmul.f32 %v1794, %v1420
    %v1859 = vmul.f32 %v1795, %v1422
    %v1860 = vmul.f32 %v1796, %v1424
    %v1861 = vmul.f32 %v1797, %v1426
    %v1862 = vmul.f32 %v1798, %v1428
    %v1863 = vmul.f32 %v1799, %v1430
    %v1864 = vmul.f32 %v1800, %v1432
    %v1865 = vmul.f32 %v1801, %v1434
    %v1866 = vmul.f32 %v1802, %v1436
    %v1867 = vmul.f32 %v1803, %v1438
    %v1868 = vmul.f32 %v1804, %v1440
    %v1869 = vmul.f32 %v1805, %v1442
    %v1870 = vmul.f32 %v1806, %v1444
    %v1871 = vmul.f32 %v1807, %v1446
    %v1872 = vmul.f32 %v1808, %v1448
    %v1873 = vmul.f32 %v1809, %v1450
    %v1874 = vmul.f32 %v1810, %v1452
    %v1875 = vmul.f32 %v1811, %v1454
    %v1876 = vmul.f32 %v1812, %v1456
    %v1877 = vmul.f32 %v1813, %v1458
    %v1878 = vmul.f32 %v1814, %v1460
    %v1879 = vmul.f32 %v1815, %v1462
    %v1880 = vmul.f32 %v1816, %v1464
    %v1881 = vmul.f32 %v1817, %v1466
    %v1882 = vmul.f32 %v1818, %v1468
    %v1883 = vmul.f32 %v1819, %v1470
    %v1884 = vmul.f32 %v1820, %v1472
    %v1885 = vmul.f32 %v1821, %v1474
    %v1886 = vmul.f32 %v1822, %v1476
    %v1887 = vmul.f32 %v1823, %v1478
    %v1888 = vmul.f32 %v1824, %v1480
    %v1889 = vmul.f32 %v1825, %v1482
    %v1890 = vmul.f32 %v1826, %v1484
    %v1891 = vmul.f32 %v1827, %v1486
    %v1892 = vmul.f32 %v1828, %v1488
    %v1893 = vmul.f32 %v1829, %v1490
    %v1894 = vmul.f32 %v1830, %v1492
    %v1895 = vmul.f32 %v1831, %v1494
    %v1896 = vmul.f32 %v1832, %v1496
    %v1897 = vmul.f32 %v1833, %v1498
    %v1898 = vmul.f32 %v1834, %v1500
    %v1899 = vmul.f32 %v1835, %v1502
    %v1900 = vmul.f32 %v1836, %v1504
    %v1901 = vmul.f32 %v1837, %v1506
    %v1902 = vmul.f32 %v1838, %v1508
    %v1903 = vmul.f32 %v1839, %v1510
    %v1904 = vmul.f32 %v1840, %v1512
    %v1905 = vmul.f32 %v1841, %v1514
    %v1906 = vmul.f32 %v1842, %v1516
    %v1907 = vmul.f32 %v1843, %v1518
    %v1908 = vmul.f32 %v1844, %v1520
    %v1909 = vadd.f32 %v1651, %v1845
    %v1910 = vadd.f32 %v1652, %v1846
    %v1911 = vadd.f32 %v1653, %v1847
    %v1912 = vadd.f32 %v1654, %v1848
    %v1913 = vadd.f32 %v1655, %v1849
    %v1914 = vadd.f32 %v1656, %v1850
    %v1915 = vadd.f32 %v1657, %v1851
    %v1916 = vadd.f32 %v1658, %v1852
    %v1917 = vadd.f32 %v1659, %v1853
    %v1918 = vadd.f32 %v1660, %v1854
    %v1919 = vadd.f32 %v1661, %v1855
    %v1920 = vadd.f32 %v1662, %v1856
    %v1921 = vadd.f32 %v1663, %v1857
    %v1922 = vadd.f32 %v1664, %v1858
    %v1923 = vadd.f32 %v1665, %v1859
    %v1924 = vadd.f32 %v1666, %v1860
    %v1925 = vadd.f32 %v1667, %v1861
    %v1926 = vadd.f32 %v1668, %v1862
    %v1927 = vadd.f32 %v1669, %v1863
    %v1928 = vadd.f32 %v1670, %v1864
    %v1929 = vadd.f32 %v1671, %v1865
    %v1930 = vadd.f32 %v1672, %v1866
    %v1931 = vadd.f32 %v1673, %v1867
    %v1932 = vadd.f32 %v1674, %v1868
    %v1933 = vadd.f32 %v1675, %v1869
    %v1934 = vadd.f32 %v1676, %v1870
    %v1935 = vadd.f32 %v1677, %v1871
    %v1936 = vadd.f32 %v1678, %v1872
    %v1937 = vadd.f32 %v1679, %v1873
    %v1938 = vadd.f32 %v1680, %v1874
    %v1939 = vadd.f32 %v1681, %v1875
    %v1940 = vadd.f32 %v1682, %v1876
    %v1941 = vadd.f32 %v1683, %v1877
    %v1942 = vadd.f32 %v1684, %v1878
    %v1943 = vadd.f32 %v1685, %v1879
    %v1944 = vadd.f32 %v1686, %v1880
    %v1945 = vadd.f32 %v1687, %v1881
    %v1946 = vadd.f32 %v1688, %v1882
    %v1947 = vadd.f32 %v1689, %v1883
    %v1948 = vadd.f32 %v1690, %v1884
    %v1949 = vadd.f32 %v1691, %v1885
    %v1950 = vadd.f32 %v1692, %v1886
    %v1951 = vadd.f32 %v1693, %v1887
    %v1952 = vadd.f32 %v1694, %v1888
    %v1953 = vadd.f32 %v1695, %v1889
    %v1954 = vadd.f32 %v1696, %v1890
    %v1955 = vadd.f32 %v1697, %v1891
    %v1956 = vadd.f32 %v1698, %v1892
    %v1957 = vadd.f32 %v1699, %v1893
    %v1958 = vadd.f32 %v1700, %v1894
    %v1959 = vadd.f32 %v1701, %v1895
    %v1960 = vadd.f32 %v1702, %v1896
    %v1961 = vadd.f32 %v1703, %v1897
    %v1962 = vadd.f32 %v1704, %v1898
    %v1963 = vadd.f32 %v1705, %v1899
    %v1964 = vadd.f32 %v1706, %v1900
    %v1965 = vadd.f32 %v1707, %v1901
    %v1966 = vadd.f32 %v1708, %v1902
    %v1967 = vadd.f32 %v1709, %v1903
    %v1968 = vadd.f32 %v1710, %v1904
    %v1969 = vadd.f32 %v1711, %v1905
    %v1970 = vadd.f32 %v1712, %v1906
    %v1971 = vadd.f32 %v1713, %v1907
    %v1972 = vadd.f32 %v1714, %v1908
    %1973 = vrot.lane.b32.xlu0 %v1909, 127
    %v1974 = vpop.permute.xlu0 %1973
    %1975 = vrot.lane.b32.xlu0 %v1910, 127
    %v1976 = vpop.permute.xlu0 %1975
    %1977 = vrot.lane.b32.xlu0 %v1911, 127
    %v1978 = vpop.permute.xlu0 %1977
    %1979 = vrot.lane.b32.xlu0 %v1912, 127
    %v1980 = vpop.permute.xlu0 %1979
    %1981 = vrot.lane.b32.xlu0 %v1913, 127
    %v1982 = vpop.permute.xlu0 %1981
    %1983 = vrot.lane.b32.xlu0 %v1914, 127
    %v1984 = vpop.permute.xlu0 %1983
    %1985 = vrot.lane.b32.xlu0 %v1915, 127
    %v1986 = vpop.permute.xlu0 %1985
    %1987 = vrot.lane.b32.xlu0 %v1916, 127
    %v1988 = vpop.permute.xlu0 %1987
    %1989 = vrot.lane.b32.xlu0 %v1917, 127
    %v1990 = vpop.permute.xlu0 %1989
    %1991 = vrot.lane.b32.xlu0 %v1918, 127
    %v1992 = vpop.permute.xlu0 %1991
    %1993 = vrot.lane.b32.xlu0 %v1919, 127
    %v1994 = vpop.permute.xlu0 %1993
    %1995 = vrot.lane.b32.xlu0 %v1920, 127
    %v1996 = vpop.permute.xlu0 %1995
    %1997 = vrot.lane.b32.xlu0 %v1921, 127
    %v1998 = vpop.permute.xlu0 %1997
    %1999 = vrot.lane.b32.xlu0 %v1922, 127
    %v2000 = vpop.permute.xlu0 %1999
    %2001 = vrot.lane.b32.xlu0 %v1923, 127
    %v2002 = vpop.permute.xlu0 %2001
    %2003 = vrot.lane.b32.xlu0 %v1924, 127
    %v2004 = vpop.permute.xlu0 %2003
    %2005 = vrot.lane.b32.xlu0 %v1925, 127
    %v2006 = vpop.permute.xlu0 %2005
    %2007 = vrot.lane.b32.xlu0 %v1926, 127
    %v2008 = vpop.permute.xlu0 %2007
    %2009 = vrot.lane.b32.xlu0 %v1927, 127
    %v2010 = vpop.permute.xlu0 %2009
    %2011 = vrot.lane.b32.xlu0 %v1928, 127
    %v2012 = vpop.permute.xlu0 %2011
    %2013 = vrot.lane.b32.xlu0 %v1929, 127
    %v2014 = vpop.permute.xlu0 %2013
    %2015 = vrot.lane.b32.xlu0 %v1930, 127
    %v2016 = vpop.permute.xlu0 %2015
    %2017 = vrot.lane.b32.xlu0 %v1931, 127
    %v2018 = vpop.permute.xlu0 %2017
    %2019 = vrot.lane.b32.xlu0 %v1932, 127
    %v2020 = vpop.permute.xlu0 %2019
    %2021 = vrot.lane.b32.xlu0 %v1933, 127
    %v2022 = vpop.permute.xlu0 %2021
    %2023 = vrot.lane.b32.xlu0 %v1934, 127
    %v2024 = vpop.permute.xlu0 %2023
    %2025 = vrot.lane.b32.xlu0 %v1935, 127
    %v2026 = vpop.permute.xlu0 %2025
    %2027 = vrot.lane.b32.xlu0 %v1936, 127
    %v2028 = vpop.permute.xlu0 %2027
    %2029 = vrot.lane.b32.xlu0 %v1937, 127
    %v2030 = vpop.permute.xlu0 %2029
    %2031 = vrot.lane.b32.xlu0 %v1938, 127
    %v2032 = vpop.permute.xlu0 %2031
    %2033 = vrot.lane.b32.xlu0 %v1939, 127
    %v2034 = vpop.permute.xlu0 %2033
    %2035 = vrot.lane.b32.xlu0 %v1940, 127
    %v2036 = vpop.permute.xlu0 %2035
    %2037 = vrot.lane.b32.xlu0 %v1941, 127
    %v2038 = vpop.permute.xlu0 %2037
    %2039 = vrot.lane.b32.xlu0 %v1942, 127
    %v2040 = vpop.permute.xlu0 %2039
    %2041 = vrot.lane.b32.xlu0 %v1943, 127
    %v2042 = vpop.permute.xlu0 %2041
    %2043 = vrot.lane.b32.xlu0 %v1944, 127
    %v2044 = vpop.permute.xlu0 %2043
    %2045 = vrot.lane.b32.xlu0 %v1945, 127
    %v2046 = vpop.permute.xlu0 %2045
    %2047 = vrot.lane.b32.xlu0 %v1946, 127
    %v2048 = vpop.permute.xlu0 %2047
    %2049 = vrot.lane.b32.xlu0 %v1947, 127
    %v2050 = vpop.permute.xlu0 %2049
    %2051 = vrot.lane.b32.xlu0 %v1948, 127
    %v2052 = vpop.permute.xlu0 %2051
    %2053 = vrot.lane.b32.xlu0 %v1949, 127
    %v2054 = vpop.permute.xlu0 %2053
    %2055 = vrot.lane.b32.xlu0 %v1950, 127
    %v2056 = vpop.permute.xlu0 %2055
    %2057 = vrot.lane.b32.xlu0 %v1951, 127
    %v2058 = vpop.permute.xlu0 %2057
    %2059 = vrot.lane.b32.xlu0 %v1952, 127
    %v2060 = vpop.permute.xlu0 %2059
    %2061 = vrot.lane.b32.xlu0 %v1953, 127
    %v2062 = vpop.permute.xlu0 %2061
    %2063 = vrot.lane.b32.xlu0 %v1954, 127
    %v2064 = vpop.permute.xlu0 %2063
    %2065 = vrot.lane.b32.xlu0 %v1955, 127
    %v2066 = vpop.permute.xlu0 %2065
    %2067 = vrot.lane.b32.xlu0 %v1956, 127
    %v2068 = vpop.permute.xlu0 %2067
    %2069 = vrot.lane.b32.xlu0 %v1957, 127
    %v2070 = vpop.permute.xlu0 %2069
    %2071 = vrot.lane.b32.xlu0 %v1958, 127
    %v2072 = vpop.permute.xlu0 %2071
    %2073 = vrot.lane.b32.xlu0 %v1959, 127
    %v2074 = vpop.permute.xlu0 %2073
    %2075 = vrot.lane.b32.xlu0 %v1960, 127
    %v2076 = vpop.permute.xlu0 %2075
    %2077 = vrot.lane.b32.xlu0 %v1961, 127
    %v2078 = vpop.permute.xlu0 %2077
    %2079 = vrot.lane.b32.xlu0 %v1962, 127
    %v2080 = vpop.permute.xlu0 %2079
    %2081 = vrot.lane.b32.xlu0 %v1963, 127
    %v2082 = vpop.permute.xlu0 %2081
    %2083 = vrot.lane.b32.xlu0 %v1964, 127
    %v2084 = vpop.permute.xlu0 %2083
    %2085 = vrot.lane.b32.xlu0 %v1965, 127
    %v2086 = vpop.permute.xlu0 %2085
    %2087 = vrot.lane.b32.xlu0 %v1966, 127
    %v2088 = vpop.permute.xlu0 %2087
    %2089 = vrot.lane.b32.xlu0 %v1967, 127
    %v2090 = vpop.permute.xlu0 %2089
    %2091 = vrot.lane.b32.xlu0 %v1968, 127
    %v2092 = vpop.permute.xlu0 %2091
    %2093 = vrot.lane.b32.xlu0 %v1969, 127
    %v2094 = vpop.permute.xlu0 %2093
    %2095 = vrot.lane.b32.xlu0 %v1970, 127
    %v2096 = vpop.permute.xlu0 %2095
    %2097 = vrot.lane.b32.xlu0 %v1971, 127
    %v2098 = vpop.permute.xlu0 %2097
    %2099 = vrot.lane.b32.xlu0 %v1972, 127
    %v2100 = vpop.permute.xlu0 %2099
    %v2101 = vperm.slane %v490, 2
    %v2102 = vmul.f32 %v298, %v2101
    %v2103 = vmul.f32 %v301, %v2101
    %v2104 = vmul.f32 %v304, %v2101
    %v2105 = vmul.f32 %v307, %v2101
    %v2106 = vmul.f32 %v310, %v2101
    %v2107 = vmul.f32 %v313, %v2101
    %v2108 = vmul.f32 %v316, %v2101
    %v2109 = vmul.f32 %v319, %v2101
    %v2110 = vmul.f32 %v322, %v2101
    %v2111 = vmul.f32 %v325, %v2101
    %v2112 = vmul.f32 %v328, %v2101
    %v2113 = vmul.f32 %v331, %v2101
    %v2114 = vmul.f32 %v334, %v2101
    %v2115 = vmul.f32 %v337, %v2101
    %v2116 = vmul.f32 %v340, %v2101
    %v2117 = vmul.f32 %v343, %v2101
    %v2118 = vmul.f32 %v346, %v2101
    %v2119 = vmul.f32 %v349, %v2101
    %v2120 = vmul.f32 %v352, %v2101
    %v2121 = vmul.f32 %v355, %v2101
    %v2122 = vmul.f32 %v358, %v2101
    %v2123 = vmul.f32 %v361, %v2101
    %v2124 = vmul.f32 %v364, %v2101
    %v2125 = vmul.f32 %v367, %v2101
    %v2126 = vmul.f32 %v370, %v2101
    %v2127 = vmul.f32 %v373, %v2101
    %v2128 = vmul.f32 %v376, %v2101
    %v2129 = vmul.f32 %v379, %v2101
    %v2130 = vmul.f32 %v382, %v2101
    %v2131 = vmul.f32 %v385, %v2101
    %v2132 = vmul.f32 %v388, %v2101
    %v2133 = vmul.f32 %v391, %v2101
    %v2134 = vmul.f32 %v394, %v2101
    %v2135 = vmul.f32 %v397, %v2101
    %v2136 = vmul.f32 %v400, %v2101
    %v2137 = vmul.f32 %v403, %v2101
    %v2138 = vmul.f32 %v406, %v2101
    %v2139 = vmul.f32 %v409, %v2101
    %v2140 = vmul.f32 %v412, %v2101
    %v2141 = vmul.f32 %v415, %v2101
    %v2142 = vmul.f32 %v418, %v2101
    %v2143 = vmul.f32 %v421, %v2101
    %v2144 = vmul.f32 %v424, %v2101
    %v2145 = vmul.f32 %v427, %v2101
    %v2146 = vmul.f32 %v430, %v2101
    %v2147 = vmul.f32 %v433, %v2101
    %v2148 = vmul.f32 %v436, %v2101
    %v2149 = vmul.f32 %v439, %v2101
    %v2150 = vmul.f32 %v442, %v2101
    %v2151 = vmul.f32 %v445, %v2101
    %v2152 = vmul.f32 %v448, %v2101
    %v2153 = vmul.f32 %v451, %v2101
    %v2154 = vmul.f32 %v454, %v2101
    %v2155 = vmul.f32 %v457, %v2101
    %v2156 = vmul.f32 %v460, %v2101
    %v2157 = vmul.f32 %v463, %v2101
    %v2158 = vmul.f32 %v466, %v2101
    %v2159 = vmul.f32 %v469, %v2101
    %v2160 = vmul.f32 %v472, %v2101
    %v2161 = vmul.f32 %v475, %v2101
    %v2162 = vmul.f32 %v478, %v2101
    %v2163 = vmul.f32 %v481, %v2101
    %v2164 = vmul.f32 %v484, %v2101
    %v2165 = vmul.f32 %v487, %v2101
    %v2166 = vperm.slane %v490, 3
    %v2167 = vadd.f32 %v2102, %v2166
    %v2168 = vadd.f32 %v2103, %v2166
    %v2169 = vadd.f32 %v2104, %v2166
    %v2170 = vadd.f32 %v2105, %v2166
    %v2171 = vadd.f32 %v2106, %v2166
    %v2172 = vadd.f32 %v2107, %v2166
    %v2173 = vadd.f32 %v2108, %v2166
    %v2174 = vadd.f32 %v2109, %v2166
    %v2175 = vadd.f32 %v2110, %v2166
    %v2176 = vadd.f32 %v2111, %v2166
    %v2177 = vadd.f32 %v2112, %v2166
    %v2178 = vadd.f32 %v2113, %v2166
    %v2179 = vadd.f32 %v2114, %v2166
    %v2180 = vadd.f32 %v2115, %v2166
    %v2181 = vadd.f32 %v2116, %v2166
    %v2182 = vadd.f32 %v2117, %v2166
    %v2183 = vadd.f32 %v2118, %v2166
    %v2184 = vadd.f32 %v2119, %v2166
    %v2185 = vadd.f32 %v2120, %v2166
    %v2186 = vadd.f32 %v2121, %v2166
    %v2187 = vadd.f32 %v2122, %v2166
    %v2188 = vadd.f32 %v2123, %v2166
    %v2189 = vadd.f32 %v2124, %v2166
    %v2190 = vadd.f32 %v2125, %v2166
    %v2191 = vadd.f32 %v2126, %v2166
    %v2192 = vadd.f32 %v2127, %v2166
    %v2193 = vadd.f32 %v2128, %v2166
    %v2194 = vadd.f32 %v2129, %v2166
    %v2195 = vadd.f32 %v2130, %v2166
    %v2196 = vadd.f32 %v2131, %v2166
    %v2197 = vadd.f32 %v2132, %v2166
    %v2198 = vadd.f32 %v2133, %v2166
    %v2199 = vadd.f32 %v2134, %v2166
    %v2200 = vadd.f32 %v2135, %v2166
    %v2201 = vadd.f32 %v2136, %v2166
    %v2202 = vadd.f32 %v2137, %v2166
    %v2203 = vadd.f32 %v2138, %v2166
    %v2204 = vadd.f32 %v2139, %v2166
    %v2205 = vadd.f32 %v2140, %v2166
    %v2206 = vadd.f32 %v2141, %v2166
    %v2207 = vadd.f32 %v2142, %v2166
    %v2208 = vadd.f32 %v2143, %v2166
    %v2209 = vadd.f32 %v2144, %v2166
    %v2210 = vadd.f32 %v2145, %v2166
    %v2211 = vadd.f32 %v2146, %v2166
    %v2212 = vadd.f32 %v2147, %v2166
    %v2213 = vadd.f32 %v2148, %v2166
    %v2214 = vadd.f32 %v2149, %v2166
    %v2215 = vadd.f32 %v2150, %v2166
    %v2216 = vadd.f32 %v2151, %v2166
    %v2217 = vadd.f32 %v2152, %v2166
    %v2218 = vadd.f32 %v2153, %v2166
    %v2219 = vadd.f32 %v2154, %v2166
    %v2220 = vadd.f32 %v2155, %v2166
    %v2221 = vadd.f32 %v2156, %v2166
    %v2222 = vadd.f32 %v2157, %v2166
    %v2223 = vadd.f32 %v2158, %v2166
    %v2224 = vadd.f32 %v2159, %v2166
    %v2225 = vadd.f32 %v2160, %v2166
    %v2226 = vadd.f32 %v2161, %v2166
    %v2227 = vadd.f32 %v2162, %v2166
    %v2228 = vadd.f32 %v2163, %v2166
    %v2229 = vadd.f32 %v2164, %v2166
    %v2230 = vadd.f32 %v2165, %v2166
    %v2231 = vmul.f32 %v2167, %v1909
    %v2232 = vmul.f32 %v2168, %v1910
    %v2233 = vmul.f32 %v2169, %v1911
    %v2234 = vmul.f32 %v2170, %v1912
    %v2235 = vmul.f32 %v2171, %v1913
    %v2236 = vmul.f32 %v2172, %v1914
    %v2237 = vmul.f32 %v2173, %v1915
    %v2238 = vmul.f32 %v2174, %v1916
    %v2239 = vmul.f32 %v2175, %v1917
    %v2240 = vmul.f32 %v2176, %v1918
    %v2241 = vmul.f32 %v2177, %v1919
    %v2242 = vmul.f32 %v2178, %v1920
    %v2243 = vmul.f32 %v2179, %v1921
    %v2244 = vmul.f32 %v2180, %v1922
    %v2245 = vmul.f32 %v2181, %v1923
    %v2246 = vmul.f32 %v2182, %v1924
    %v2247 = vmul.f32 %v2183, %v1925
    %v2248 = vmul.f32 %v2184, %v1926
    %v2249 = vmul.f32 %v2185, %v1927
    %v2250 = vmul.f32 %v2186, %v1928
    %v2251 = vmul.f32 %v2187, %v1929
    %v2252 = vmul.f32 %v2188, %v1930
    %v2253 = vmul.f32 %v2189, %v1931
    %v2254 = vmul.f32 %v2190, %v1932
    %v2255 = vmul.f32 %v2191, %v1933
    %v2256 = vmul.f32 %v2192, %v1934
    %v2257 = vmul.f32 %v2193, %v1935
    %v2258 = vmul.f32 %v2194, %v1936
    %v2259 = vmul.f32 %v2195, %v1937
    %v2260 = vmul.f32 %v2196, %v1938
    %v2261 = vmul.f32 %v2197, %v1939
    %v2262 = vmul.f32 %v2198, %v1940
    %v2263 = vmul.f32 %v2199, %v1941
    %v2264 = vmul.f32 %v2200, %v1942
    %v2265 = vmul.f32 %v2201, %v1943
    %v2266 = vmul.f32 %v2202, %v1944
    %v2267 = vmul.f32 %v2203, %v1945
    %v2268 = vmul.f32 %v2204, %v1946
    %v2269 = vmul.f32 %v2205, %v1947
    %v2270 = vmul.f32 %v2206, %v1948
    %v2271 = vmul.f32 %v2207, %v1949
    %v2272 = vmul.f32 %v2208, %v1950
    %v2273 = vmul.f32 %v2209, %v1951
    %v2274 = vmul.f32 %v2210, %v1952
    %v2275 = vmul.f32 %v2211, %v1953
    %v2276 = vmul.f32 %v2212, %v1954
    %v2277 = vmul.f32 %v2213, %v1955
    %v2278 = vmul.f32 %v2214, %v1956
    %v2279 = vmul.f32 %v2215, %v1957
    %v2280 = vmul.f32 %v2216, %v1958
    %v2281 = vmul.f32 %v2217, %v1959
    %v2282 = vmul.f32 %v2218, %v1960
    %v2283 = vmul.f32 %v2219, %v1961
    %v2284 = vmul.f32 %v2220, %v1962
    %v2285 = vmul.f32 %v2221, %v1963
    %v2286 = vmul.f32 %v2222, %v1964
    %v2287 = vmul.f32 %v2223, %v1965
    %v2288 = vmul.f32 %v2224, %v1966
    %v2289 = vmul.f32 %v2225, %v1967
    %v2290 = vmul.f32 %v2226, %v1968
    %v2291 = vmul.f32 %v2227, %v1969
    %v2292 = vmul.f32 %v2228, %v1970
    %v2293 = vmul.f32 %v2229, %v1971
    %v2294 = vmul.f32 %v2230, %v1972
    %v2295 = vperm.slane %v490, 4
    %v2296 = vmul.f32 %v298, %v2295
    %v2297 = vmul.f32 %v301, %v2295
    %v2298 = vmul.f32 %v304, %v2295
    %v2299 = vmul.f32 %v307, %v2295
    %v2300 = vmul.f32 %v310, %v2295
    %v2301 = vmul.f32 %v313, %v2295
    %v2302 = vmul.f32 %v316, %v2295
    %v2303 = vmul.f32 %v319, %v2295
    %v2304 = vmul.f32 %v322, %v2295
    %v2305 = vmul.f32 %v325, %v2295
    %v2306 = vmul.f32 %v328, %v2295
    %v2307 = vmul.f32 %v331, %v2295
    %v2308 = vmul.f32 %v334, %v2295
    %v2309 = vmul.f32 %v337, %v2295
    %v2310 = vmul.f32 %v340, %v2295
    %v2311 = vmul.f32 %v343, %v2295
    %v2312 = vmul.f32 %v346, %v2295
    %v2313 = vmul.f32 %v349, %v2295
    %v2314 = vmul.f32 %v352, %v2295
    %v2315 = vmul.f32 %v355, %v2295
    %v2316 = vmul.f32 %v358, %v2295
    %v2317 = vmul.f32 %v361, %v2295
    %v2318 = vmul.f32 %v364, %v2295
    %v2319 = vmul.f32 %v367, %v2295
    %v2320 = vmul.f32 %v370, %v2295
    %v2321 = vmul.f32 %v373, %v2295
    %v2322 = vmul.f32 %v376, %v2295
    %v2323 = vmul.f32 %v379, %v2295
    %v2324 = vmul.f32 %v382, %v2295
    %v2325 = vmul.f32 %v385, %v2295
    %v2326 = vmul.f32 %v388, %v2295
    %v2327 = vmul.f32 %v391, %v2295
    %v2328 = vmul.f32 %v394, %v2295
    %v2329 = vmul.f32 %v397, %v2295
    %v2330 = vmul.f32 %v400, %v2295
    %v2331 = vmul.f32 %v403, %v2295
    %v2332 = vmul.f32 %v406, %v2295
    %v2333 = vmul.f32 %v409, %v2295
    %v2334 = vmul.f32 %v412, %v2295
    %v2335 = vmul.f32 %v415, %v2295
    %v2336 = vmul.f32 %v418, %v2295
    %v2337 = vmul.f32 %v421, %v2295
    %v2338 = vmul.f32 %v424, %v2295
    %v2339 = vmul.f32 %v427, %v2295
    %v2340 = vmul.f32 %v430, %v2295
    %v2341 = vmul.f32 %v433, %v2295
    %v2342 = vmul.f32 %v436, %v2295
    %v2343 = vmul.f32 %v439, %v2295
    %v2344 = vmul.f32 %v442, %v2295
    %v2345 = vmul.f32 %v445, %v2295
    %v2346 = vmul.f32 %v448, %v2295
    %v2347 = vmul.f32 %v451, %v2295
    %v2348 = vmul.f32 %v454, %v2295
    %v2349 = vmul.f32 %v457, %v2295
    %v2350 = vmul.f32 %v460, %v2295
    %v2351 = vmul.f32 %v463, %v2295
    %v2352 = vmul.f32 %v466, %v2295
    %v2353 = vmul.f32 %v469, %v2295
    %v2354 = vmul.f32 %v472, %v2295
    %v2355 = vmul.f32 %v475, %v2295
    %v2356 = vmul.f32 %v478, %v2295
    %v2357 = vmul.f32 %v481, %v2295
    %v2358 = vmul.f32 %v484, %v2295
    %v2359 = vmul.f32 %v487, %v2295
    %v2360 = vperm.slane %v490, 5
    %v2361 = vadd.f32 %v2296, %v2360
    %v2362 = vadd.f32 %v2297, %v2360
    %v2363 = vadd.f32 %v2298, %v2360
    %v2364 = vadd.f32 %v2299, %v2360
    %v2365 = vadd.f32 %v2300, %v2360
    %v2366 = vadd.f32 %v2301, %v2360
    %v2367 = vadd.f32 %v2302, %v2360
    %v2368 = vadd.f32 %v2303, %v2360
    %v2369 = vadd.f32 %v2304, %v2360
    %v2370 = vadd.f32 %v2305, %v2360
    %v2371 = vadd.f32 %v2306, %v2360
    %v2372 = vadd.f32 %v2307, %v2360
    %v2373 = vadd.f32 %v2308, %v2360
    %v2374 = vadd.f32 %v2309, %v2360
    %v2375 = vadd.f32 %v2310, %v2360
    %v2376 = vadd.f32 %v2311, %v2360
    %v2377 = vadd.f32 %v2312, %v2360
    %v2378 = vadd.f32 %v2313, %v2360
    %v2379 = vadd.f32 %v2314, %v2360
    %v2380 = vadd.f32 %v2315, %v2360
    %v2381 = vadd.f32 %v2316, %v2360
    %v2382 = vadd.f32 %v2317, %v2360
    %v2383 = vadd.f32 %v2318, %v2360
    %v2384 = vadd.f32 %v2319, %v2360
    %v2385 = vadd.f32 %v2320, %v2360
    %v2386 = vadd.f32 %v2321, %v2360
    %v2387 = vadd.f32 %v2322, %v2360
    %v2388 = vadd.f32 %v2323, %v2360
    %v2389 = vadd.f32 %v2324, %v2360
    %v2390 = vadd.f32 %v2325, %v2360
    %v2391 = vadd.f32 %v2326, %v2360
    %v2392 = vadd.f32 %v2327, %v2360
    %v2393 = vadd.f32 %v2328, %v2360
    %v2394 = vadd.f32 %v2329, %v2360
    %v2395 = vadd.f32 %v2330, %v2360
    %v2396 = vadd.f32 %v2331, %v2360
    %v2397 = vadd.f32 %v2332, %v2360
    %v2398 = vadd.f32 %v2333, %v2360
    %v2399 = vadd.f32 %v2334, %v2360
    %v2400 = vadd.f32 %v2335, %v2360
    %v2401 = vadd.f32 %v2336, %v2360
    %v2402 = vadd.f32 %v2337, %v2360
    %v2403 = vadd.f32 %v2338, %v2360
    %v2404 = vadd.f32 %v2339, %v2360
    %v2405 = vadd.f32 %v2340, %v2360
    %v2406 = vadd.f32 %v2341, %v2360
    %v2407 = vadd.f32 %v2342, %v2360
    %v2408 = vadd.f32 %v2343, %v2360
    %v2409 = vadd.f32 %v2344, %v2360
    %v2410 = vadd.f32 %v2345, %v2360
    %v2411 = vadd.f32 %v2346, %v2360
    %v2412 = vadd.f32 %v2347, %v2360
    %v2413 = vadd.f32 %v2348, %v2360
    %v2414 = vadd.f32 %v2349, %v2360
    %v2415 = vadd.f32 %v2350, %v2360
    %v2416 = vadd.f32 %v2351, %v2360
    %v2417 = vadd.f32 %v2352, %v2360
    %v2418 = vadd.f32 %v2353, %v2360
    %v2419 = vadd.f32 %v2354, %v2360
    %v2420 = vadd.f32 %v2355, %v2360
    %v2421 = vadd.f32 %v2356, %v2360
    %v2422 = vadd.f32 %v2357, %v2360
    %v2423 = vadd.f32 %v2358, %v2360
    %v2424 = vadd.f32 %v2359, %v2360
    %v2425 = vmul.f32 %v2361, %v1974
    %v2426 = vmul.f32 %v2362, %v1976
    %v2427 = vmul.f32 %v2363, %v1978
    %v2428 = vmul.f32 %v2364, %v1980
    %v2429 = vmul.f32 %v2365, %v1982
    %v2430 = vmul.f32 %v2366, %v1984
    %v2431 = vmul.f32 %v2367, %v1986
    %v2432 = vmul.f32 %v2368, %v1988
    %v2433 = vmul.f32 %v2369, %v1990
    %v2434 = vmul.f32 %v2370, %v1992
    %v2435 = vmul.f32 %v2371, %v1994
    %v2436 = vmul.f32 %v2372, %v1996
    %v2437 = vmul.f32 %v2373, %v1998
    %v2438 = vmul.f32 %v2374, %v2000
    %v2439 = vmul.f32 %v2375, %v2002
    %v2440 = vmul.f32 %v2376, %v2004
    %v2441 = vmul.f32 %v2377, %v2006
    %v2442 = vmul.f32 %v2378, %v2008
    %v2443 = vmul.f32 %v2379, %v2010
    %v2444 = vmul.f32 %v2380, %v2012
    %v2445 = vmul.f32 %v2381, %v2014
    %v2446 = vmul.f32 %v2382, %v2016
    %v2447 = vmul.f32 %v2383, %v2018
    %v2448 = vmul.f32 %v2384, %v2020
    %v2449 = vmul.f32 %v2385, %v2022
    %v2450 = vmul.f32 %v2386, %v2024
    %v2451 = vmul.f32 %v2387, %v2026
    %v2452 = vmul.f32 %v2388, %v2028
    %v2453 = vmul.f32 %v2389, %v2030
    %v2454 = vmul.f32 %v2390, %v2032
    %v2455 = vmul.f32 %v2391, %v2034
    %v2456 = vmul.f32 %v2392, %v2036
    %v2457 = vmul.f32 %v2393, %v2038
    %v2458 = vmul.f32 %v2394, %v2040
    %v2459 = vmul.f32 %v2395, %v2042
    %v2460 = vmul.f32 %v2396, %v2044
    %v2461 = vmul.f32 %v2397, %v2046
    %v2462 = vmul.f32 %v2398, %v2048
    %v2463 = vmul.f32 %v2399, %v2050
    %v2464 = vmul.f32 %v2400, %v2052
    %v2465 = vmul.f32 %v2401, %v2054
    %v2466 = vmul.f32 %v2402, %v2056
    %v2467 = vmul.f32 %v2403, %v2058
    %v2468 = vmul.f32 %v2404, %v2060
    %v2469 = vmul.f32 %v2405, %v2062
    %v2470 = vmul.f32 %v2406, %v2064
    %v2471 = vmul.f32 %v2407, %v2066
    %v2472 = vmul.f32 %v2408, %v2068
    %v2473 = vmul.f32 %v2409, %v2070
    %v2474 = vmul.f32 %v2410, %v2072
    %v2475 = vmul.f32 %v2411, %v2074
    %v2476 = vmul.f32 %v2412, %v2076
    %v2477 = vmul.f32 %v2413, %v2078
    %v2478 = vmul.f32 %v2414, %v2080
    %v2479 = vmul.f32 %v2415, %v2082
    %v2480 = vmul.f32 %v2416, %v2084
    %v2481 = vmul.f32 %v2417, %v2086
    %v2482 = vmul.f32 %v2418, %v2088
    %v2483 = vmul.f32 %v2419, %v2090
    %v2484 = vmul.f32 %v2420, %v2092
    %v2485 = vmul.f32 %v2421, %v2094
    %v2486 = vmul.f32 %v2422, %v2096
    %v2487 = vmul.f32 %v2423, %v2098
    %v2488 = vmul.f32 %v2424, %v2100
    %v2489 = vadd.f32 %v2231, %v2425
    %v2490 = vadd.f32 %v2232, %v2426
    %v2491 = vadd.f32 %v2233, %v2427
    %v2492 = vadd.f32 %v2234, %v2428
    %v2493 = vadd.f32 %v2235, %v2429
    %v2494 = vadd.f32 %v2236, %v2430
    %v2495 = vadd.f32 %v2237, %v2431
    %v2496 = vadd.f32 %v2238, %v2432
    %v2497 = vadd.f32 %v2239, %v2433
    %v2498 = vadd.f32 %v2240, %v2434
    %v2499 = vadd.f32 %v2241, %v2435
    %v2500 = vadd.f32 %v2242, %v2436
    %v2501 = vadd.f32 %v2243, %v2437
    %v2502 = vadd.f32 %v2244, %v2438
    %v2503 = vadd.f32 %v2245, %v2439
    %v2504 = vadd.f32 %v2246, %v2440
    %v2505 = vadd.f32 %v2247, %v2441
    %v2506 = vadd.f32 %v2248, %v2442
    %v2507 = vadd.f32 %v2249, %v2443
    %v2508 = vadd.f32 %v2250, %v2444
    %v2509 = vadd.f32 %v2251, %v2445
    %v2510 = vadd.f32 %v2252, %v2446
    %v2511 = vadd.f32 %v2253, %v2447
    %v2512 = vadd.f32 %v2254, %v2448
    %v2513 = vadd.f32 %v2255, %v2449
    %v2514 = vadd.f32 %v2256, %v2450
    %v2515 = vadd.f32 %v2257, %v2451
    %v2516 = vadd.f32 %v2258, %v2452
    %v2517 = vadd.f32 %v2259, %v2453
    %v2518 = vadd.f32 %v2260, %v2454
    %v2519 = vadd.f32 %v2261, %v2455
    %v2520 = vadd.f32 %v2262, %v2456
    %v2521 = vadd.f32 %v2263, %v2457
    %v2522 = vadd.f32 %v2264, %v2458
    %v2523 = vadd.f32 %v2265, %v2459
    %v2524 = vadd.f32 %v2266, %v2460
    %v2525 = vadd.f32 %v2267, %v2461
    %v2526 = vadd.f32 %v2268, %v2462
    %v2527 = vadd.f32 %v2269, %v2463
    %v2528 = vadd.f32 %v2270, %v2464
    %v2529 = vadd.f32 %v2271, %v2465
    %v2530 = vadd.f32 %v2272, %v2466
    %v2531 = vadd.f32 %v2273, %v2467
    %v2532 = vadd.f32 %v2274, %v2468
    %v2533 = vadd.f32 %v2275, %v2469
    %v2534 = vadd.f32 %v2276, %v2470
    %v2535 = vadd.f32 %v2277, %v2471
    %v2536 = vadd.f32 %v2278, %v2472
    %v2537 = vadd.f32 %v2279, %v2473
    %v2538 = vadd.f32 %v2280, %v2474
    %v2539 = vadd.f32 %v2281, %v2475
    %v2540 = vadd.f32 %v2282, %v2476
    %v2541 = vadd.f32 %v2283, %v2477
    %v2542 = vadd.f32 %v2284, %v2478
    %v2543 = vadd.f32 %v2285, %v2479
    %v2544 = vadd.f32 %v2286, %v2480
    %v2545 = vadd.f32 %v2287, %v2481
    %v2546 = vadd.f32 %v2288, %v2482
    %v2547 = vadd.f32 %v2289, %v2483
    %v2548 = vadd.f32 %v2290, %v2484
    %v2549 = vadd.f32 %v2291, %v2485
    %v2550 = vadd.f32 %v2292, %v2486
    %v2551 = vadd.f32 %v2293, %v2487
    %v2552 = vadd.f32 %v2294, %v2488
    %v2553 = vxor.u32 %v298, 2147483648
    %v2554 = vxor.u32 %v301, 2147483648
    %v2555 = vxor.u32 %v304, 2147483648
    %v2556 = vxor.u32 %v307, 2147483648
    %v2557 = vxor.u32 %v310, 2147483648
    %v2558 = vxor.u32 %v313, 2147483648
    %v2559 = vxor.u32 %v316, 2147483648
    %v2560 = vxor.u32 %v319, 2147483648
    %v2561 = vxor.u32 %v322, 2147483648
    %v2562 = vxor.u32 %v325, 2147483648
    %v2563 = vxor.u32 %v328, 2147483648
    %v2564 = vxor.u32 %v331, 2147483648
    %v2565 = vxor.u32 %v334, 2147483648
    %v2566 = vxor.u32 %v337, 2147483648
    %v2567 = vxor.u32 %v340, 2147483648
    %v2568 = vxor.u32 %v343, 2147483648
    %v2569 = vxor.u32 %v346, 2147483648
    %v2570 = vxor.u32 %v349, 2147483648
    %v2571 = vxor.u32 %v352, 2147483648
    %v2572 = vxor.u32 %v355, 2147483648
    %v2573 = vxor.u32 %v358, 2147483648
    %v2574 = vxor.u32 %v361, 2147483648
    %v2575 = vxor.u32 %v364, 2147483648
    %v2576 = vxor.u32 %v367, 2147483648
    %v2577 = vxor.u32 %v370, 2147483648
    %v2578 = vxor.u32 %v373, 2147483648
    %v2579 = vxor.u32 %v376, 2147483648
    %v2580 = vxor.u32 %v379, 2147483648
    %v2581 = vxor.u32 %v382, 2147483648
    %v2582 = vxor.u32 %v385, 2147483648
    %v2583 = vxor.u32 %v388, 2147483648
    %v2584 = vxor.u32 %v391, 2147483648
    %v2585 = vxor.u32 %v394, 2147483648
    %v2586 = vxor.u32 %v397, 2147483648
    %v2587 = vxor.u32 %v400, 2147483648
    %v2588 = vxor.u32 %v403, 2147483648
    %v2589 = vxor.u32 %v406, 2147483648
    %v2590 = vxor.u32 %v409, 2147483648
    %v2591 = vxor.u32 %v412, 2147483648
    %v2592 = vxor.u32 %v415, 2147483648
    %v2593 = vxor.u32 %v418, 2147483648
    %v2594 = vxor.u32 %v421, 2147483648
    %v2595 = vxor.u32 %v424, 2147483648
    %v2596 = vxor.u32 %v427, 2147483648
    %v2597 = vxor.u32 %v430, 2147483648
    %v2598 = vxor.u32 %v433, 2147483648
    %v2599 = vxor.u32 %v436, 2147483648
    %v2600 = vxor.u32 %v439, 2147483648
    %v2601 = vxor.u32 %v442, 2147483648
    %v2602 = vxor.u32 %v445, 2147483648
    %v2603 = vxor.u32 %v448, 2147483648
    %v2604 = vxor.u32 %v451, 2147483648
    %v2605 = vxor.u32 %v454, 2147483648
    %v2606 = vxor.u32 %v457, 2147483648
    %v2607 = vxor.u32 %v460, 2147483648
    %v2608 = vxor.u32 %v463, 2147483648
    %v2609 = vxor.u32 %v466, 2147483648
    %v2610 = vxor.u32 %v469, 2147483648
    %v2611 = vxor.u32 %v472, 2147483648
    %v2612 = vxor.u32 %v475, 2147483648
    %v2613 = vxor.u32 %v478, 2147483648
    %v2614 = vxor.u32 %v481, 2147483648
    %v2615 = vxor.u32 %v484, 2147483648
    %v2616 = vxor.u32 %v487, 2147483648
    %v2617 = vmul.f32 %v2553, 1.442695
    %v2618 = vpow.pop %v2617
    %v2619 = vmul.f32 %v2554, 1.442695
    %v2620 = vpow.pop %v2619
    %v2621 = vmul.f32 %v2555, 1.442695
    %v2622 = vpow.pop %v2621
    %v2623 = vmul.f32 %v2556, 1.442695
    %v2624 = vpow.pop %v2623
    %v2625 = vmul.f32 %v2557, 1.442695
    %v2626 = vpow.pop %v2625
    %v2627 = vmul.f32 %v2558, 1.442695
    %v2628 = vpow.pop %v2627
    %v2629 = vmul.f32 %v2559, 1.442695
    %v2630 = vpow.pop %v2629
    %v2631 = vmul.f32 %v2560, 1.442695
    %v2632 = vpow.pop %v2631
    %v2633 = vmul.f32 %v2561, 1.442695
    %v2634 = vpow.pop %v2633
    %v2635 = vmul.f32 %v2562, 1.442695
    %v2636 = vpow.pop %v2635
    %v2637 = vmul.f32 %v2563, 1.442695
    %v2638 = vpow.pop %v2637
    %v2639 = vmul.f32 %v2564, 1.442695
    %v2640 = vpow.pop %v2639
    %v2641 = vmul.f32 %v2565, 1.442695
    %v2642 = vpow.pop %v2641
    %v2643 = vmul.f32 %v2566, 1.442695
    %v2644 = vpow.pop %v2643
    %v2645 = vmul.f32 %v2567, 1.442695
    %v2646 = vpow.pop %v2645
    %v2647 = vmul.f32 %v2568, 1.442695
    %v2648 = vpow.pop %v2647
    %v2649 = vmul.f32 %v2569, 1.442695
    %v2650 = vpow.pop %v2649
    %v2651 = vmul.f32 %v2570, 1.442695
    %v2652 = vpow.pop %v2651
    %v2653 = vmul.f32 %v2571, 1.442695
    %v2654 = vpow.pop %v2653
    %v2655 = vmul.f32 %v2572, 1.442695
    %v2656 = vpow.pop %v2655
    %v2657 = vmul.f32 %v2573, 1.442695
    %v2658 = vpow.pop %v2657
    %v2659 = vmul.f32 %v2574, 1.442695
    %v2660 = vpow.pop %v2659
    %v2661 = vmul.f32 %v2575, 1.442695
    %v2662 = vpow.pop %v2661
    %v2663 = vmul.f32 %v2576, 1.442695
    %v2664 = vpow.pop %v2663
    %v2665 = vmul.f32 %v2577, 1.442695
    %v2666 = vpow.pop %v2665
    %v2667 = vmul.f32 %v2578, 1.442695
    %v2668 = vpow.pop %v2667
    %v2669 = vmul.f32 %v2579, 1.442695
    %v2670 = vpow.pop %v2669
    %v2671 = vmul.f32 %v2580, 1.442695
    %v2672 = vpow.pop %v2671
    %v2673 = vmul.f32 %v2581, 1.442695
    %v2674 = vpow.pop %v2673
    %v2675 = vmul.f32 %v2582, 1.442695
    %v2676 = vpow.pop %v2675
    %v2677 = vmul.f32 %v2583, 1.442695
    %v2678 = vpow.pop %v2677
    %v2679 = vmul.f32 %v2584, 1.442695
    %v2680 = vpow.pop %v2679
    %v2681 = vmul.f32 %v2585, 1.442695
    %v2682 = vpow.pop %v2681
    %v2683 = vmul.f32 %v2586, 1.442695
    %v2684 = vpow.pop %v2683
    %v2685 = vmul.f32 %v2587, 1.442695
    %v2686 = vpow.pop %v2685
    %v2687 = vmul.f32 %v2588, 1.442695
    %v2688 = vpow.pop %v2687
    %v2689 = vmul.f32 %v2589, 1.442695
    %v2690 = vpow.pop %v2689
    %v2691 = vmul.f32 %v2590, 1.442695
    %v2692 = vpow.pop %v2691
    %v2693 = vmul.f32 %v2591, 1.442695
    %v2694 = vpow.pop %v2693
    %v2695 = vmul.f32 %v2592, 1.442695
    %v2696 = vpow.pop %v2695
    %v2697 = vmul.f32 %v2593, 1.442695
    %v2698 = vpow.pop %v2697
    %v2699 = vmul.f32 %v2594, 1.442695
    %v2700 = vpow.pop %v2699
    %v2701 = vmul.f32 %v2595, 1.442695
    %v2702 = vpow.pop %v2701
    %v2703 = vmul.f32 %v2596, 1.442695
    %v2704 = vpow.pop %v2703
    %v2705 = vmul.f32 %v2597, 1.442695
    %v2706 = vpow.pop %v2705
    %v2707 = vmul.f32 %v2598, 1.442695
    %v2708 = vpow.pop %v2707
    %v2709 = vmul.f32 %v2599, 1.442695
    %v2710 = vpow.pop %v2709
    %v2711 = vmul.f32 %v2600, 1.442695
    %v2712 = vpow.pop %v2711
    %v2713 = vmul.f32 %v2601, 1.442695
    %v2714 = vpow.pop %v2713
    %v2715 = vmul.f32 %v2602, 1.442695
    %v2716 = vpow.pop %v2715
    %v2717 = vmul.f32 %v2603, 1.442695
    %v2718 = vpow.pop %v2717
    %v2719 = vmul.f32 %v2604, 1.442695
    %v2720 = vpow.pop %v2719
    %v2721 = vmul.f32 %v2605, 1.442695
    %v2722 = vpow.pop %v2721
    %v2723 = vmul.f32 %v2606, 1.442695
    %v2724 = vpow.pop %v2723
    %v2725 = vmul.f32 %v2607, 1.442695
    %v2726 = vpow.pop %v2725
    %v2727 = vmul.f32 %v2608, 1.442695
    %v2728 = vpow.pop %v2727
    %v2729 = vmul.f32 %v2609, 1.442695
    %v2730 = vpow.pop %v2729
    %v2731 = vmul.f32 %v2610, 1.442695
    %v2732 = vpow.pop %v2731
    %v2733 = vmul.f32 %v2611, 1.442695
    %v2734 = vpow.pop %v2733
    %v2735 = vmul.f32 %v2612, 1.442695
    %v2736 = vpow.pop %v2735
    %v2737 = vmul.f32 %v2613, 1.442695
    %v2738 = vpow.pop %v2737
    %v2739 = vmul.f32 %v2614, 1.442695
    %v2740 = vpow.pop %v2739
    %v2741 = vmul.f32 %v2615, 1.442695
    %v2742 = vpow.pop %v2741
    %v2743 = vmul.f32 %v2616, 1.442695
    %v2744 = vpow.pop %v2743
    %v2745 = vadd.f32 %v2618, 1.0
    %v2746 = vadd.f32 %v2620, 1.0
    %v2747 = vadd.f32 %v2622, 1.0
    %v2748 = vadd.f32 %v2624, 1.0
    %v2749 = vadd.f32 %v2626, 1.0
    %v2750 = vadd.f32 %v2628, 1.0
    %v2751 = vadd.f32 %v2630, 1.0
    %v2752 = vadd.f32 %v2632, 1.0
    %v2753 = vadd.f32 %v2634, 1.0
    %v2754 = vadd.f32 %v2636, 1.0
    %v2755 = vadd.f32 %v2638, 1.0
    %v2756 = vadd.f32 %v2640, 1.0
    %v2757 = vadd.f32 %v2642, 1.0
    %v2758 = vadd.f32 %v2644, 1.0
    %v2759 = vadd.f32 %v2646, 1.0
    %v2760 = vadd.f32 %v2648, 1.0
    %v2761 = vadd.f32 %v2650, 1.0
    %v2762 = vadd.f32 %v2652, 1.0
    %v2763 = vadd.f32 %v2654, 1.0
    %v2764 = vadd.f32 %v2656, 1.0
    %v2765 = vadd.f32 %v2658, 1.0
    %v2766 = vadd.f32 %v2660, 1.0
    %v2767 = vadd.f32 %v2662, 1.0
    %v2768 = vadd.f32 %v2664, 1.0
    %v2769 = vadd.f32 %v2666, 1.0
    %v2770 = vadd.f32 %v2668, 1.0
    %v2771 = vadd.f32 %v2670, 1.0
    %v2772 = vadd.f32 %v2672, 1.0
    %v2773 = vadd.f32 %v2674, 1.0
    %v2774 = vadd.f32 %v2676, 1.0
    %v2775 = vadd.f32 %v2678, 1.0
    %v2776 = vadd.f32 %v2680, 1.0
    %v2777 = vadd.f32 %v2682, 1.0
    %v2778 = vadd.f32 %v2684, 1.0
    %v2779 = vadd.f32 %v2686, 1.0
    %v2780 = vadd.f32 %v2688, 1.0
    %v2781 = vadd.f32 %v2690, 1.0
    %v2782 = vadd.f32 %v2692, 1.0
    %v2783 = vadd.f32 %v2694, 1.0
    %v2784 = vadd.f32 %v2696, 1.0
    %v2785 = vadd.f32 %v2698, 1.0
    %v2786 = vadd.f32 %v2700, 1.0
    %v2787 = vadd.f32 %v2702, 1.0
    %v2788 = vadd.f32 %v2704, 1.0
    %v2789 = vadd.f32 %v2706, 1.0
    %v2790 = vadd.f32 %v2708, 1.0
    %v2791 = vadd.f32 %v2710, 1.0
    %v2792 = vadd.f32 %v2712, 1.0
    %v2793 = vadd.f32 %v2714, 1.0
    %v2794 = vadd.f32 %v2716, 1.0
    %v2795 = vadd.f32 %v2718, 1.0
    %v2796 = vadd.f32 %v2720, 1.0
    %v2797 = vadd.f32 %v2722, 1.0
    %v2798 = vadd.f32 %v2724, 1.0
    %v2799 = vadd.f32 %v2726, 1.0
    %v2800 = vadd.f32 %v2728, 1.0
    %v2801 = vadd.f32 %v2730, 1.0
    %v2802 = vadd.f32 %v2732, 1.0
    %v2803 = vadd.f32 %v2734, 1.0
    %v2804 = vadd.f32 %v2736, 1.0
    %v2805 = vadd.f32 %v2738, 1.0
    %v2806 = vadd.f32 %v2740, 1.0
    %v2807 = vadd.f32 %v2742, 1.0
    %v2808 = vadd.f32 %v2744, 1.0
    %v2809 = vrcp.pop %v2745
    %v2810 = vmul.f32 %v2745, %v2809
    %v2811 = vsub.f32 1.0, %v2810
    %v2812 = vmul.f32 %v2809, %v2811
    %v2813 = vadd.f32 %v2809, %v2812
    %vm2814 = vweird.f32 %v2745
    %vm2815 = vweird.f32 %v2809
    %vm2816 = vmor %vm2814, %vm2815
    %v2817 = vsel %vm2816, %v2809, %v2813
    %v2818 = vand.u32 2147483647, %v2745
    %vm2819 = vcmp.eq.f32.partialorder %v2818, 8.507059e+37
    %v2820 = vand.u32 %v2745, 2147483648
    %v2821 = vor.u32 1.1754944e-38, %v2820
    %v2822 = vsel %vm2819, %v2821, %v2817
    %v2823 = vmul.f32 1.0, %v2822
    %v2824 = vrcp.pop %v2746
    %v2825 = vmul.f32 %v2746, %v2824
    %v2826 = vsub.f32 1.0, %v2825
    %v2827 = vmul.f32 %v2824, %v2826
    %v2828 = vadd.f32 %v2824, %v2827
    %vm2829 = vweird.f32 %v2746
    %vm2830 = vweird.f32 %v2824
    %vm2831 = vmor %vm2829, %vm2830
    %v2832 = vsel %vm2831, %v2824, %v2828
    %v2833 = vand.u32 2147483647, %v2746
    %vm2834 = vcmp.eq.f32.partialorder %v2833, 8.507059e+37
    %v2835 = vand.u32 %v2746, 2147483648
    %v2836 = vor.u32 1.1754944e-38, %v2835
    %v2837 = vsel %vm2834, %v2836, %v2832
    %v2838 = vmul.f32 1.0, %v2837
    %v2839 = vrcp.pop %v2747
    %v2840 = vmul.f32 %v2747, %v2839
    %v2841 = vsub.f32 1.0, %v2840
    %v2842 = vmul.f32 %v2839, %v2841
    %v2843 = vadd.f32 %v2839, %v2842
    %vm2844 = vweird.f32 %v2747
    %vm2845 = vweird.f32 %v2839
    %vm2846 = vmor %vm2844, %vm2845
    %v2847 = vsel %vm2846, %v2839, %v2843
    %v2848 = vand.u32 2147483647, %v2747
    %vm2849 = vcmp.eq.f32.partialorder %v2848, 8.507059e+37
    %v2850 = vand.u32 %v2747, 2147483648
    %v2851 = vor.u32 1.1754944e-38, %v2850
    %v2852 = vsel %vm2849, %v2851, %v2847
    %v2853 = vmul.f32 1.0, %v2852
    %v2854 = vrcp.pop %v2748
    %v2855 = vmul.f32 %v2748, %v2854
    %v2856 = vsub.f32 1.0, %v2855
    %v2857 = vmul.f32 %v2854, %v2856
    %v2858 = vadd.f32 %v2854, %v2857
    %vm2859 = vweird.f32 %v2748
    %vm2860 = vweird.f32 %v2854
    %vm2861 = vmor %vm2859, %vm2860
    %v2862 = vsel %vm2861, %v2854, %v2858
    %v2863 = vand.u32 2147483647, %v2748
    %vm2864 = vcmp.eq.f32.partialorder %v2863, 8.507059e+37
    %v2865 = vand.u32 %v2748, 2147483648
    %v2866 = vor.u32 1.1754944e-38, %v2865
    %v2867 = vsel %vm2864, %v2866, %v2862
    %v2868 = vmul.f32 1.0, %v2867
    %v2869 = vrcp.pop %v2749
    %v2870 = vmul.f32 %v2749, %v2869
    %v2871 = vsub.f32 1.0, %v2870
    %v2872 = vmul.f32 %v2869, %v2871
    %v2873 = vadd.f32 %v2869, %v2872
    %vm2874 = vweird.f32 %v2749
    %vm2875 = vweird.f32 %v2869
    %vm2876 = vmor %vm2874, %vm2875
    %v2877 = vsel %vm2876, %v2869, %v2873
    %v2878 = vand.u32 2147483647, %v2749
    %vm2879 = vcmp.eq.f32.partialorder %v2878, 8.507059e+37
    %v2880 = vand.u32 %v2749, 2147483648
    %v2881 = vor.u32 1.1754944e-38, %v2880
    %v2882 = vsel %vm2879, %v2881, %v2877
    %v2883 = vmul.f32 1.0, %v2882
    %v2884 = vrcp.pop %v2750
    %v2885 = vmul.f32 %v2750, %v2884
    %v2886 = vsub.f32 1.0, %v2885
    %v2887 = vmul.f32 %v2884, %v2886
    %v2888 = vadd.f32 %v2884, %v2887
    %vm2889 = vweird.f32 %v2750
    %vm2890 = vweird.f32 %v2884
    %vm2891 = vmor %vm2889, %vm2890
    %v2892 = vsel %vm2891, %v2884, %v2888
    %v2893 = vand.u32 2147483647, %v2750
    %vm2894 = vcmp.eq.f32.partialorder %v2893, 8.507059e+37
    %v2895 = vand.u32 %v2750, 2147483648
    %v2896 = vor.u32 1.1754944e-38, %v2895
    %v2897 = vsel %vm2894, %v2896, %v2892
    %v2898 = vmul.f32 1.0, %v2897
    %v2899 = vrcp.pop %v2751
    %v2900 = vmul.f32 %v2751, %v2899
    %v2901 = vsub.f32 1.0, %v2900
    %v2902 = vmul.f32 %v2899, %v2901
    %v2903 = vadd.f32 %v2899, %v2902
    %vm2904 = vweird.f32 %v2751
    %vm2905 = vweird.f32 %v2899
    %vm2906 = vmor %vm2904, %vm2905
    %v2907 = vsel %vm2906, %v2899, %v2903
    %v2908 = vand.u32 2147483647, %v2751
    %vm2909 = vcmp.eq.f32.partialorder %v2908, 8.507059e+37
    %v2910 = vand.u32 %v2751, 2147483648
    %v2911 = vor.u32 1.1754944e-38, %v2910
    %v2912 = vsel %vm2909, %v2911, %v2907
    %v2913 = vmul.f32 1.0, %v2912
    %v2914 = vrcp.pop %v2752
    %v2915 = vmul.f32 %v2752, %v2914
    %v2916 = vsub.f32 1.0, %v2915
    %v2917 = vmul.f32 %v2914, %v2916
    %v2918 = vadd.f32 %v2914, %v2917
    %vm2919 = vweird.f32 %v2752
    %vm2920 = vweird.f32 %v2914
    %vm2921 = vmor %vm2919, %vm2920
    %v2922 = vsel %vm2921, %v2914, %v2918
    %v2923 = vand.u32 2147483647, %v2752
    %vm2924 = vcmp.eq.f32.partialorder %v2923, 8.507059e+37
    %v2925 = vand.u32 %v2752, 2147483648
    %v2926 = vor.u32 1.1754944e-38, %v2925
    %v2927 = vsel %vm2924, %v2926, %v2922
    %v2928 = vmul.f32 1.0, %v2927
    %v2929 = vrcp.pop %v2753
    %v2930 = vmul.f32 %v2753, %v2929
    %v2931 = vsub.f32 1.0, %v2930
    %v2932 = vmul.f32 %v2929, %v2931
    %v2933 = vadd.f32 %v2929, %v2932
    %vm2934 = vweird.f32 %v2753
    %vm2935 = vweird.f32 %v2929
    %vm2936 = vmor %vm2934, %vm2935
    %v2937 = vsel %vm2936, %v2929, %v2933
    %v2938 = vand.u32 2147483647, %v2753
    %vm2939 = vcmp.eq.f32.partialorder %v2938, 8.507059e+37
    %v2940 = vand.u32 %v2753, 2147483648
    %v2941 = vor.u32 1.1754944e-38, %v2940
    %v2942 = vsel %vm2939, %v2941, %v2937
    %v2943 = vmul.f32 1.0, %v2942
    %v2944 = vrcp.pop %v2754
    %v2945 = vmul.f32 %v2754, %v2944
    %v2946 = vsub.f32 1.0, %v2945
    %v2947 = vmul.f32 %v2944, %v2946
    %v2948 = vadd.f32 %v2944, %v2947
    %vm2949 = vweird.f32 %v2754
    %vm2950 = vweird.f32 %v2944
    %vm2951 = vmor %vm2949, %vm2950
    %v2952 = vsel %vm2951, %v2944, %v2948
    %v2953 = vand.u32 2147483647, %v2754
    %vm2954 = vcmp.eq.f32.partialorder %v2953, 8.507059e+37
    %v2955 = vand.u32 %v2754, 2147483648
    %v2956 = vor.u32 1.1754944e-38, %v2955
    %v2957 = vsel %vm2954, %v2956, %v2952
    %v2958 = vmul.f32 1.0, %v2957
    %v2959 = vrcp.pop %v2755
    %v2960 = vmul.f32 %v2755, %v2959
    %v2961 = vsub.f32 1.0, %v2960
    %v2962 = vmul.f32 %v2959, %v2961
    %v2963 = vadd.f32 %v2959, %v2962
    %vm2964 = vweird.f32 %v2755
    %vm2965 = vweird.f32 %v2959
    %vm2966 = vmor %vm2964, %vm2965
    %v2967 = vsel %vm2966, %v2959, %v2963
    %v2968 = vand.u32 2147483647, %v2755
    %vm2969 = vcmp.eq.f32.partialorder %v2968, 8.507059e+37
    %v2970 = vand.u32 %v2755, 2147483648
    %v2971 = vor.u32 1.1754944e-38, %v2970
    %v2972 = vsel %vm2969, %v2971, %v2967
    %v2973 = vmul.f32 1.0, %v2972
    %v2974 = vrcp.pop %v2756
    %v2975 = vmul.f32 %v2756, %v2974
    %v2976 = vsub.f32 1.0, %v2975
    %v2977 = vmul.f32 %v2974, %v2976
    %v2978 = vadd.f32 %v2974, %v2977
    %vm2979 = vweird.f32 %v2756
    %vm2980 = vweird.f32 %v2974
    %vm2981 = vmor %vm2979, %vm2980
    %v2982 = vsel %vm2981, %v2974, %v2978
    %v2983 = vand.u32 2147483647, %v2756
    %vm2984 = vcmp.eq.f32.partialorder %v2983, 8.507059e+37
    %v2985 = vand.u32 %v2756, 2147483648
    %v2986 = vor.u32 1.1754944e-38, %v2985
    %v2987 = vsel %vm2984, %v2986, %v2982
    %v2988 = vmul.f32 1.0, %v2987
    %v2989 = vrcp.pop %v2757
    %v2990 = vmul.f32 %v2757, %v2989
    %v2991 = vsub.f32 1.0, %v2990
    %v2992 = vmul.f32 %v2989, %v2991
    %v2993 = vadd.f32 %v2989, %v2992
    %vm2994 = vweird.f32 %v2757
    %vm2995 = vweird.f32 %v2989
    %vm2996 = vmor %vm2994, %vm2995
    %v2997 = vsel %vm2996, %v2989, %v2993
    %v2998 = vand.u32 2147483647, %v2757
    %vm2999 = vcmp.eq.f32.partialorder %v2998, 8.507059e+37
    %v3000 = vand.u32 %v2757, 2147483648
    %v3001 = vor.u32 1.1754944e-38, %v3000
    %v3002 = vsel %vm2999, %v3001, %v2997
    %v3003 = vmul.f32 1.0, %v3002
    %v3004 = vrcp.pop %v2758
    %v3005 = vmul.f32 %v2758, %v3004
    %v3006 = vsub.f32 1.0, %v3005
    %v3007 = vmul.f32 %v3004, %v3006
    %v3008 = vadd.f32 %v3004, %v3007
    %vm3009 = vweird.f32 %v2758
    %vm3010 = vweird.f32 %v3004
    %vm3011 = vmor %vm3009, %vm3010
    %v3012 = vsel %vm3011, %v3004, %v3008
    %v3013 = vand.u32 2147483647, %v2758
    %vm3014 = vcmp.eq.f32.partialorder %v3013, 8.507059e+37
    %v3015 = vand.u32 %v2758, 2147483648
    %v3016 = vor.u32 1.1754944e-38, %v3015
    %v3017 = vsel %vm3014, %v3016, %v3012
    %v3018 = vmul.f32 1.0, %v3017
    %v3019 = vrcp.pop %v2759
    %v3020 = vmul.f32 %v2759, %v3019
    %v3021 = vsub.f32 1.0, %v3020
    %v3022 = vmul.f32 %v3019, %v3021
    %v3023 = vadd.f32 %v3019, %v3022
    %vm3024 = vweird.f32 %v2759
    %vm3025 = vweird.f32 %v3019
    %vm3026 = vmor %vm3024, %vm3025
    %v3027 = vsel %vm3026, %v3019, %v3023
    %v3028 = vand.u32 2147483647, %v2759
    %vm3029 = vcmp.eq.f32.partialorder %v3028, 8.507059e+37
    %v3030 = vand.u32 %v2759, 2147483648
    %v3031 = vor.u32 1.1754944e-38, %v3030
    %v3032 = vsel %vm3029, %v3031, %v3027
    %v3033 = vmul.f32 1.0, %v3032
    %v3034 = vrcp.pop %v2760
    %v3035 = vmul.f32 %v2760, %v3034
    %v3036 = vsub.f32 1.0, %v3035
    %v3037 = vmul.f32 %v3034, %v3036
    %v3038 = vadd.f32 %v3034, %v3037
    %vm3039 = vweird.f32 %v2760
    %vm3040 = vweird.f32 %v3034
    %vm3041 = vmor %vm3039, %vm3040
    %v3042 = vsel %vm3041, %v3034, %v3038
    %v3043 = vand.u32 2147483647, %v2760
    %vm3044 = vcmp.eq.f32.partialorder %v3043, 8.507059e+37
    %v3045 = vand.u32 %v2760, 2147483648
    %v3046 = vor.u32 1.1754944e-38, %v3045
    %v3047 = vsel %vm3044, %v3046, %v3042
    %v3048 = vmul.f32 1.0, %v3047
    %v3049 = vrcp.pop %v2761
    %v3050 = vmul.f32 %v2761, %v3049
    %v3051 = vsub.f32 1.0, %v3050
    %v3052 = vmul.f32 %v3049, %v3051
    %v3053 = vadd.f32 %v3049, %v3052
    %vm3054 = vweird.f32 %v2761
    %vm3055 = vweird.f32 %v3049
    %vm3056 = vmor %vm3054, %vm3055
    %v3057 = vsel %vm3056, %v3049, %v3053
    %v3058 = vand.u32 2147483647, %v2761
    %vm3059 = vcmp.eq.f32.partialorder %v3058, 8.507059e+37
    %v3060 = vand.u32 %v2761, 2147483648
    %v3061 = vor.u32 1.1754944e-38, %v3060
    %v3062 = vsel %vm3059, %v3061, %v3057
    %v3063 = vmul.f32 1.0, %v3062
    %v3064 = vrcp.pop %v2762
    %v3065 = vmul.f32 %v2762, %v3064
    %v3066 = vsub.f32 1.0, %v3065
    %v3067 = vmul.f32 %v3064, %v3066
    %v3068 = vadd.f32 %v3064, %v3067
    %vm3069 = vweird.f32 %v2762
    %vm3070 = vweird.f32 %v3064
    %vm3071 = vmor %vm3069, %vm3070
    %v3072 = vsel %vm3071, %v3064, %v3068
    %v3073 = vand.u32 2147483647, %v2762
    %vm3074 = vcmp.eq.f32.partialorder %v3073, 8.507059e+37
    %v3075 = vand.u32 %v2762, 2147483648
    %v3076 = vor.u32 1.1754944e-38, %v3075
    %v3077 = vsel %vm3074, %v3076, %v3072
    %v3078 = vmul.f32 1.0, %v3077
    %v3079 = vrcp.pop %v2763
    %v3080 = vmul.f32 %v2763, %v3079
    %v3081 = vsub.f32 1.0, %v3080
    %v3082 = vmul.f32 %v3079, %v3081
    %v3083 = vadd.f32 %v3079, %v3082
    %vm3084 = vweird.f32 %v2763
    %vm3085 = vweird.f32 %v3079
    %vm3086 = vmor %vm3084, %vm3085
    %v3087 = vsel %vm3086, %v3079, %v3083
    %v3088 = vand.u32 2147483647, %v2763
    %vm3089 = vcmp.eq.f32.partialorder %v3088, 8.507059e+37
    %v3090 = vand.u32 %v2763, 2147483648
    %v3091 = vor.u32 1.1754944e-38, %v3090
    %v3092 = vsel %vm3089, %v3091, %v3087
    %v3093 = vmul.f32 1.0, %v3092
    %v3094 = vrcp.pop %v2764
    %v3095 = vmul.f32 %v2764, %v3094
    %v3096 = vsub.f32 1.0, %v3095
    %v3097 = vmul.f32 %v3094, %v3096
    %v3098 = vadd.f32 %v3094, %v3097
    %vm3099 = vweird.f32 %v2764
    %vm3100 = vweird.f32 %v3094
    %vm3101 = vmor %vm3099, %vm3100
    %v3102 = vsel %vm3101, %v3094, %v3098
    %v3103 = vand.u32 2147483647, %v2764
    %vm3104 = vcmp.eq.f32.partialorder %v3103, 8.507059e+37
    %v3105 = vand.u32 %v2764, 2147483648
    %v3106 = vor.u32 1.1754944e-38, %v3105
    %v3107 = vsel %vm3104, %v3106, %v3102
    %v3108 = vmul.f32 1.0, %v3107
    %v3109 = vrcp.pop %v2765
    %v3110 = vmul.f32 %v2765, %v3109
    %v3111 = vsub.f32 1.0, %v3110
    %v3112 = vmul.f32 %v3109, %v3111
    %v3113 = vadd.f32 %v3109, %v3112
    %vm3114 = vweird.f32 %v2765
    %vm3115 = vweird.f32 %v3109
    %vm3116 = vmor %vm3114, %vm3115
    %v3117 = vsel %vm3116, %v3109, %v3113
    %v3118 = vand.u32 2147483647, %v2765
    %vm3119 = vcmp.eq.f32.partialorder %v3118, 8.507059e+37
    %v3120 = vand.u32 %v2765, 2147483648
    %v3121 = vor.u32 1.1754944e-38, %v3120
    %v3122 = vsel %vm3119, %v3121, %v3117
    %v3123 = vmul.f32 1.0, %v3122
    %v3124 = vrcp.pop %v2766
    %v3125 = vmul.f32 %v2766, %v3124
    %v3126 = vsub.f32 1.0, %v3125
    %v3127 = vmul.f32 %v3124, %v3126
    %v3128 = vadd.f32 %v3124, %v3127
    %vm3129 = vweird.f32 %v2766
    %vm3130 = vweird.f32 %v3124
    %vm3131 = vmor %vm3129, %vm3130
    %v3132 = vsel %vm3131, %v3124, %v3128
    %v3133 = vand.u32 2147483647, %v2766
    %vm3134 = vcmp.eq.f32.partialorder %v3133, 8.507059e+37
    %v3135 = vand.u32 %v2766, 2147483648
    %v3136 = vor.u32 1.1754944e-38, %v3135
    %v3137 = vsel %vm3134, %v3136, %v3132
    %v3138 = vmul.f32 1.0, %v3137
    %v3139 = vrcp.pop %v2767
    %v3140 = vmul.f32 %v2767, %v3139
    %v3141 = vsub.f32 1.0, %v3140
    %v3142 = vmul.f32 %v3139, %v3141
    %v3143 = vadd.f32 %v3139, %v3142
    %vm3144 = vweird.f32 %v2767
    %vm3145 = vweird.f32 %v3139
    %vm3146 = vmor %vm3144, %vm3145
    %v3147 = vsel %vm3146, %v3139, %v3143
    %v3148 = vand.u32 2147483647, %v2767
    %vm3149 = vcmp.eq.f32.partialorder %v3148, 8.507059e+37
    %v3150 = vand.u32 %v2767, 2147483648
    %v3151 = vor.u32 1.1754944e-38, %v3150
    %v3152 = vsel %vm3149, %v3151, %v3147
    %v3153 = vmul.f32 1.0, %v3152
    %v3154 = vrcp.pop %v2768
    %v3155 = vmul.f32 %v2768, %v3154
    %v3156 = vsub.f32 1.0, %v3155
    %v3157 = vmul.f32 %v3154, %v3156
    %v3158 = vadd.f32 %v3154, %v3157
    %vm3159 = vweird.f32 %v2768
    %vm3160 = vweird.f32 %v3154
    %vm3161 = vmor %vm3159, %vm3160
    %v3162 = vsel %vm3161, %v3154, %v3158
    %v3163 = vand.u32 2147483647, %v2768
    %vm3164 = vcmp.eq.f32.partialorder %v3163, 8.507059e+37
    %v3165 = vand.u32 %v2768, 2147483648
    %v3166 = vor.u32 1.1754944e-38, %v3165
    %v3167 = vsel %vm3164, %v3166, %v3162
    %v3168 = vmul.f32 1.0, %v3167
    %v3169 = vrcp.pop %v2769
    %v3170 = vmul.f32 %v2769, %v3169
    %v3171 = vsub.f32 1.0, %v3170
    %v3172 = vmul.f32 %v3169, %v3171
    %v3173 = vadd.f32 %v3169, %v3172
    %vm3174 = vweird.f32 %v2769
    %vm3175 = vweird.f32 %v3169
    %vm3176 = vmor %vm3174, %vm3175
    %v3177 = vsel %vm3176, %v3169, %v3173
    %v3178 = vand.u32 2147483647, %v2769
    %vm3179 = vcmp.eq.f32.partialorder %v3178, 8.507059e+37
    %v3180 = vand.u32 %v2769, 2147483648
    %v3181 = vor.u32 1.1754944e-38, %v3180
    %v3182 = vsel %vm3179, %v3181, %v3177
    %v3183 = vmul.f32 1.0, %v3182
    %v3184 = vrcp.pop %v2770
    %v3185 = vmul.f32 %v2770, %v3184
    %v3186 = vsub.f32 1.0, %v3185
    %v3187 = vmul.f32 %v3184, %v3186
    %v3188 = vadd.f32 %v3184, %v3187
    %vm3189 = vweird.f32 %v2770
    %vm3190 = vweird.f32 %v3184
    %vm3191 = vmor %vm3189, %vm3190
    %v3192 = vsel %vm3191, %v3184, %v3188
    %v3193 = vand.u32 2147483647, %v2770
    %vm3194 = vcmp.eq.f32.partialorder %v3193, 8.507059e+37
    %v3195 = vand.u32 %v2770, 2147483648
    %v3196 = vor.u32 1.1754944e-38, %v3195
    %v3197 = vsel %vm3194, %v3196, %v3192
    %v3198 = vmul.f32 1.0, %v3197
    %v3199 = vrcp.pop %v2771
    %v3200 = vmul.f32 %v2771, %v3199
    %v3201 = vsub.f32 1.0, %v3200
    %v3202 = vmul.f32 %v3199, %v3201
    %v3203 = vadd.f32 %v3199, %v3202
    %vm3204 = vweird.f32 %v2771
    %vm3205 = vweird.f32 %v3199
    %vm3206 = vmor %vm3204, %vm3205
    %v3207 = vsel %vm3206, %v3199, %v3203
    %v3208 = vand.u32 2147483647, %v2771
    %vm3209 = vcmp.eq.f32.partialorder %v3208, 8.507059e+37
    %v3210 = vand.u32 %v2771, 2147483648
    %v3211 = vor.u32 1.1754944e-38, %v3210
    %v3212 = vsel %vm3209, %v3211, %v3207
    %v3213 = vmul.f32 1.0, %v3212
    %v3214 = vrcp.pop %v2772
    %v3215 = vmul.f32 %v2772, %v3214
    %v3216 = vsub.f32 1.0, %v3215
    %v3217 = vmul.f32 %v3214, %v3216
    %v3218 = vadd.f32 %v3214, %v3217
    %vm3219 = vweird.f32 %v2772
    %vm3220 = vweird.f32 %v3214
    %vm3221 = vmor %vm3219, %vm3220
    %v3222 = vsel %vm3221, %v3214, %v3218
    %v3223 = vand.u32 2147483647, %v2772
    %vm3224 = vcmp.eq.f32.partialorder %v3223, 8.507059e+37
    %v3225 = vand.u32 %v2772, 2147483648
    %v3226 = vor.u32 1.1754944e-38, %v3225
    %v3227 = vsel %vm3224, %v3226, %v3222
    %v3228 = vmul.f32 1.0, %v3227
    %v3229 = vrcp.pop %v2773
    %v3230 = vmul.f32 %v2773, %v3229
    %v3231 = vsub.f32 1.0, %v3230
    %v3232 = vmul.f32 %v3229, %v3231
    %v3233 = vadd.f32 %v3229, %v3232
    %vm3234 = vweird.f32 %v2773
    %vm3235 = vweird.f32 %v3229
    %vm3236 = vmor %vm3234, %vm3235
    %v3237 = vsel %vm3236, %v3229, %v3233
    %v3238 = vand.u32 2147483647, %v2773
    %vm3239 = vcmp.eq.f32.partialorder %v3238, 8.507059e+37
    %v3240 = vand.u32 %v2773, 2147483648
    %v3241 = vor.u32 1.1754944e-38, %v3240
    %v3242 = vsel %vm3239, %v3241, %v3237
    %v3243 = vmul.f32 1.0, %v3242
    %v3244 = vrcp.pop %v2774
    %v3245 = vmul.f32 %v2774, %v3244
    %v3246 = vsub.f32 1.0, %v3245
    %v3247 = vmul.f32 %v3244, %v3246
    %v3248 = vadd.f32 %v3244, %v3247
    %vm3249 = vweird.f32 %v2774
    %vm3250 = vweird.f32 %v3244
    %vm3251 = vmor %vm3249, %vm3250
    %v3252 = vsel %vm3251, %v3244, %v3248
    %v3253 = vand.u32 2147483647, %v2774
    %vm3254 = vcmp.eq.f32.partialorder %v3253, 8.507059e+37
    %v3255 = vand.u32 %v2774, 2147483648
    %v3256 = vor.u32 1.1754944e-38, %v3255
    %v3257 = vsel %vm3254, %v3256, %v3252
    %v3258 = vmul.f32 1.0, %v3257
    %v3259 = vrcp.pop %v2775
    %v3260 = vmul.f32 %v2775, %v3259
    %v3261 = vsub.f32 1.0, %v3260
    %v3262 = vmul.f32 %v3259, %v3261
    %v3263 = vadd.f32 %v3259, %v3262
    %vm3264 = vweird.f32 %v2775
    %vm3265 = vweird.f32 %v3259
    %vm3266 = vmor %vm3264, %vm3265
    %v3267 = vsel %vm3266, %v3259, %v3263
    %v3268 = vand.u32 2147483647, %v2775
    %vm3269 = vcmp.eq.f32.partialorder %v3268, 8.507059e+37
    %v3270 = vand.u32 %v2775, 2147483648
    %v3271 = vor.u32 1.1754944e-38, %v3270
    %v3272 = vsel %vm3269, %v3271, %v3267
    %v3273 = vmul.f32 1.0, %v3272
    %v3274 = vrcp.pop %v2776
    %v3275 = vmul.f32 %v2776, %v3274
    %v3276 = vsub.f32 1.0, %v3275
    %v3277 = vmul.f32 %v3274, %v3276
    %v3278 = vadd.f32 %v3274, %v3277
    %vm3279 = vweird.f32 %v2776
    %vm3280 = vweird.f32 %v3274
    %vm3281 = vmor %vm3279, %vm3280
    %v3282 = vsel %vm3281, %v3274, %v3278
    %v3283 = vand.u32 2147483647, %v2776
    %vm3284 = vcmp.eq.f32.partialorder %v3283, 8.507059e+37
    %v3285 = vand.u32 %v2776, 2147483648
    %v3286 = vor.u32 1.1754944e-38, %v3285
    %v3287 = vsel %vm3284, %v3286, %v3282
    %v3288 = vmul.f32 1.0, %v3287
    %v3289 = vrcp.pop %v2777
    %v3290 = vmul.f32 %v2777, %v3289
    %v3291 = vsub.f32 1.0, %v3290
    %v3292 = vmul.f32 %v3289, %v3291
    %v3293 = vadd.f32 %v3289, %v3292
    %vm3294 = vweird.f32 %v2777
    %vm3295 = vweird.f32 %v3289
    %vm3296 = vmor %vm3294, %vm3295
    %v3297 = vsel %vm3296, %v3289, %v3293
    %v3298 = vand.u32 2147483647, %v2777
    %vm3299 = vcmp.eq.f32.partialorder %v3298, 8.507059e+37
    %v3300 = vand.u32 %v2777, 2147483648
    %v3301 = vor.u32 1.1754944e-38, %v3300
    %v3302 = vsel %vm3299, %v3301, %v3297
    %v3303 = vmul.f32 1.0, %v3302
    %v3304 = vrcp.pop %v2778
    %v3305 = vmul.f32 %v2778, %v3304
    %v3306 = vsub.f32 1.0, %v3305
    %v3307 = vmul.f32 %v3304, %v3306
    %v3308 = vadd.f32 %v3304, %v3307
    %vm3309 = vweird.f32 %v2778
    %vm3310 = vweird.f32 %v3304
    %vm3311 = vmor %vm3309, %vm3310
    %v3312 = vsel %vm3311, %v3304, %v3308
    %v3313 = vand.u32 2147483647, %v2778
    %vm3314 = vcmp.eq.f32.partialorder %v3313, 8.507059e+37
    %v3315 = vand.u32 %v2778, 2147483648
    %v3316 = vor.u32 1.1754944e-38, %v3315
    %v3317 = vsel %vm3314, %v3316, %v3312
    %v3318 = vmul.f32 1.0, %v3317
    %v3319 = vrcp.pop %v2779
    %v3320 = vmul.f32 %v2779, %v3319
    %v3321 = vsub.f32 1.0, %v3320
    %v3322 = vmul.f32 %v3319, %v3321
    %v3323 = vadd.f32 %v3319, %v3322
    %vm3324 = vweird.f32 %v2779
    %vm3325 = vweird.f32 %v3319
    %vm3326 = vmor %vm3324, %vm3325
    %v3327 = vsel %vm3326, %v3319, %v3323
    %v3328 = vand.u32 2147483647, %v2779
    %vm3329 = vcmp.eq.f32.partialorder %v3328, 8.507059e+37
    %v3330 = vand.u32 %v2779, 2147483648
    %v3331 = vor.u32 1.1754944e-38, %v3330
    %v3332 = vsel %vm3329, %v3331, %v3327
    %v3333 = vmul.f32 1.0, %v3332
    %v3334 = vrcp.pop %v2780
    %v3335 = vmul.f32 %v2780, %v3334
    %v3336 = vsub.f32 1.0, %v3335
    %v3337 = vmul.f32 %v3334, %v3336
    %v3338 = vadd.f32 %v3334, %v3337
    %vm3339 = vweird.f32 %v2780
    %vm3340 = vweird.f32 %v3334
    %vm3341 = vmor %vm3339, %vm3340
    %v3342 = vsel %vm3341, %v3334, %v3338
    %v3343 = vand.u32 2147483647, %v2780
    %vm3344 = vcmp.eq.f32.partialorder %v3343, 8.507059e+37
    %v3345 = vand.u32 %v2780, 2147483648
    %v3346 = vor.u32 1.1754944e-38, %v3345
    %v3347 = vsel %vm3344, %v3346, %v3342
    %v3348 = vmul.f32 1.0, %v3347
    %v3349 = vrcp.pop %v2781
    %v3350 = vmul.f32 %v2781, %v3349
    %v3351 = vsub.f32 1.0, %v3350
    %v3352 = vmul.f32 %v3349, %v3351
    %v3353 = vadd.f32 %v3349, %v3352
    %vm3354 = vweird.f32 %v2781
    %vm3355 = vweird.f32 %v3349
    %vm3356 = vmor %vm3354, %vm3355
    %v3357 = vsel %vm3356, %v3349, %v3353
    %v3358 = vand.u32 2147483647, %v2781
    %vm3359 = vcmp.eq.f32.partialorder %v3358, 8.507059e+37
    %v3360 = vand.u32 %v2781, 2147483648
    %v3361 = vor.u32 1.1754944e-38, %v3360
    %v3362 = vsel %vm3359, %v3361, %v3357
    %v3363 = vmul.f32 1.0, %v3362
    %v3364 = vrcp.pop %v2782
    %v3365 = vmul.f32 %v2782, %v3364
    %v3366 = vsub.f32 1.0, %v3365
    %v3367 = vmul.f32 %v3364, %v3366
    %v3368 = vadd.f32 %v3364, %v3367
    %vm3369 = vweird.f32 %v2782
    %vm3370 = vweird.f32 %v3364
    %vm3371 = vmor %vm3369, %vm3370
    %v3372 = vsel %vm3371, %v3364, %v3368
    %v3373 = vand.u32 2147483647, %v2782
    %vm3374 = vcmp.eq.f32.partialorder %v3373, 8.507059e+37
    %v3375 = vand.u32 %v2782, 2147483648
    %v3376 = vor.u32 1.1754944e-38, %v3375
    %v3377 = vsel %vm3374, %v3376, %v3372
    %v3378 = vmul.f32 1.0, %v3377
    %v3379 = vrcp.pop %v2783
    %v3380 = vmul.f32 %v2783, %v3379
    %v3381 = vsub.f32 1.0, %v3380
    %v3382 = vmul.f32 %v3379, %v3381
    %v3383 = vadd.f32 %v3379, %v3382
    %vm3384 = vweird.f32 %v2783
    %vm3385 = vweird.f32 %v3379
    %vm3386 = vmor %vm3384, %vm3385
    %v3387 = vsel %vm3386, %v3379, %v3383
    %v3388 = vand.u32 2147483647, %v2783
    %vm3389 = vcmp.eq.f32.partialorder %v3388, 8.507059e+37
    %v3390 = vand.u32 %v2783, 2147483648
    %v3391 = vor.u32 1.1754944e-38, %v3390
    %v3392 = vsel %vm3389, %v3391, %v3387
    %v3393 = vmul.f32 1.0, %v3392
    %v3394 = vrcp.pop %v2784
    %v3395 = vmul.f32 %v2784, %v3394
    %v3396 = vsub.f32 1.0, %v3395
    %v3397 = vmul.f32 %v3394, %v3396
    %v3398 = vadd.f32 %v3394, %v3397
    %vm3399 = vweird.f32 %v2784
    %vm3400 = vweird.f32 %v3394
    %vm3401 = vmor %vm3399, %vm3400
    %v3402 = vsel %vm3401, %v3394, %v3398
    %v3403 = vand.u32 2147483647, %v2784
    %vm3404 = vcmp.eq.f32.partialorder %v3403, 8.507059e+37
    %v3405 = vand.u32 %v2784, 2147483648
    %v3406 = vor.u32 1.1754944e-38, %v3405
    %v3407 = vsel %vm3404, %v3406, %v3402
    %v3408 = vmul.f32 1.0, %v3407
    %v3409 = vrcp.pop %v2785
    %v3410 = vmul.f32 %v2785, %v3409
    %v3411 = vsub.f32 1.0, %v3410
    %v3412 = vmul.f32 %v3409, %v3411
    %v3413 = vadd.f32 %v3409, %v3412
    %vm3414 = vweird.f32 %v2785
    %vm3415 = vweird.f32 %v3409
    %vm3416 = vmor %vm3414, %vm3415
    %v3417 = vsel %vm3416, %v3409, %v3413
    %v3418 = vand.u32 2147483647, %v2785
    %vm3419 = vcmp.eq.f32.partialorder %v3418, 8.507059e+37
    %v3420 = vand.u32 %v2785, 2147483648
    %v3421 = vor.u32 1.1754944e-38, %v3420
    %v3422 = vsel %vm3419, %v3421, %v3417
    %v3423 = vmul.f32 1.0, %v3422
    %v3424 = vrcp.pop %v2786
    %v3425 = vmul.f32 %v2786, %v3424
    %v3426 = vsub.f32 1.0, %v3425
    %v3427 = vmul.f32 %v3424, %v3426
    %v3428 = vadd.f32 %v3424, %v3427
    %vm3429 = vweird.f32 %v2786
    %vm3430 = vweird.f32 %v3424
    %vm3431 = vmor %vm3429, %vm3430
    %v3432 = vsel %vm3431, %v3424, %v3428
    %v3433 = vand.u32 2147483647, %v2786
    %vm3434 = vcmp.eq.f32.partialorder %v3433, 8.507059e+37
    %v3435 = vand.u32 %v2786, 2147483648
    %v3436 = vor.u32 1.1754944e-38, %v3435
    %v3437 = vsel %vm3434, %v3436, %v3432
    %v3438 = vmul.f32 1.0, %v3437
    %v3439 = vrcp.pop %v2787
    %v3440 = vmul.f32 %v2787, %v3439
    %v3441 = vsub.f32 1.0, %v3440
    %v3442 = vmul.f32 %v3439, %v3441
    %v3443 = vadd.f32 %v3439, %v3442
    %vm3444 = vweird.f32 %v2787
    %vm3445 = vweird.f32 %v3439
    %vm3446 = vmor %vm3444, %vm3445
    %v3447 = vsel %vm3446, %v3439, %v3443
    %v3448 = vand.u32 2147483647, %v2787
    %vm3449 = vcmp.eq.f32.partialorder %v3448, 8.507059e+37
    %v3450 = vand.u32 %v2787, 2147483648
    %v3451 = vor.u32 1.1754944e-38, %v3450
    %v3452 = vsel %vm3449, %v3451, %v3447
    %v3453 = vmul.f32 1.0, %v3452
    %v3454 = vrcp.pop %v2788
    %v3455 = vmul.f32 %v2788, %v3454
    %v3456 = vsub.f32 1.0, %v3455
    %v3457 = vmul.f32 %v3454, %v3456
    %v3458 = vadd.f32 %v3454, %v3457
    %vm3459 = vweird.f32 %v2788
    %vm3460 = vweird.f32 %v3454
    %vm3461 = vmor %vm3459, %vm3460
    %v3462 = vsel %vm3461, %v3454, %v3458
    %v3463 = vand.u32 2147483647, %v2788
    %vm3464 = vcmp.eq.f32.partialorder %v3463, 8.507059e+37
    %v3465 = vand.u32 %v2788, 2147483648
    %v3466 = vor.u32 1.1754944e-38, %v3465
    %v3467 = vsel %vm3464, %v3466, %v3462
    %v3468 = vmul.f32 1.0, %v3467
    %v3469 = vrcp.pop %v2789
    %v3470 = vmul.f32 %v2789, %v3469
    %v3471 = vsub.f32 1.0, %v3470
    %v3472 = vmul.f32 %v3469, %v3471
    %v3473 = vadd.f32 %v3469, %v3472
    %vm3474 = vweird.f32 %v2789
    %vm3475 = vweird.f32 %v3469
    %vm3476 = vmor %vm3474, %vm3475
    %v3477 = vsel %vm3476, %v3469, %v3473
    %v3478 = vand.u32 2147483647, %v2789
    %vm3479 = vcmp.eq.f32.partialorder %v3478, 8.507059e+37
    %v3480 = vand.u32 %v2789, 2147483648
    %v3481 = vor.u32 1.1754944e-38, %v3480
    %v3482 = vsel %vm3479, %v3481, %v3477
    %v3483 = vmul.f32 1.0, %v3482
    %v3484 = vrcp.pop %v2790
    %v3485 = vmul.f32 %v2790, %v3484
    %v3486 = vsub.f32 1.0, %v3485
    %v3487 = vmul.f32 %v3484, %v3486
    %v3488 = vadd.f32 %v3484, %v3487
    %vm3489 = vweird.f32 %v2790
    %vm3490 = vweird.f32 %v3484
    %vm3491 = vmor %vm3489, %vm3490
    %v3492 = vsel %vm3491, %v3484, %v3488
    %v3493 = vand.u32 2147483647, %v2790
    %vm3494 = vcmp.eq.f32.partialorder %v3493, 8.507059e+37
    %v3495 = vand.u32 %v2790, 2147483648
    %v3496 = vor.u32 1.1754944e-38, %v3495
    %v3497 = vsel %vm3494, %v3496, %v3492
    %v3498 = vmul.f32 1.0, %v3497
    %v3499 = vrcp.pop %v2791
    %v3500 = vmul.f32 %v2791, %v3499
    %v3501 = vsub.f32 1.0, %v3500
    %v3502 = vmul.f32 %v3499, %v3501
    %v3503 = vadd.f32 %v3499, %v3502
    %vm3504 = vweird.f32 %v2791
    %vm3505 = vweird.f32 %v3499
    %vm3506 = vmor %vm3504, %vm3505
    %v3507 = vsel %vm3506, %v3499, %v3503
    %v3508 = vand.u32 2147483647, %v2791
    %vm3509 = vcmp.eq.f32.partialorder %v3508, 8.507059e+37
    %v3510 = vand.u32 %v2791, 2147483648
    %v3511 = vor.u32 1.1754944e-38, %v3510
    %v3512 = vsel %vm3509, %v3511, %v3507
    %v3513 = vmul.f32 1.0, %v3512
    %v3514 = vrcp.pop %v2792
    %v3515 = vmul.f32 %v2792, %v3514
    %v3516 = vsub.f32 1.0, %v3515
    %v3517 = vmul.f32 %v3514, %v3516
    %v3518 = vadd.f32 %v3514, %v3517
    %vm3519 = vweird.f32 %v2792
    %vm3520 = vweird.f32 %v3514
    %vm3521 = vmor %vm3519, %vm3520
    %v3522 = vsel %vm3521, %v3514, %v3518
    %v3523 = vand.u32 2147483647, %v2792
    %vm3524 = vcmp.eq.f32.partialorder %v3523, 8.507059e+37
    %v3525 = vand.u32 %v2792, 2147483648
    %v3526 = vor.u32 1.1754944e-38, %v3525
    %v3527 = vsel %vm3524, %v3526, %v3522
    %v3528 = vmul.f32 1.0, %v3527
    %v3529 = vrcp.pop %v2793
    %v3530 = vmul.f32 %v2793, %v3529
    %v3531 = vsub.f32 1.0, %v3530
    %v3532 = vmul.f32 %v3529, %v3531
    %v3533 = vadd.f32 %v3529, %v3532
    %vm3534 = vweird.f32 %v2793
    %vm3535 = vweird.f32 %v3529
    %vm3536 = vmor %vm3534, %vm3535
    %v3537 = vsel %vm3536, %v3529, %v3533
    %v3538 = vand.u32 2147483647, %v2793
    %vm3539 = vcmp.eq.f32.partialorder %v3538, 8.507059e+37
    %v3540 = vand.u32 %v2793, 2147483648
    %v3541 = vor.u32 1.1754944e-38, %v3540
    %v3542 = vsel %vm3539, %v3541, %v3537
    %v3543 = vmul.f32 1.0, %v3542
    %v3544 = vrcp.pop %v2794
    %v3545 = vmul.f32 %v2794, %v3544
    %v3546 = vsub.f32 1.0, %v3545
    %v3547 = vmul.f32 %v3544, %v3546
    %v3548 = vadd.f32 %v3544, %v3547
    %vm3549 = vweird.f32 %v2794
    %vm3550 = vweird.f32 %v3544
    %vm3551 = vmor %vm3549, %vm3550
    %v3552 = vsel %vm3551, %v3544, %v3548
    %v3553 = vand.u32 2147483647, %v2794
    %vm3554 = vcmp.eq.f32.partialorder %v3553, 8.507059e+37
    %v3555 = vand.u32 %v2794, 2147483648
    %v3556 = vor.u32 1.1754944e-38, %v3555
    %v3557 = vsel %vm3554, %v3556, %v3552
    %v3558 = vmul.f32 1.0, %v3557
    %v3559 = vrcp.pop %v2795
    %v3560 = vmul.f32 %v2795, %v3559
    %v3561 = vsub.f32 1.0, %v3560
    %v3562 = vmul.f32 %v3559, %v3561
    %v3563 = vadd.f32 %v3559, %v3562
    %vm3564 = vweird.f32 %v2795
    %vm3565 = vweird.f32 %v3559
    %vm3566 = vmor %vm3564, %vm3565
    %v3567 = vsel %vm3566, %v3559, %v3563
    %v3568 = vand.u32 2147483647, %v2795
    %vm3569 = vcmp.eq.f32.partialorder %v3568, 8.507059e+37
    %v3570 = vand.u32 %v2795, 2147483648
    %v3571 = vor.u32 1.1754944e-38, %v3570
    %v3572 = vsel %vm3569, %v3571, %v3567
    %v3573 = vmul.f32 1.0, %v3572
    %v3574 = vrcp.pop %v2796
    %v3575 = vmul.f32 %v2796, %v3574
    %v3576 = vsub.f32 1.0, %v3575
    %v3577 = vmul.f32 %v3574, %v3576
    %v3578 = vadd.f32 %v3574, %v3577
    %vm3579 = vweird.f32 %v2796
    %vm3580 = vweird.f32 %v3574
    %vm3581 = vmor %vm3579, %vm3580
    %v3582 = vsel %vm3581, %v3574, %v3578
    %v3583 = vand.u32 2147483647, %v2796
    %vm3584 = vcmp.eq.f32.partialorder %v3583, 8.507059e+37
    %v3585 = vand.u32 %v2796, 2147483648
    %v3586 = vor.u32 1.1754944e-38, %v3585
    %v3587 = vsel %vm3584, %v3586, %v3582
    %v3588 = vmul.f32 1.0, %v3587
    %v3589 = vrcp.pop %v2797
    %v3590 = vmul.f32 %v2797, %v3589
    %v3591 = vsub.f32 1.0, %v3590
    %v3592 = vmul.f32 %v3589, %v3591
    %v3593 = vadd.f32 %v3589, %v3592
    %vm3594 = vweird.f32 %v2797
    %vm3595 = vweird.f32 %v3589
    %vm3596 = vmor %vm3594, %vm3595
    %v3597 = vsel %vm3596, %v3589, %v3593
    %v3598 = vand.u32 2147483647, %v2797
    %vm3599 = vcmp.eq.f32.partialorder %v3598, 8.507059e+37
    %v3600 = vand.u32 %v2797, 2147483648
    %v3601 = vor.u32 1.1754944e-38, %v3600
    %v3602 = vsel %vm3599, %v3601, %v3597
    %v3603 = vmul.f32 1.0, %v3602
    %v3604 = vrcp.pop %v2798
    %v3605 = vmul.f32 %v2798, %v3604
    %v3606 = vsub.f32 1.0, %v3605
    %v3607 = vmul.f32 %v3604, %v3606
    %v3608 = vadd.f32 %v3604, %v3607
    %vm3609 = vweird.f32 %v2798
    %vm3610 = vweird.f32 %v3604
    %vm3611 = vmor %vm3609, %vm3610
    %v3612 = vsel %vm3611, %v3604, %v3608
    %v3613 = vand.u32 2147483647, %v2798
    %vm3614 = vcmp.eq.f32.partialorder %v3613, 8.507059e+37
    %v3615 = vand.u32 %v2798, 2147483648
    %v3616 = vor.u32 1.1754944e-38, %v3615
    %v3617 = vsel %vm3614, %v3616, %v3612
    %v3618 = vmul.f32 1.0, %v3617
    %v3619 = vrcp.pop %v2799
    %v3620 = vmul.f32 %v2799, %v3619
    %v3621 = vsub.f32 1.0, %v3620
    %v3622 = vmul.f32 %v3619, %v3621
    %v3623 = vadd.f32 %v3619, %v3622
    %vm3624 = vweird.f32 %v2799
    %vm3625 = vweird.f32 %v3619
    %vm3626 = vmor %vm3624, %vm3625
    %v3627 = vsel %vm3626, %v3619, %v3623
    %v3628 = vand.u32 2147483647, %v2799
    %vm3629 = vcmp.eq.f32.partialorder %v3628, 8.507059e+37
    %v3630 = vand.u32 %v2799, 2147483648
    %v3631 = vor.u32 1.1754944e-38, %v3630
    %v3632 = vsel %vm3629, %v3631, %v3627
    %v3633 = vmul.f32 1.0, %v3632
    %v3634 = vrcp.pop %v2800
    %v3635 = vmul.f32 %v2800, %v3634
    %v3636 = vsub.f32 1.0, %v3635
    %v3637 = vmul.f32 %v3634, %v3636
    %v3638 = vadd.f32 %v3634, %v3637
    %vm3639 = vweird.f32 %v2800
    %vm3640 = vweird.f32 %v3634
    %vm3641 = vmor %vm3639, %vm3640
    %v3642 = vsel %vm3641, %v3634, %v3638
    %v3643 = vand.u32 2147483647, %v2800
    %vm3644 = vcmp.eq.f32.partialorder %v3643, 8.507059e+37
    %v3645 = vand.u32 %v2800, 2147483648
    %v3646 = vor.u32 1.1754944e-38, %v3645
    %v3647 = vsel %vm3644, %v3646, %v3642
    %v3648 = vmul.f32 1.0, %v3647
    %v3649 = vrcp.pop %v2801
    %v3650 = vmul.f32 %v2801, %v3649
    %v3651 = vsub.f32 1.0, %v3650
    %v3652 = vmul.f32 %v3649, %v3651
    %v3653 = vadd.f32 %v3649, %v3652
    %vm3654 = vweird.f32 %v2801
    %vm3655 = vweird.f32 %v3649
    %vm3656 = vmor %vm3654, %vm3655
    %v3657 = vsel %vm3656, %v3649, %v3653
    %v3658 = vand.u32 2147483647, %v2801
    %vm3659 = vcmp.eq.f32.partialorder %v3658, 8.507059e+37
    %v3660 = vand.u32 %v2801, 2147483648
    %v3661 = vor.u32 1.1754944e-38, %v3660
    %v3662 = vsel %vm3659, %v3661, %v3657
    %v3663 = vmul.f32 1.0, %v3662
    %v3664 = vrcp.pop %v2802
    %v3665 = vmul.f32 %v2802, %v3664
    %v3666 = vsub.f32 1.0, %v3665
    %v3667 = vmul.f32 %v3664, %v3666
    %v3668 = vadd.f32 %v3664, %v3667
    %vm3669 = vweird.f32 %v2802
    %vm3670 = vweird.f32 %v3664
    %vm3671 = vmor %vm3669, %vm3670
    %v3672 = vsel %vm3671, %v3664, %v3668
    %v3673 = vand.u32 2147483647, %v2802
    %vm3674 = vcmp.eq.f32.partialorder %v3673, 8.507059e+37
    %v3675 = vand.u32 %v2802, 2147483648
    %v3676 = vor.u32 1.1754944e-38, %v3675
    %v3677 = vsel %vm3674, %v3676, %v3672
    %v3678 = vmul.f32 1.0, %v3677
    %v3679 = vrcp.pop %v2803
    %v3680 = vmul.f32 %v2803, %v3679
    %v3681 = vsub.f32 1.0, %v3680
    %v3682 = vmul.f32 %v3679, %v3681
    %v3683 = vadd.f32 %v3679, %v3682
    %vm3684 = vweird.f32 %v2803
    %vm3685 = vweird.f32 %v3679
    %vm3686 = vmor %vm3684, %vm3685
    %v3687 = vsel %vm3686, %v3679, %v3683
    %v3688 = vand.u32 2147483647, %v2803
    %vm3689 = vcmp.eq.f32.partialorder %v3688, 8.507059e+37
    %v3690 = vand.u32 %v2803, 2147483648
    %v3691 = vor.u32 1.1754944e-38, %v3690
    %v3692 = vsel %vm3689, %v3691, %v3687
    %v3693 = vmul.f32 1.0, %v3692
    %v3694 = vrcp.pop %v2804
    %v3695 = vmul.f32 %v2804, %v3694
    %v3696 = vsub.f32 1.0, %v3695
    %v3697 = vmul.f32 %v3694, %v3696
    %v3698 = vadd.f32 %v3694, %v3697
    %vm3699 = vweird.f32 %v2804
    %vm3700 = vweird.f32 %v3694
    %vm3701 = vmor %vm3699, %vm3700
    %v3702 = vsel %vm3701, %v3694, %v3698
    %v3703 = vand.u32 2147483647, %v2804
    %vm3704 = vcmp.eq.f32.partialorder %v3703, 8.507059e+37
    %v3705 = vand.u32 %v2804, 2147483648
    %v3706 = vor.u32 1.1754944e-38, %v3705
    %v3707 = vsel %vm3704, %v3706, %v3702
    %v3708 = vmul.f32 1.0, %v3707
    %v3709 = vrcp.pop %v2805
    %v3710 = vmul.f32 %v2805, %v3709
    %v3711 = vsub.f32 1.0, %v3710
    %v3712 = vmul.f32 %v3709, %v3711
    %v3713 = vadd.f32 %v3709, %v3712
    %vm3714 = vweird.f32 %v2805
    %vm3715 = vweird.f32 %v3709
    %vm3716 = vmor %vm3714, %vm3715
    %v3717 = vsel %vm3716, %v3709, %v3713
    %v3718 = vand.u32 2147483647, %v2805
    %vm3719 = vcmp.eq.f32.partialorder %v3718, 8.507059e+37
    %v3720 = vand.u32 %v2805, 2147483648
    %v3721 = vor.u32 1.1754944e-38, %v3720
    %v3722 = vsel %vm3719, %v3721, %v3717
    %v3723 = vmul.f32 1.0, %v3722
    %v3724 = vrcp.pop %v2806
    %v3725 = vmul.f32 %v2806, %v3724
    %v3726 = vsub.f32 1.0, %v3725
    %v3727 = vmul.f32 %v3724, %v3726
    %v3728 = vadd.f32 %v3724, %v3727
    %vm3729 = vweird.f32 %v2806
    %vm3730 = vweird.f32 %v3724
    %vm3731 = vmor %vm3729, %vm3730
    %v3732 = vsel %vm3731, %v3724, %v3728
    %v3733 = vand.u32 2147483647, %v2806
    %vm3734 = vcmp.eq.f32.partialorder %v3733, 8.507059e+37
    %v3735 = vand.u32 %v2806, 2147483648
    %v3736 = vor.u32 1.1754944e-38, %v3735
    %v3737 = vsel %vm3734, %v3736, %v3732
    %v3738 = vmul.f32 1.0, %v3737
    %v3739 = vrcp.pop %v2807
    %v3740 = vmul.f32 %v2807, %v3739
    %v3741 = vsub.f32 1.0, %v3740
    %v3742 = vmul.f32 %v3739, %v3741
    %v3743 = vadd.f32 %v3739, %v3742
    %vm3744 = vweird.f32 %v2807
    %vm3745 = vweird.f32 %v3739
    %vm3746 = vmor %vm3744, %vm3745
    %v3747 = vsel %vm3746, %v3739, %v3743
    %v3748 = vand.u32 2147483647, %v2807
    %vm3749 = vcmp.eq.f32.partialorder %v3748, 8.507059e+37
    %v3750 = vand.u32 %v2807, 2147483648
    %v3751 = vor.u32 1.1754944e-38, %v3750
    %v3752 = vsel %vm3749, %v3751, %v3747
    %v3753 = vmul.f32 1.0, %v3752
    %v3754 = vrcp.pop %v2808
    %v3755 = vmul.f32 %v2808, %v3754
    %v3756 = vsub.f32 1.0, %v3755
    %v3757 = vmul.f32 %v3754, %v3756
    %v3758 = vadd.f32 %v3754, %v3757
    %vm3759 = vweird.f32 %v2808
    %vm3760 = vweird.f32 %v3754
    %vm3761 = vmor %vm3759, %vm3760
    %v3762 = vsel %vm3761, %v3754, %v3758
    %v3763 = vand.u32 2147483647, %v2808
    %vm3764 = vcmp.eq.f32.partialorder %v3763, 8.507059e+37
    %v3765 = vand.u32 %v2808, 2147483648
    %v3766 = vor.u32 1.1754944e-38, %v3765
    %v3767 = vsel %vm3764, %v3766, %v3762
    %v3768 = vmul.f32 1.0, %v3767
    %v3769 = vmul.f32 %v298, %v2823
    %v3770 = vmul.f32 %v301, %v2838
    %v3771 = vmul.f32 %v304, %v2853
    %v3772 = vmul.f32 %v307, %v2868
    %v3773 = vmul.f32 %v310, %v2883
    %v3774 = vmul.f32 %v313, %v2898
    %v3775 = vmul.f32 %v316, %v2913
    %v3776 = vmul.f32 %v319, %v2928
    %v3777 = vmul.f32 %v322, %v2943
    %v3778 = vmul.f32 %v325, %v2958
    %v3779 = vmul.f32 %v328, %v2973
    %v3780 = vmul.f32 %v331, %v2988
    %v3781 = vmul.f32 %v334, %v3003
    %v3782 = vmul.f32 %v337, %v3018
    %v3783 = vmul.f32 %v340, %v3033
    %v3784 = vmul.f32 %v343, %v3048
    %v3785 = vmul.f32 %v346, %v3063
    %v3786 = vmul.f32 %v349, %v3078
    %v3787 = vmul.f32 %v352, %v3093
    %v3788 = vmul.f32 %v355, %v3108
    %v3789 = vmul.f32 %v358, %v3123
    %v3790 = vmul.f32 %v361, %v3138
    %v3791 = vmul.f32 %v364, %v3153
    %v3792 = vmul.f32 %v367, %v3168
    %v3793 = vmul.f32 %v370, %v3183
    %v3794 = vmul.f32 %v373, %v3198
    %v3795 = vmul.f32 %v376, %v3213
    %v3796 = vmul.f32 %v379, %v3228
    %v3797 = vmul.f32 %v382, %v3243
    %v3798 = vmul.f32 %v385, %v3258
    %v3799 = vmul.f32 %v388, %v3273
    %v3800 = vmul.f32 %v391, %v3288
    %v3801 = vmul.f32 %v394, %v3303
    %v3802 = vmul.f32 %v397, %v3318
    %v3803 = vmul.f32 %v400, %v3333
    %v3804 = vmul.f32 %v403, %v3348
    %v3805 = vmul.f32 %v406, %v3363
    %v3806 = vmul.f32 %v409, %v3378
    %v3807 = vmul.f32 %v412, %v3393
    %v3808 = vmul.f32 %v415, %v3408
    %v3809 = vmul.f32 %v418, %v3423
    %v3810 = vmul.f32 %v421, %v3438
    %v3811 = vmul.f32 %v424, %v3453
    %v3812 = vmul.f32 %v427, %v3468
    %v3813 = vmul.f32 %v430, %v3483
    %v3814 = vmul.f32 %v433, %v3498
    %v3815 = vmul.f32 %v436, %v3513
    %v3816 = vmul.f32 %v439, %v3528
    %v3817 = vmul.f32 %v442, %v3543
    %v3818 = vmul.f32 %v445, %v3558
    %v3819 = vmul.f32 %v448, %v3573
    %v3820 = vmul.f32 %v451, %v3588
    %v3821 = vmul.f32 %v454, %v3603
    %v3822 = vmul.f32 %v457, %v3618
    %v3823 = vmul.f32 %v460, %v3633
    %v3824 = vmul.f32 %v463, %v3648
    %v3825 = vmul.f32 %v466, %v3663
    %v3826 = vmul.f32 %v469, %v3678
    %v3827 = vmul.f32 %v472, %v3693
    %v3828 = vmul.f32 %v475, %v3708
    %v3829 = vmul.f32 %v478, %v3723
    %v3830 = vmul.f32 %v481, %v3738
    %v3831 = vmul.f32 %v484, %v3753
    %v3832 = vmul.f32 %v487, %v3768
    %v3833 = vperm.slane %v490, 6
    %v3834 = vmul.f32 %v3769, %v3833
    %v3835 = vmul.f32 %v3770, %v3833
    %v3836 = vmul.f32 %v3771, %v3833
    %v3837 = vmul.f32 %v3772, %v3833
    %v3838 = vmul.f32 %v3773, %v3833
    %v3839 = vmul.f32 %v3774, %v3833
    %v3840 = vmul.f32 %v3775, %v3833
    %v3841 = vmul.f32 %v3776, %v3833
    %v3842 = vmul.f32 %v3777, %v3833
    %v3843 = vmul.f32 %v3778, %v3833
    %v3844 = vmul.f32 %v3779, %v3833
    %v3845 = vmul.f32 %v3780, %v3833
    %v3846 = vmul.f32 %v3781, %v3833
    %v3847 = vmul.f32 %v3782, %v3833
    %v3848 = vmul.f32 %v3783, %v3833
    %v3849 = vmul.f32 %v3784, %v3833
    %v3850 = vmul.f32 %v3785, %v3833
    %v3851 = vmul.f32 %v3786, %v3833
    %v3852 = vmul.f32 %v3787, %v3833
    %v3853 = vmul.f32 %v3788, %v3833
    %v3854 = vmul.f32 %v3789, %v3833
    %v3855 = vmul.f32 %v3790, %v3833
    %v3856 = vmul.f32 %v3791, %v3833
    %v3857 = vmul.f32 %v3792, %v3833
    %v3858 = vmul.f32 %v3793, %v3833
    %v3859 = vmul.f32 %v3794, %v3833
    %v3860 = vmul.f32 %v3795, %v3833
    %v3861 = vmul.f32 %v3796, %v3833
    %v3862 = vmul.f32 %v3797, %v3833
    %v3863 = vmul.f32 %v3798, %v3833
    %v3864 = vmul.f32 %v3799, %v3833
    %v3865 = vmul.f32 %v3800, %v3833
    %v3866 = vmul.f32 %v3801, %v3833
    %v3867 = vmul.f32 %v3802, %v3833
    %v3868 = vmul.f32 %v3803, %v3833
    %v3869 = vmul.f32 %v3804, %v3833
    %v3870 = vmul.f32 %v3805, %v3833
    %v3871 = vmul.f32 %v3806, %v3833
    %v3872 = vmul.f32 %v3807, %v3833
    %v3873 = vmul.f32 %v3808, %v3833
    %v3874 = vmul.f32 %v3809, %v3833
    %v3875 = vmul.f32 %v3810, %v3833
    %v3876 = vmul.f32 %v3811, %v3833
    %v3877 = vmul.f32 %v3812, %v3833
    %v3878 = vmul.f32 %v3813, %v3833
    %v3879 = vmul.f32 %v3814, %v3833
    %v3880 = vmul.f32 %v3815, %v3833
    %v3881 = vmul.f32 %v3816, %v3833
    %v3882 = vmul.f32 %v3817, %v3833
    %v3883 = vmul.f32 %v3818, %v3833
    %v3884 = vmul.f32 %v3819, %v3833
    %v3885 = vmul.f32 %v3820, %v3833
    %v3886 = vmul.f32 %v3821, %v3833
    %v3887 = vmul.f32 %v3822, %v3833
    %v3888 = vmul.f32 %v3823, %v3833
    %v3889 = vmul.f32 %v3824, %v3833
    %v3890 = vmul.f32 %v3825, %v3833
    %v3891 = vmul.f32 %v3826, %v3833
    %v3892 = vmul.f32 %v3827, %v3833
    %v3893 = vmul.f32 %v3828, %v3833
    %v3894 = vmul.f32 %v3829, %v3833
    %v3895 = vmul.f32 %v3830, %v3833
    %v3896 = vmul.f32 %v3831, %v3833
    %v3897 = vmul.f32 %v3832, %v3833
    %v3898 = vadd.f32 %v2489, %v3834
    %v3899 = vadd.f32 %v2490, %v3835
    %v3900 = vadd.f32 %v2491, %v3836
    %v3901 = vadd.f32 %v2492, %v3837
    %v3902 = vadd.f32 %v2493, %v3838
    %v3903 = vadd.f32 %v2494, %v3839
    %v3904 = vadd.f32 %v2495, %v3840
    %v3905 = vadd.f32 %v2496, %v3841
    %v3906 = vadd.f32 %v2497, %v3842
    %v3907 = vadd.f32 %v2498, %v3843
    %v3908 = vadd.f32 %v2499, %v3844
    %v3909 = vadd.f32 %v2500, %v3845
    %v3910 = vadd.f32 %v2501, %v3846
    %v3911 = vadd.f32 %v2502, %v3847
    %v3912 = vadd.f32 %v2503, %v3848
    %v3913 = vadd.f32 %v2504, %v3849
    %v3914 = vadd.f32 %v2505, %v3850
    %v3915 = vadd.f32 %v2506, %v3851
    %v3916 = vadd.f32 %v2507, %v3852
    %v3917 = vadd.f32 %v2508, %v3853
    %v3918 = vadd.f32 %v2509, %v3854
    %v3919 = vadd.f32 %v2510, %v3855
    %v3920 = vadd.f32 %v2511, %v3856
    %v3921 = vadd.f32 %v2512, %v3857
    %v3922 = vadd.f32 %v2513, %v3858
    %v3923 = vadd.f32 %v2514, %v3859
    %v3924 = vadd.f32 %v2515, %v3860
    %v3925 = vadd.f32 %v2516, %v3861
    %v3926 = vadd.f32 %v2517, %v3862
    %v3927 = vadd.f32 %v2518, %v3863
    %v3928 = vadd.f32 %v2519, %v3864
    %v3929 = vadd.f32 %v2520, %v3865
    %v3930 = vadd.f32 %v2521, %v3866
    %v3931 = vadd.f32 %v2522, %v3867
    %v3932 = vadd.f32 %v2523, %v3868
    %v3933 = vadd.f32 %v2524, %v3869
    %v3934 = vadd.f32 %v2525, %v3870
    %v3935 = vadd.f32 %v2526, %v3871
    %v3936 = vadd.f32 %v2527, %v3872
    %v3937 = vadd.f32 %v2528, %v3873
    %v3938 = vadd.f32 %v2529, %v3874
    %v3939 = vadd.f32 %v2530, %v3875
    %v3940 = vadd.f32 %v2531, %v3876
    %v3941 = vadd.f32 %v2532, %v3877
    %v3942 = vadd.f32 %v2533, %v3878
    %v3943 = vadd.f32 %v2534, %v3879
    %v3944 = vadd.f32 %v2535, %v3880
    %v3945 = vadd.f32 %v2536, %v3881
    %v3946 = vadd.f32 %v2537, %v3882
    %v3947 = vadd.f32 %v2538, %v3883
    %v3948 = vadd.f32 %v2539, %v3884
    %v3949 = vadd.f32 %v2540, %v3885
    %v3950 = vadd.f32 %v2541, %v3886
    %v3951 = vadd.f32 %v2542, %v3887
    %v3952 = vadd.f32 %v2543, %v3888
    %v3953 = vadd.f32 %v2544, %v3889
    %v3954 = vadd.f32 %v2545, %v3890
    %v3955 = vadd.f32 %v2546, %v3891
    %v3956 = vadd.f32 %v2547, %v3892
    %v3957 = vadd.f32 %v2548, %v3893
    %v3958 = vadd.f32 %v2549, %v3894
    %v3959 = vadd.f32 %v2550, %v3895
    %v3960 = vadd.f32 %v2551, %v3896
    %v3961 = vadd.f32 %v2552, %v3897
    %v3962 = vpack.c.bf16 %v3899, %v3898
    %v3963 = vpack.c.bf16 %v3901, %v3900
    %v3964 = vpack.c.bf16 %v3903, %v3902
    %v3965 = vpack.c.bf16 %v3905, %v3904
    %v3966 = vpack.c.bf16 %v3907, %v3906
    %v3967 = vpack.c.bf16 %v3909, %v3908
    %v3968 = vpack.c.bf16 %v3911, %v3910
    %v3969 = vpack.c.bf16 %v3913, %v3912
    %v3970 = vpack.c.bf16 %v3915, %v3914
    %v3971 = vpack.c.bf16 %v3917, %v3916
    %v3972 = vpack.c.bf16 %v3919, %v3918
    %v3973 = vpack.c.bf16 %v3921, %v3920
    %v3974 = vpack.c.bf16 %v3923, %v3922
    %v3975 = vpack.c.bf16 %v3925, %v3924
    %v3976 = vpack.c.bf16 %v3927, %v3926
    %v3977 = vpack.c.bf16 %v3929, %v3928
    %v3978 = vpack.c.bf16 %v3931, %v3930
    %v3979 = vpack.c.bf16 %v3933, %v3932
    %v3980 = vpack.c.bf16 %v3935, %v3934
    %v3981 = vpack.c.bf16 %v3937, %v3936
    %v3982 = vpack.c.bf16 %v3939, %v3938
    %v3983 = vpack.c.bf16 %v3941, %v3940
    %v3984 = vpack.c.bf16 %v3943, %v3942
    %v3985 = vpack.c.bf16 %v3945, %v3944
    %v3986 = vpack.c.bf16 %v3947, %v3946
    %v3987 = vpack.c.bf16 %v3949, %v3948
    %v3988 = vpack.c.bf16 %v3951, %v3950
    %v3989 = vpack.c.bf16 %v3953, %v3952
    %v3990 = vpack.c.bf16 %v3955, %v3954
    %v3991 = vpack.c.bf16 %v3957, %v3956
    %v3992 = vpack.c.bf16 %v3959, %v3958
    %v3993 = vpack.c.bf16 %v3961, %v3960
    %v3994 = vld [vmem:[%s3] sm:$0xf]
    %v3995 = vld [vmem:[%s3 + $0x4] sm:$0xf]
    %v3996 = vld [vmem:[%s3 + $0x8] sm:$0xf]
    %v3997 = vld [vmem:[%s3 + $0xc] sm:$0xf]
    %v3998 = vld [vmem:[%s3 + $0x10] sm:$0xf]
    %v3999 = vld [vmem:[%s3 + $0x14] sm:$0xf]
    %v4000 = vld [vmem:[%s3 + $0x18] sm:$0xf]
    %v4001 = vld [vmem:[%s3 + $0x1c] sm:$0xf]
    %v4002 = vld [vmem:[%s3 + $0x20] sm:$0xf]
    %v4003 = vld [vmem:[%s3 + $0x24] sm:$0xf]
    %v4004 = vld [vmem:[%s3 + $0x28] sm:$0xf]
    %v4005 = vld [vmem:[%s3 + $0x2c] sm:$0xf]
    %v4006 = vld [vmem:[%s3 + $0x30] sm:$0xf]
    %v4007 = vld [vmem:[%s3 + $0x34] sm:$0xf]
    %v4008 = vld [vmem:[%s3 + $0x38] sm:$0xf]
    %v4009 = vld [vmem:[%s3 + $0x3c] sm:$0xf]
    %v4026 = vunpack.c.l.b16 %v3994
    %v4027 = vunpack.c.l.b16 %v3995
    %v4028 = vunpack.c.l.b16 %v3996
    %v4029 = vunpack.c.l.b16 %v3997
    %v4030 = vunpack.c.l.b16 %v3998
    %v4031 = vunpack.c.l.b16 %v3999
    %v4032 = vunpack.c.l.b16 %v4000
    %v4033 = vunpack.c.l.b16 %v4001
    %v4034 = vunpack.c.l.b16 %v4002
    %v4035 = vunpack.c.l.b16 %v4003
    %v4036 = vunpack.c.l.b16 %v4004
    %v4037 = vunpack.c.l.b16 %v4005
    %v4038 = vunpack.c.l.b16 %v4006
    %v4039 = vunpack.c.l.b16 %v4007
    %v4040 = vunpack.c.l.b16 %v4008
    %v4041 = vunpack.c.l.b16 %v4009
    %v4042 = vpack.c.b16 %v4027, %v4026
    %v4043 = vpack.c.b16 %v4029, %v4028
    %v4044 = vpack.c.b16 %v4031, %v4030
    %v4045 = vpack.c.b16 %v4033, %v4032
    %v4046 = vpack.c.b16 %v4035, %v4034
    %v4047 = vpack.c.b16 %v4037, %v4036
    %v4048 = vpack.c.b16 %v4039, %v4038
    %v4049 = vpack.c.b16 %v4041, %v4040
    %4058 = vmatpush.bf16.msra.mxu0 %v4049
    %4059 = vmatpush.bf16.msra.mxu0 %v4048
    %4060 = vmatpush.bf16.msra.mxu0 %v4047
    %4061 = vmatpush.bf16.msra.mxu0 %v4046
    %4062 = vmatpush.bf16.msra.mxu0 %v4045
    %4063 = vmatpush.bf16.msra.mxu0 %v4044
    %4064 = vmatpush.bf16.msra.mxu0 %v4043
    %4065 = vmatpush.bf16.msra.mxu0 %v4042
    %4066 = vmatmul.bf16.gmra.mxu0 %v3962
    %v4067 = vpop.f32.mrf.mxu0
    %v4068 = vadd.f32 0.0, %v4067
    %v4069 = vpop.f32.mrf.mxu0
    %v4070 = vadd.f32 0.0, %v4069
    %4071 = vmatmul.bf16.gmra.mxu0 %v3963
    %v4072 = vpop.f32.mrf.mxu0
    %v4073 = vadd.f32 0.0, %v4072
    %v4074 = vpop.f32.mrf.mxu0
    %v4075 = vadd.f32 0.0, %v4074
    %4076 = vmatmul.bf16.gmra.mxu0 %v3964
    %v4077 = vpop.f32.mrf.mxu0
    %v4078 = vadd.f32 0.0, %v4077
    %v4079 = vpop.f32.mrf.mxu0
    %v4080 = vadd.f32 0.0, %v4079
    %4081 = vmatmul.bf16.gmra.mxu0 %v3965
    %v4082 = vpop.f32.mrf.mxu0
    %v4083 = vadd.f32 0.0, %v4082
    %v4084 = vpop.f32.mrf.mxu0
    %v4085 = vadd.f32 0.0, %v4084
    %4086 = vmatmul.bf16.gmra.mxu0 %v3966
    %v4087 = vpop.f32.mrf.mxu0
    %v4088 = vadd.f32 0.0, %v4087
    %v4089 = vpop.f32.mrf.mxu0
    %v4090 = vadd.f32 0.0, %v4089
    %4091 = vmatmul.bf16.gmra.mxu0 %v3967
    %v4092 = vpop.f32.mrf.mxu0
    %v4093 = vadd.f32 0.0, %v4092
    %v4094 = vpop.f32.mrf.mxu0
    %v4095 = vadd.f32 0.0, %v4094
    %4096 = vmatmul.bf16.gmra.mxu0 %v3968
    %v4097 = vpop.f32.mrf.mxu0
    %v4098 = vadd.f32 0.0, %v4097
    %v4099 = vpop.f32.mrf.mxu0
    %v4100 = vadd.f32 0.0, %v4099
    %4101 = vmatmul.bf16.gmra.mxu0 %v3969
    %v4102 = vpop.f32.mrf.mxu0
    %v4103 = vadd.f32 0.0, %v4102
    %v4104 = vpop.f32.mrf.mxu0
    %v4105 = vadd.f32 0.0, %v4104
    %4106 = vmatmul.bf16.gmra.mxu0 %v3970
    %v4107 = vpop.f32.mrf.mxu0
    %v4108 = vadd.f32 0.0, %v4107
    %v4109 = vpop.f32.mrf.mxu0
    %v4110 = vadd.f32 0.0, %v4109
    %4111 = vmatmul.bf16.gmra.mxu0 %v3971
    %v4112 = vpop.f32.mrf.mxu0
    %v4113 = vadd.f32 0.0, %v4112
    %v4114 = vpop.f32.mrf.mxu0
    %v4115 = vadd.f32 0.0, %v4114
    %4116 = vmatmul.bf16.gmra.mxu0 %v3972
    %v4117 = vpop.f32.mrf.mxu0
    %v4118 = vadd.f32 0.0, %v4117
    %v4119 = vpop.f32.mrf.mxu0
    %v4120 = vadd.f32 0.0, %v4119
    %4121 = vmatmul.bf16.gmra.mxu0 %v3973
    %v4122 = vpop.f32.mrf.mxu0
    %v4123 = vadd.f32 0.0, %v4122
    %v4124 = vpop.f32.mrf.mxu0
    %v4125 = vadd.f32 0.0, %v4124
    %4126 = vmatmul.bf16.gmra.mxu0 %v3974
    %v4127 = vpop.f32.mrf.mxu0
    %v4128 = vadd.f32 0.0, %v4127
    %v4129 = vpop.f32.mrf.mxu0
    %v4130 = vadd.f32 0.0, %v4129
    %4131 = vmatmul.bf16.gmra.mxu0 %v3975
    %v4132 = vpop.f32.mrf.mxu0
    %v4133 = vadd.f32 0.0, %v4132
    %v4134 = vpop.f32.mrf.mxu0
    %v4135 = vadd.f32 0.0, %v4134
    %4136 = vmatmul.bf16.gmra.mxu0 %v3976
    %v4137 = vpop.f32.mrf.mxu0
    %v4138 = vadd.f32 0.0, %v4137
    %v4139 = vpop.f32.mrf.mxu0
    %v4140 = vadd.f32 0.0, %v4139
    %4141 = vmatmul.bf16.gmra.mxu0 %v3977
    %v4142 = vpop.f32.mrf.mxu0
    %v4143 = vadd.f32 0.0, %v4142
    %v4144 = vpop.f32.mrf.mxu0
    %v4145 = vadd.f32 0.0, %v4144
    %4146 = vmatmul.bf16.gmra.mxu0 %v3978
    %v4147 = vpop.f32.mrf.mxu0
    %v4148 = vadd.f32 0.0, %v4147
    %v4149 = vpop.f32.mrf.mxu0
    %v4150 = vadd.f32 0.0, %v4149
    %4151 = vmatmul.bf16.gmra.mxu0 %v3979
    %v4152 = vpop.f32.mrf.mxu0
    %v4153 = vadd.f32 0.0, %v4152
    %v4154 = vpop.f32.mrf.mxu0
    %v4155 = vadd.f32 0.0, %v4154
    %4156 = vmatmul.bf16.gmra.mxu0 %v3980
    %v4157 = vpop.f32.mrf.mxu0
    %v4158 = vadd.f32 0.0, %v4157
    %v4159 = vpop.f32.mrf.mxu0
    %v4160 = vadd.f32 0.0, %v4159
    %4161 = vmatmul.bf16.gmra.mxu0 %v3981
    %v4162 = vpop.f32.mrf.mxu0
    %v4163 = vadd.f32 0.0, %v4162
    %v4164 = vpop.f32.mrf.mxu0
    %v4165 = vadd.f32 0.0, %v4164
    %4166 = vmatmul.bf16.gmra.mxu0 %v3982
    %v4167 = vpop.f32.mrf.mxu0
    %v4168 = vadd.f32 0.0, %v4167
    %v4169 = vpop.f32.mrf.mxu0
    %v4170 = vadd.f32 0.0, %v4169
    %4171 = vmatmul.bf16.gmra.mxu0 %v3983
    %v4172 = vpop.f32.mrf.mxu0
    %v4173 = vadd.f32 0.0, %v4172
    %v4174 = vpop.f32.mrf.mxu0
    %v4175 = vadd.f32 0.0, %v4174
    %4176 = vmatmul.bf16.gmra.mxu0 %v3984
    %v4177 = vpop.f32.mrf.mxu0
    %v4178 = vadd.f32 0.0, %v4177
    %v4179 = vpop.f32.mrf.mxu0
    %v4180 = vadd.f32 0.0, %v4179
    %4181 = vmatmul.bf16.gmra.mxu0 %v3985
    %v4182 = vpop.f32.mrf.mxu0
    %v4183 = vadd.f32 0.0, %v4182
    %v4184 = vpop.f32.mrf.mxu0
    %v4185 = vadd.f32 0.0, %v4184
    %4186 = vmatmul.bf16.gmra.mxu0 %v3986
    %v4187 = vpop.f32.mrf.mxu0
    %v4188 = vadd.f32 0.0, %v4187
    %v4189 = vpop.f32.mrf.mxu0
    %v4190 = vadd.f32 0.0, %v4189
    %4191 = vmatmul.bf16.gmra.mxu0 %v3987
    %v4192 = vpop.f32.mrf.mxu0
    %v4193 = vadd.f32 0.0, %v4192
    %v4194 = vpop.f32.mrf.mxu0
    %v4195 = vadd.f32 0.0, %v4194
    %4196 = vmatmul.bf16.gmra.mxu0 %v3988
    %v4197 = vpop.f32.mrf.mxu0
    %v4198 = vadd.f32 0.0, %v4197
    %v4199 = vpop.f32.mrf.mxu0
    %v4200 = vadd.f32 0.0, %v4199
    %4201 = vmatmul.bf16.gmra.mxu0 %v3989
    %v4202 = vpop.f32.mrf.mxu0
    %v4203 = vadd.f32 0.0, %v4202
    %v4204 = vpop.f32.mrf.mxu0
    %v4205 = vadd.f32 0.0, %v4204
    %4206 = vmatmul.bf16.gmra.mxu0 %v3990
    %v4207 = vpop.f32.mrf.mxu0
    %v4208 = vadd.f32 0.0, %v4207
    %v4209 = vpop.f32.mrf.mxu0
    %v4210 = vadd.f32 0.0, %v4209
    %4211 = vmatmul.bf16.gmra.mxu0 %v3991
    %v4212 = vpop.f32.mrf.mxu0
    %v4213 = vadd.f32 0.0, %v4212
    %v4214 = vpop.f32.mrf.mxu0
    %v4215 = vadd.f32 0.0, %v4214
    %4216 = vmatmul.bf16.gmra.mxu0 %v3992
    %v4217 = vpop.f32.mrf.mxu0
    %v4218 = vadd.f32 0.0, %v4217
    %v4219 = vpop.f32.mrf.mxu0
    %v4220 = vadd.f32 0.0, %v4219
    %4221 = vmatmul.bf16.gmra.mxu0 %v3993
    %v4222 = vpop.f32.mrf.mxu0
    %v4223 = vadd.f32 0.0, %v4222
    %v4224 = vpop.f32.mrf.mxu0
    %v4225 = vadd.f32 0.0, %v4224
    %4226 = vdwg.mxu0
    %4227 = vst [vmem:[#allocation2] sm:$0xff] %v4068
    %4228 = vst [vmem:[#allocation2 + $0x8] sm:$0xff] %v4070
    %4229 = vst [vmem:[#allocation2 + $0x10] sm:$0xff] %v4073
    %4230 = vst [vmem:[#allocation2 + $0x18] sm:$0xff] %v4075
    %4231 = vst [vmem:[#allocation2 + $0x20] sm:$0xff] %v4078
    %4232 = vst [vmem:[#allocation2 + $0x28] sm:$0xff] %v4080
    %4233 = vst [vmem:[#allocation2 + $0x30] sm:$0xff] %v4083
    %4234 = vst [vmem:[#allocation2 + $0x38] sm:$0xff] %v4085
    %4235 = vst [vmem:[#allocation2 + $0x40] sm:$0xff] %v4088
    %4236 = vst [vmem:[#allocation2 + $0x48] sm:$0xff] %v4090
    %4237 = vst [vmem:[#allocation2 + $0x50] sm:$0xff] %v4093
    %4238 = vst [vmem:[#allocation2 + $0x58] sm:$0xff] %v4095
    %4239 = vst [vmem:[#allocation2 + $0x60] sm:$0xff] %v4098
    %4240 = vst [vmem:[#allocation2 + $0x68] sm:$0xff] %v4100
    %4241 = vst [vmem:[#allocation2 + $0x70] sm:$0xff] %v4103
    %4242 = vst [vmem:[#allocation2 + $0x78] sm:$0xff] %v4105
    %4243 = vst [vmem:[#allocation2 + $0x80] sm:$0xff] %v4108
    %4244 = vst [vmem:[#allocation2 + $0x88] sm:$0xff] %v4110
    %4245 = vst [vmem:[#allocation2 + $0x90] sm:$0xff] %v4113
    %4246 = vst [vmem:[#allocation2 + $0x98] sm:$0xff] %v4115
    %4247 = vst [vmem:[#allocation2 + $0xa0] sm:$0xff] %v4118
    %4248 = vst [vmem:[#allocation2 + $0xa8] sm:$0xff] %v4120
    %4249 = vst [vmem:[#allocation2 + $0xb0] sm:$0xff] %v4123
    %4250 = vst [vmem:[#allocation2 + $0xb8] sm:$0xff] %v4125
    %4251 = vst [vmem:[#allocation2 + $0xc0] sm:$0xff] %v4128
    %4252 = vst [vmem:[#allocation2 + $0xc8] sm:$0xff] %v4130
    %4253 = vst [vmem:[#allocation2 + $0xd0] sm:$0xff] %v4133
    %4254 = vst [vmem:[#allocation2 + $0xd8] sm:$0xff] %v4135
    %4255 = vst [vmem:[#allocation2 + $0xe0] sm:$0xff] %v4138
    %4256 = vst [vmem:[#allocation2 + $0xe8] sm:$0xff] %v4140
    %4257 = vst [vmem:[#allocation2 + $0xf0] sm:$0xff] %v4143
    %4258 = vst [vmem:[#allocation2 + $0xf8] sm:$0xff] %v4145
    %4259 = vst [vmem:[#allocation2 + $0x100] sm:$0xff] %v4148
    %4260 = vst [vmem:[#allocation2 + $0x108] sm:$0xff] %v4150
    %4261 = vst [vmem:[#allocation2 + $0x110] sm:$0xff] %v4153
    %4262 = vst [vmem:[#allocation2 + $0x118] sm:$0xff] %v4155
    %4263 = vst [vmem:[#allocation2 + $0x120] sm:$0xff] %v4158
    %4264 = vst [vmem:[#allocation2 + $0x128] sm:$0xff] %v4160
    %4265 = vst [vmem:[#allocation2 + $0x130] sm:$0xff] %v4163
    %4266 = vst [vmem:[#allocation2 + $0x138] sm:$0xff] %v4165
    %4267 = vst [vmem:[#allocation2 + $0x140] sm:$0xff] %v4168
    %4268 = vst [vmem:[#allocation2 + $0x148] sm:$0xff] %v4170
    %4269 = vst [vmem:[#allocation2 + $0x150] sm:$0xff] %v4173
    %4270 = vst [vmem:[#allocation2 + $0x158] sm:$0xff] %v4175
    %4271 = vst [vmem:[#allocation2 + $0x160] sm:$0xff] %v4178
    %4272 = vst [vmem:[#allocation2 + $0x168] sm:$0xff] %v4180
    %4273 = vst [vmem:[#allocation2 + $0x170] sm:$0xff] %v4183
    %4274 = vst [vmem:[#allocation2 + $0x178] sm:$0xff] %v4185
    %4275 = vst [vmem:[#allocation2 + $0x180] sm:$0xff] %v4188
    %4276 = vst [vmem:[#allocation2 + $0x188] sm:$0xff] %v4190
    %4277 = vst [vmem:[#allocation2 + $0x190] sm:$0xff] %v4193
    %4278 = vst [vmem:[#allocation2 + $0x198] sm:$0xff] %v4195
    %4279 = vst [vmem:[#allocation2 + $0x1a0] sm:$0xff] %v4198
    %4280 = vst [vmem:[#allocation2 + $0x1a8] sm:$0xff] %v4200
    %4281 = vst [vmem:[#allocation2 + $0x1b0] sm:$0xff] %v4203
    %4282 = vst [vmem:[#allocation2 + $0x1b8] sm:$0xff] %v4205
    %4283 = vst [vmem:[#allocation2 + $0x1c0] sm:$0xff] %v4208
    %4284 = vst [vmem:[#allocation2 + $0x1c8] sm:$0xff] %v4210
    %4285 = vst [vmem:[#allocation2 + $0x1d0] sm:$0xff] %v4213
    %4286 = vst [vmem:[#allocation2 + $0x1d8] sm:$0xff] %v4215
    %4287 = vst [vmem:[#allocation2 + $0x1e0] sm:$0xff] %v4218
    %4288 = vst [vmem:[#allocation2 + $0x1e8] sm:$0xff] %v4220
    %4289 = vst [vmem:[#allocation2 + $0x1f0] sm:$0xff] %v4223
    %4290 = vst [vmem:[#allocation2 + $0x1f8] sm:$0xff] %v4225
    // Predicated region
    $region18: #{kan_layer_pallas.1} parent=1 // pred_check
      _
    $region19: #{kan_layer_pallas.1} parent=1 // pred_check_branch
      %4292 = sbr.rel (0) target = $region21
    $region20: #{kan_layer_pallas.1} parent=1 // pred_region
      %4294 = vsyncadd [#allocation3], 0
      %s4295 = sshll.u32 [#allocation2], 4
      %s4296 = int_to_ptr.vmem [resolvable:$true] %s4295
      %s4297 = sshll.u32 %s4, 4
      %s4298 = int_to_ptr.hbm [resolvable:$true] %s4297
      %4303 = dma.vmem_to_hbm [thread:$0]  %s4296, 8192, %s4298, [#allocation3], 128, 128, 8
    $region21: #{kan_layer_pallas.1} parent=1 // pred_fallthru
      _
    // Predicated region
    $region22: #{kan_layer_pallas.1} parent=1 // pred_check
      _
    $region23: #{kan_layer_pallas.1} parent=1 // pred_check_branch
      %4305 = sbr.rel (0) target = $region25
    $region24: #{kan_layer_pallas.1} parent=1 // pred_region
      %4307 = dma.done [#allocation3], 8192
    $region25: #{kan_layer_pallas.1} parent=1 // pred_fallthru
      _
    %4308 = vsyncpa [#allocation3], 1

</llo_original>
